<compile_context>
chip_gen: v5e
topology: v5e:2x2
jax: 0.10.0
libtpu: 0.0.40
codegen_flags: <defaults>
</compile_context>

<pallas_src>
import functools

import jax
import jax.numpy as jnp
import numpy as np
from jax import lax
from jax.experimental import pallas as pl
from jax.experimental.pallas import tpu as pltpu


def _round_up(x, m):
    return ((x + m - 1) // m) * m


# ----------------------------------------------------------------------------
# Fused multi-layer LSTM encoder kernel (single pallas_call, no grid).
# PyTorch gate ordering: i, f, g, o (each gate padded to Hp = round_up(H, 128)).
# ----------------------------------------------------------------------------
def _fused_encoder_kernel(x_ref, wih_ref, whh_ref, b_ref,
                          hout_ref, cout_ref,
                          gx_sc, seq_sc,
                          *, n_layers, T, Bp, Hp, Dinp):
    for l in range(n_layers):                      # static unroll over layers
        d_in = Dinp if l == 0 else Hp

        # ---- hoisted input projection: one big MXU matmul for all timesteps ----
        if l == 0:
            x2d = x_ref[...]                       # (T*Bp, Dinp)
        else:
            x2d = seq_sc[...]                      # (T*Bp, Hp) previous layer's hidden seq
        w_ih = wih_ref[l, :d_in, :]                # (d_in, 4Hp), static slice
        gx_sc[...] = (jnp.dot(x2d, w_ih, preferred_element_type=jnp.float32)
                      + b_ref[l])                  # (T*Bp, 4Hp), bias pre-summed

        write_seq = l < n_layers - 1               # last layer's seq is unused

        # ---- recurrence: only h_prev @ W_hh on the serial critical path ----
        def step(t, carry):
            h, c = carry
            row = pl.multiple_of(t * Bp, 8)
            gates = (gx_sc[pl.ds(row, Bp), :]
                     + jnp.dot(h, whh_ref[l], preferred_element_type=jnp.float32))
            i_g = jax.nn.sigmoid(gates[:, 0 * Hp:1 * Hp])   # 128-lane-aligned slices
            f_g = jax.nn.sigmoid(gates[:, 1 * Hp:2 * Hp])
            g_g = jnp.tanh(gates[:, 2 * Hp:3 * Hp])
            o_g = jax.nn.sigmoid(gates[:, 3 * Hp:4 * Hp])
            c_new = f_g * c + i_g * g_g
            h_new = o_g * jnp.tanh(c_new)
            if write_seq:                          # keep inter-layer acts in VMEM only
                seq_sc[pl.ds(row, Bp), :] = h_new
            return h_new, c_new

        h0 = jnp.zeros((Bp, Hp), jnp.float32)
        c0 = jnp.zeros((Bp, Hp), jnp.float32)
        h_f, c_f = lax.fori_loop(0, T, step, (h0, c0), unroll=(T <= 32))

        hout_ref[l] = h_f                          # final states only -> HBM
        cout_ref[l] = c_f


# ----------------------------------------------------------------------------
# Parameter init (PyTorch nn.LSTM-style) and packing into padded TPU layout
# ----------------------------------------------------------------------------
def init_encoder_params(key, d_input, d_hidden, n_layers):
    """uniform(-1/sqrt(H), 1/sqrt(H)) like torch.nn.LSTM, deterministic."""
    k = 1.0 / np.sqrt(d_hidden)
    params = []
    for layer in range(n_layers):
        d_in = d_input if layer == 0 else d_hidden
        key, k1, k2, k3, k4 = jax.random.split(key, 5)
        w_ih = jax.random.uniform(k1, (4 * d_hidden, d_in), jnp.float32, -k, k)
        w_hh = jax.random.uniform(k2, (4 * d_hidden, d_hidden), jnp.float32, -k, k)
        b_ih = jax.random.uniform(k3, (4 * d_hidden,), jnp.float32, -k, k)
        b_hh = jax.random.uniform(k4, (4 * d_hidden,), jnp.float32, -k, k)
        params.append({"w_ih": w_ih, "w_hh": w_hh, "b_ih": b_ih, "b_hh": b_hh})
    return params


def pack_encoder_params(params, d_input, d_hidden):
    """Transpose for x@W layout, pre-sum biases, pad each gate to a 128-lane block,
    stack all layers into single arrays so one pallas_call covers the whole encoder."""
    L = len(params)
    H = d_hidden
    Hp = _round_up(H, 128)
    Dinp = _round_up(d_input, 128)
    Dmax = max(Dinp, Hp)

    wih = np.zeros((L, Dmax, 4 * Hp), np.float32)
    whh = np.zeros((L, Hp, 4 * Hp), np.float32)
    b = np.zeros((L, 1, 4 * Hp), np.float32)
    for l, p in enumerate(params):
        d_in = d_input if l == 0 else H
        w_ih_t = np.asarray(p["w_ih"]).T           # (d_in, 4H), gate order i,f,g,o
        w_hh_t = np.asarray(p["w_hh"]).T           # (H, 4H)
        bias = np.asarray(p["b_ih"]) + np.asarray(p["b_hh"])
        for g in range(4):
            wih[l, :d_in, g * Hp:g * Hp + H] = w_ih_t[:, g * H:(g + 1) * H]
            whh[l, :H, g * Hp:g * Hp + H] = w_hh_t[:, g * H:(g + 1) * H]
            b[l, 0, g * Hp:g * Hp + H] = bias[g * H:(g + 1) * H]

    return {
        "wih": jnp.asarray(wih), "whh": jnp.asarray(whh), "b": jnp.asarray(b),
        "L": L, "H": H, "Hp": Hp, "Dinp": Dinp,
    }


# ----------------------------------------------------------------------------
# Encoder_recurrent equivalent forward
# ----------------------------------------------------------------------------
def encoder_recurrent_forward(packed, X):
    """X: (batch, seq, d_input) f32 -> (h, c), each (n_layers, batch, d_hidden)."""
    B, T, Din = X.shape
    L, H, Hp, Dinp = packed["L"], packed["H"], packed["Hp"], packed["Dinp"]
    Bp = _round_up(B, 8)

    # (B, T, Din) -> (T, B, Din), pad batch to 8 sublanes and features to 128 lanes,
    # then flatten to (T*Bp, Dinp) so the layer-0 projection is a single 2D matmul.
    x = jnp.transpose(X, (1, 0, 2)).astype(jnp.float32)
    x = jnp.pad(x, ((0, 0), (0, Bp - B), (0, Dinp - Din)))
    x = x.reshape(T * Bp, Dinp)

    kernel = functools.partial(_fused_encoder_kernel,
                               n_layers=L, T=T, Bp=Bp, Hp=Hp, Dinp=Dinp)
    h_p, c_p = pl.pallas_call(
        kernel,
        out_shape=(jax.ShapeDtypeStruct((L, Bp, Hp), jnp.float32),
                   jax.ShapeDtypeStruct((L, Bp, Hp), jnp.float32)),
        scratch_shapes=[
            pltpu.VMEM((T * Bp, 4 * Hp), jnp.float32),   # precomputed x-projection gates
            pltpu.VMEM((T * Bp, Hp), jnp.float32),       # inter-layer hidden sequence
        ],
    )(x, packed["wih"], packed["whh"], packed["b"])

    # strip batch / hidden padding
    return h_p[:, :B, :H], c_p[:, :B, :H]


# ----------------------------------------------------------------------------
# Pure-JAX reference (lax.scan) for correctness checking
# ----------------------------------------------------------------------------
def _lstm_layer_ref(x_tbd, w_ih, w_hh, b_ih, b_hh):
    T, B, _ = x_tbd.shape
    H = w_hh.shape[1]

    def step(carry, x_t):
        h, c = carry
        gates = x_t @ w_ih.T + h @ w_hh.T + b_ih + b_hh
        i = jax.nn.sigmoid(gates[:, 0 * H:1 * H])
        f = jax.nn.sigmoid(gates[:, 1 * H:2 * H])
        g = jnp.tanh(gates[:, 2 * H:3 * H])
        o = jax.nn.sigmoid(gates[:, 3 * H:4 * H])
        c_new = f * c + i * g
        h_new = o * jnp.tanh(c_new)
        return (h_new, c_new), h_new

    h0 = jnp.zeros((B, H), jnp.float32)
    c0 = jnp.zeros((B, H), jnp.float32)
    (h_f, c_f), out_seq = lax.scan(step, (h0, c0), x_tbd)
    return out_seq, h_f, c_f


def encoder_recurrent_ref(params, X):
    x = jnp.transpose(X, (1, 0, 2)).astype(jnp.float32)
    hs, cs = [], []
    for p in params:
        out_seq, h_f, c_f = _lstm_layer_ref(x, p["w_ih"], p["w_hh"], p["b_ih"], p["b_hh"])
        hs.append(h_f)
        cs.append(c_f)
        x = out_seq
    return jnp.stack(hs, axis=0), jnp.stack(cs, axis=0)


# ----------------------------------------------------------------------------
if __name__ == "__main__":
    # Small shapes consistent with Encoder_recurrent (univariate-ish TS input).
    batch, seq = 2, 8
    d_input, d_hidden, n_layers = 4, 32, 2

    key = jax.random.PRNGKey(0)
    key_p, key_x = jax.random.split(key)
    params = init_encoder_params(key_p, d_input, d_hidden, n_layers)
    packed = pack_encoder_params(params, d_input, d_hidden)
    X = jax.random.normal(key_x, (batch, seq, d_input), jnp.float32)

    h, c = encoder_recurrent_forward(packed, X)
    h = jax.block_until_ready(h)
    c = jax.block_until_ready(c)

    h_ref, c_ref = encoder_recurrent_ref(params, X)
    np.testing.assert_allclose(np.asarray(h), np.asarray(h_ref), atol=2e-5, rtol=2e-5)
    np.testing.assert_allclose(np.asarray(c), np.asarray(c_ref), atol=2e-5, rtol=2e-5)

    assert h.shape == (n_layers, batch, d_hidden)
    assert c.shape == (n_layers, batch, d_hidden)
    print("KERNEL_OK")
</pallas_src>

<mosaic_0001>
module attributes {stable_mosaic.version = 11 : i64} {
  func.func @_fused_encoder_kernel(%arg0: memref<64x128xf32, #tpu.memory_space<vmem>>, %arg1: memref<2x128x512xf32, #tpu.memory_space<vmem>>, %arg2: memref<2x128x512xf32, #tpu.memory_space<vmem>>, %arg3: memref<2x1x512xf32, #tpu.memory_space<vmem>>, %arg4: memref<2x8x128xf32, #tpu.memory_space<vmem>>, %arg5: memref<2x8x128xf32, #tpu.memory_space<vmem>>, %arg6: memref<64x512xf32, #tpu.memory_space<vmem>>, %arg7: memref<64x128xf32, #tpu.memory_space<vmem>>) attributes {dimension_semantics = [], scalar_prefetch = 0 : i64, scratch_operands = 2 : i64, tpu.core_type = #tpu.core_type<tc>} {
    %c0 = arith.constant 0 : index
    %c0_0 = arith.constant 0 : index
    %0 = vector.load %arg0[%c0, %c0_0] : memref<64x128xf32, #tpu.memory_space<vmem>>, vector<64x128xf32>
    %c0_1 = arith.constant 0 : index
    %c0_2 = arith.constant 0 : index
    %c0_3 = arith.constant 0 : index
    %1 = vector.load %arg1[%c0_1, %c0_2, %c0_3] : memref<2x128x512xf32, #tpu.memory_space<vmem>>, vector<1x128x512xf32>
    %2 = vector.shape_cast %1 : vector<1x128x512xf32> to vector<128x512xf32>
    %cst = arith.constant dense<0.000000e+00> : vector<64x512xf32>
    %3 = tpu.matmul %0, %2, %cst {dimension_numbers = #tpu.dot_dimension_numbers<[1], [0], [0], [1], [0, 0, 1, 1], [], []>} : vector<64x128xf32>, vector<128x512xf32>, vector<64x512xf32> -> vector<64x512xf32>
    %c0_4 = arith.constant 0 : index
    %c0_5 = arith.constant 0 : index
    %c0_6 = arith.constant 0 : index
    %4 = vector.load %arg3[%c0_4, %c0_5, %c0_6] : memref<2x1x512xf32, #tpu.memory_space<vmem>>, vector<1x1x512xf32>
    %5 = vector.shape_cast %4 : vector<1x1x512xf32> to vector<1x512xf32>
    %6 = vector.broadcast %5 : vector<1x512xf32> to vector<64x512xf32>
    %7 = arith.addf %3, %6 : vector<64x512xf32>
    %c0_7 = arith.constant 0 : index
    %c0_8 = arith.constant 0 : index
    %8 = vector.load %arg6[%c0_7, %c0_8] : memref<64x512xf32, #tpu.memory_space<vmem>>, vector<64x512xf32>
    tpu.vector_store %arg6[%c0_7, %c0_8], %7 {strides = array<i32>} : memref<64x512xf32, #tpu.memory_space<vmem>>, vector<64x512xf32>,
    %cst_9 = arith.constant 0.000000e+00 : f32
    %9 = vector.broadcast %cst_9 : f32 to vector<8x128xf32>
    %cst_10 = arith.constant 0.000000e+00 : f32
    %10 = vector.broadcast %cst_10 : f32 to vector<8x128xf32>
    %c0_i32 = arith.constant 0 : i32
    %c8_i32 = arith.constant 8 : i32
    %11 = arith.muli %c0_i32, %c8_i32 : i32
    %12 = tpu.assume_multiple %11, 8 : i32
    %13 = arith.index_cast %12 : i32 to index
    %c0_11 = arith.constant 0 : index
    %14 = vector.load %arg6[%13, %c0_11] : memref<64x512xf32, #tpu.memory_space<vmem>>, vector<8x512xf32>
    %c0_12 = arith.constant 0 : index
    %c0_13 = arith.constant 0 : index
    %c0_14 = arith.constant 0 : index
    %15 = vector.load %arg2[%c0_12, %c0_13, %c0_14] : memref<2x128x512xf32, #tpu.memory_space<vmem>>, vector<1x128x512xf32>
    %16 = vector.shape_cast %15 : vector<1x128x512xf32> to vector<128x512xf32>
    %cst_15 = arith.constant dense<0.000000e+00> : vector<8x512xf32>
    %17 = tpu.matmul %9, %16, %cst_15 {dimension_numbers = #tpu.dot_dimension_numbers<[1], [0], [0], [1], [0, 0, 1, 1], [], []>} : vector<8x128xf32>, vector<128x512xf32>, vector<8x512xf32> -> vector<8x512xf32>
    %18 = arith.addf %14, %17 : vector<8x512xf32>
    %19 = vector.extract_strided_slice %18 {offsets = [0, 0], sizes = [8, 128], strides = [1, 1]} : vector<8x512xf32> to vector<8x128xf32>
    %20 = arith.negf %19 : vector<8x128xf32>
    %21 = math.exp %20 : vector<8x128xf32>
    %cst_16 = arith.constant 1.000000e+00 : f32
    %22 = vector.broadcast %cst_16 : f32 to vector<8x128xf32>
    %23 = arith.addf %22, %21 : vector<8x128xf32>
    %24 = arith.divf %22, %23 : vector<8x128xf32>
    %25 = vector.extract_strided_slice %18 {offsets = [0, 128], sizes = [8, 128], strides = [1, 1]} : vector<8x512xf32> to vector<8x128xf32>
    %26 = arith.negf %25 : vector<8x128xf32>
    %27 = math.exp %26 : vector<8x128xf32>
    %cst_17 = arith.constant 1.000000e+00 : f32
    %28 = vector.broadcast %cst_17 : f32 to vector<8x128xf32>
    %29 = arith.addf %28, %27 : vector<8x128xf32>
    %30 = arith.divf %28, %29 : vector<8x128xf32>
    %31 = vector.extract_strided_slice %18 {offsets = [0, 256], sizes = [8, 128], strides = [1, 1]} : vector<8x512xf32> to vector<8x128xf32>
    %32 = math.tanh %31 : vector<8x128xf32>
    %33 = vector.extract_strided_slice %18 {offsets = [0, 384], sizes = [8, 128], strides = [1, 1]} : vector<8x512xf32> to vector<8x128xf32>
    %34 = arith.negf %33 : vector<8x128xf32>
    %35 = math.exp %34 : vector<8x128xf32>
    %cst_18 = arith.constant 1.000000e+00 : f32
    %36 = vector.broadcast %cst_18 : f32 to vector<8x128xf32>
    %37 = arith.addf %36, %35 : vector<8x128xf32>
    %38 = arith.divf %36, %37 : vector<8x128xf32>
    %39 = arith.mulf %30, %10 : vector<8x128xf32>
    %40 = arith.mulf %24, %32 : vector<8x128xf32>
    %41 = arith.addf %39, %40 : vector<8x128xf32>
    %42 = math.tanh %41 : vector<8x128xf32>
    %43 = arith.mulf %38, %42 : vector<8x128xf32>
    %44 = arith.index_cast %12 : i32 to index
    %c0_19 = arith.constant 0 : index
    %45 = vector.load %arg7[%44, %c0_19] : memref<64x128xf32, #tpu.memory_space<vmem>>, vector<8x128xf32>
    tpu.vector_store %arg7[%44, %c0_19], %43 {strides = array<i32>} : memref<64x128xf32, #tpu.memory_space<vmem>>, vector<8x128xf32>,
    %c1_i32 = arith.constant 1 : i32
    %c8_i32_20 = arith.constant 8 : i32
    %46 = arith.muli %c1_i32, %c8_i32_20 : i32
    %47 = tpu.assume_multiple %46, 8 : i32
    %48 = arith.index_cast %47 : i32 to index
    %c0_21 = arith.constant 0 : index
    %49 = vector.load %arg6[%48, %c0_21] : memref<64x512xf32, #tpu.memory_space<vmem>>, vector<8x512xf32>
    %c0_22 = arith.constant 0 : index
    %c0_23 = arith.constant 0 : index
    %c0_24 = arith.constant 0 : index
    %50 = vector.load %arg2[%c0_22, %c0_23, %c0_24] : memref<2x128x512xf32, #tpu.memory_space<vmem>>, vector<1x128x512xf32>
    %51 = vector.shape_cast %50 : vector<1x128x512xf32> to vector<128x512xf32>
    %cst_25 = arith.constant dense<0.000000e+00> : vector<8x512xf32>
    %52 = tpu.matmul %43, %51, %cst_25 {dimension_numbers = #tpu.dot_dimension_numbers<[1], [0], [0], [1], [0, 0, 1, 1], [], []>} : vector<8x128xf32>, vector<128x512xf32>, vector<8x512xf32> -> vector<8x512xf32>
    %53 = arith.addf %49, %52 : vector<8x512xf32>
    %54 = vector.extract_strided_slice %53 {offsets = [0, 0], sizes = [8, 128], strides = [1, 1]} : vector<8x512xf32> to vector<8x128xf32>
    %55 = arith.negf %54 : vector<8x128xf32>
    %56 = math.exp %55 : vector<8x128xf32>
    %cst_26 = arith.constant 1.000000e+00 : f32
    %57 = vector.broadcast %cst_26 : f32 to vector<8x128xf32>
    %58 = arith.addf %57, %56 : vector<8x128xf32>
    %59 = arith.divf %57, %58 : vector<8x128xf32>
    %60 = vector.extract_strided_slice %53 {offsets = [0, 128], sizes = [8, 128], strides = [1, 1]} : vector<8x512xf32> to vector<8x128xf32>
    %61 = arith.negf %60 : vector<8x128xf32>
    %62 = math.exp %61 : vector<8x128xf32>
    %cst_27 = arith.constant 1.000000e+00 : f32
    %63 = vector.broadcast %cst_27 : f32 to vector<8x128xf32>
    %64 = arith.addf %63, %62 : vector<8x128xf32>
    %65 = arith.divf %63, %64 : vector<8x128xf32>
    %66 = vector.extract_strided_slice %53 {offsets = [0, 256], sizes = [8, 128], strides = [1, 1]} : vector<8x512xf32> to vector<8x128xf32>
    %67 = math.tanh %66 : vector<8x128xf32>
    %68 = vector.extract_strided_slice %53 {offsets = [0, 384], sizes = [8, 128], strides = [1, 1]} : vector<8x512xf32> to vector<8x128xf32>
    %69 = arith.negf %68 : vector<8x128xf32>
    %70 = math.exp %69 : vector<8x128xf32>
    %cst_28 = arith.constant 1.000000e+00 : f32
    %71 = vector.broadcast %cst_28 : f32 to vector<8x128xf32>
    %72 = arith.addf %71, %70 : vector<8x128xf32>
    %73 = arith.divf %71, %72 : vector<8x128xf32>
    %74 = arith.mulf %65, %41 : vector<8x128xf32>
    %75 = arith.mulf %59, %67 : vector<8x128xf32>
    %76 = arith.addf %74, %75 : vector<8x128xf32>
    %77 = math.tanh %76 : vector<8x128xf32>
    %78 = arith.mulf %73, %77 : vector<8x128xf32>
    %79 = arith.index_cast %47 : i32 to index
    %c0_29 = arith.constant 0 : index
    %80 = vector.load %arg7[%79, %c0_29] : memref<64x128xf32, #tpu.memory_space<vmem>>, vector<8x128xf32>
    tpu.vector_store %arg7[%79, %c0_29], %78 {strides = array<i32>} : memref<64x128xf32, #tpu.memory_space<vmem>>, vector<8x128xf32>,
    %c2_i32 = arith.constant 2 : i32
    %c8_i32_30 = arith.constant 8 : i32
    %81 = arith.muli %c2_i32, %c8_i32_30 : i32
    %82 = tpu.assume_multiple %81, 8 : i32
    %83 = arith.index_cast %82 : i32 to index
    %c0_31 = arith.constant 0 : index
    %84 = vector.load %arg6[%83, %c0_31] : memref<64x512xf32, #tpu.memory_space<vmem>>, vector<8x512xf32>
    %c0_32 = arith.constant 0 : index
    %c0_33 = arith.constant 0 : index
    %c0_34 = arith.constant 0 : index
    %85 = vector.load %arg2[%c0_32, %c0_33, %c0_34] : memref<2x128x512xf32, #tpu.memory_space<vmem>>, vector<1x128x512xf32>
    %86 = vector.shape_cast %85 : vector<1x128x512xf32> to vector<128x512xf32>
    %cst_35 = arith.constant dense<0.000000e+00> : vector<8x512xf32>
    %87 = tpu.matmul %78, %86, %cst_35 {dimension_numbers = #tpu.dot_dimension_numbers<[1], [0], [0], [1], [0, 0, 1, 1], [], []>} : vector<8x128xf32>, vector<128x512xf32>, vector<8x512xf32> -> vector<8x512xf32>
    %88 = arith.addf %84, %87 : vector<8x512xf32>
    %89 = vector.extract_strided_slice %88 {offsets = [0, 0], sizes = [8, 128], strides = [1, 1]} : vector<8x512xf32> to vector<8x128xf32>
    %90 = arith.negf %89 : vector<8x128xf32>
    %91 = math.exp %90 : vector<8x128xf32>
    %cst_36 = arith.constant 1.000000e+00 : f32
    %92 = vector.broadcast %cst_36 : f32 to vector<8x128xf32>
    %93 = arith.addf %92, %91 : vector<8x128xf32>
    %94 = arith.divf %92, %93 : vector<8x128xf32>
    %95 = vector.extract_strided_slice %88 {offsets = [0, 128], sizes = [8, 128], strides = [1, 1]} : vector<8x512xf32> to vector<8x128xf32>
    %96 = arith.negf %95 : vector<8x128xf32>
    %97 = math.exp %96 : vector<8x128xf32>
    %cst_37 = arith.constant 1.000000e+00 : f32
    %98 = vector.broadcast %cst_37 : f32 to vector<8x128xf32>
    %99 = arith.addf %98, %97 : vector<8x128xf32>
    %100 = arith.divf %98, %99 : vector<8x128xf32>
    %101 = vector.extract_strided_slice %88 {offsets = [0, 256], sizes = [8, 128], strides = [1, 1]} : vector<8x512xf32> to vector<8x128xf32>
    %102 = math.tanh %101 : vector<8x128xf32>
    %103 = vector.extract_strided_slice %88 {offsets = [0, 384], sizes = [8, 128], strides = [1, 1]} : vector<8x512xf32> to vector<8x128xf32>
    %104 = arith.negf %103 : vector<8x128xf32>
    %105 = math.exp %104 : vector<8x128xf32>
    %cst_38 = arith.constant 1.000000e+00 : f32
    %106 = vector.broadcast %cst_38 : f32 to vector<8x128xf32>
    %107 = arith.addf %106, %105 : vector<8x128xf32>
    %108 = arith.divf %106, %107 : vector<8x128xf32>
    %109 = arith.mulf %100, %76 : vector<8x128xf32>
    %110 = arith.mulf %94, %102 : vector<8x128xf32>
    %111 = arith.addf %109, %110 : vector<8x128xf32>
    %112 = math.tanh %111 : vector<8x128xf32>
    %113 = arith.mulf %108, %112 : vector<8x128xf32>
    %114 = arith.index_cast %82 : i32 to index
    %c0_39 = arith.constant 0 : index
    %115 = vector.load %arg7[%114, %c0_39] : memref<64x128xf32, #tpu.memory_space<vmem>>, vector<8x128xf32>
    tpu.vector_store %arg7[%114, %c0_39], %113 {strides = array<i32>} : memref<64x128xf32, #tpu.memory_space<vmem>>, vector<8x128xf32>,
    %c3_i32 = arith.constant 3 : i32
    %c8_i32_40 = arith.constant 8 : i32
    %116 = arith.muli %c3_i32, %c8_i32_40 : i32
    %117 = tpu.assume_multiple %116, 8 : i32
    %118 = arith.index_cast %117 : i32 to index
    %c0_41 = arith.constant 0 : index
    %119 = vector.load %arg6[%118, %c0_41] : memref<64x512xf32, #tpu.memory_space<vmem>>, vector<8x512xf32>
    %c0_42 = arith.constant 0 : index
    %c0_43 = arith.constant 0 : index
    %c0_44 = arith.constant 0 : index
    %120 = vector.load %arg2[%c0_42, %c0_43, %c0_44] : memref<2x128x512xf32, #tpu.memory_space<vmem>>, vector<1x128x512xf32>
    %121 = vector.shape_cast %120 : vector<1x128x512xf32> to vector<128x512xf32>
    %cst_45 = arith.constant dense<0.000000e+00> : vector<8x512xf32>
    %122 = tpu.matmul %113, %121, %cst_45 {dimension_numbers = #tpu.dot_dimension_numbers<[1], [0], [0], [1], [0, 0, 1, 1], [], []>} : vector<8x128xf32>, vector<128x512xf32>, vector<8x512xf32> -> vector<8x512xf32>
    %123 = arith.addf %119, %122 : vector<8x512xf32>
    %124 = vector.extract_strided_slice %123 {offsets = [0, 0], sizes = [8, 128], strides = [1, 1]} : vector<8x512xf32> to vector<8x128xf32>
    %125 = arith.negf %124 : vector<8x128xf32>
    %126 = math.exp %125 : vector<8x128xf32>
    %cst_46 = arith.constant 1.000000e+00 : f32
    %127 = vector.broadcast %cst_46 : f32 to vector<8x128xf32>
    %128 = arith.addf %127, %126 : vector<8x128xf32>
    %129 = arith.divf %127, %128 : vector<8x128xf32>
    %130 = vector.extract_strided_slice %123 {offsets = [0, 128], sizes = [8, 128], strides = [1, 1]} : vector<8x512xf32> to vector<8x128xf32>
    %131 = arith.negf %130 : vector<8x128xf32>
    %132 = math.exp %131 : vector<8x128xf32>
    %cst_47 = arith.constant 1.000000e+00 : f32
    %133 = vector.broadcast %cst_47 : f32 to vector<8x128xf32>
    %134 = arith.addf %133, %132 : vector<8x128xf32>
    %135 = arith.divf %133, %134 : vector<8x128xf32>
    %136 = vector.extract_strided_slice %123 {offsets = [0, 256], sizes = [8, 128], strides = [1, 1]} : vector<8x512xf32> to vector<8x128xf32>
    %137 = math.tanh %136 : vector<8x128xf32>
    %138 = vector.extract_strided_slice %123 {offsets = [0, 384], sizes = [8, 128], strides = [1, 1]} : vector<8x512xf32> to vector<8x128xf32>
    %139 = arith.negf %138 : vector<8x128xf32>
    %140 = math.exp %139 : vector<8x128xf32>
    %cst_48 = arith.constant 1.000000e+00 : f32
    %141 = vector.broadcast %cst_48 : f32 to vector<8x128xf32>
    %142 = arith.addf %141, %140 : vector<8x128xf32>
    %143 = arith.divf %141, %142 : vector<8x128xf32>
    %144 = arith.mulf %135, %111 : vector<8x128xf32>
    %145 = arith.mulf %129, %137 : vector<8x128xf32>
    %146 = arith.addf %144, %145 : vector<8x128xf32>
    %147 = math.tanh %146 : vector<8x128xf32>
    %148 = arith.mulf %143, %147 : vector<8x128xf32>
    %149 = arith.index_cast %117 : i32 to index
    %c0_49 = arith.constant 0 : index
    %150 = vector.load %arg7[%149, %c0_49] : memref<64x128xf32, #tpu.memory_space<vmem>>, vector<8x128xf32>
    tpu.vector_store %arg7[%149, %c0_49], %148 {strides = array<i32>} : memref<64x128xf32, #tpu.memory_space<vmem>>, vector<8x128xf32>,
    %c4_i32 = arith.constant 4 : i32
    %c8_i32_50 = arith.constant 8 : i32
    %151 = arith.muli %c4_i32, %c8_i32_50 : i32
    %152 = tpu.assume_multiple %151, 8 : i32
    %153 = arith.index_cast %152 : i32 to index
    %c0_51 = arith.constant 0 : index
    %154 = vector.load %arg6[%153, %c0_51] : memref<64x512xf32, #tpu.memory_space<vmem>>, vector<8x512xf32>
    %c0_52 = arith.constant 0 : index
    %c0_53 = arith.constant 0 : index
    %c0_54 = arith.constant 0 : index
    %155 = vector.load %arg2[%c0_52, %c0_53, %c0_54] : memref<2x128x512xf32, #tpu.memory_space<vmem>>, vector<1x128x512xf32>
    %156 = vector.shape_cast %155 : vector<1x128x512xf32> to vector<128x512xf32>
    %cst_55 = arith.constant dense<0.000000e+00> : vector<8x512xf32>
    %157 = tpu.matmul %148, %156, %cst_55 {dimension_numbers = #tpu.dot_dimension_numbers<[1], [0], [0], [1], [0, 0, 1, 1], [], []>} : vector<8x128xf32>, vector<128x512xf32>, vector<8x512xf32> -> vector<8x512xf32>
    %158 = arith.addf %154, %157 : vector<8x512xf32>
    %159 = vector.extract_strided_slice %158 {offsets = [0, 0], sizes = [8, 128], strides = [1, 1]} : vector<8x512xf32> to vector<8x128xf32>
    %160 = arith.negf %159 : vector<8x128xf32>
    %161 = math.exp %160 : vector<8x128xf32>
    %cst_56 = arith.constant 1.000000e+00 : f32
    %162 = vector.broadcast %cst_56 : f32 to vector<8x128xf32>
    %163 = arith.addf %162, %161 : vector<8x128xf32>
    %164 = arith.divf %162, %163 : vector<8x128xf32>
    %165 = vector.extract_strided_slice %158 {offsets = [0, 128], sizes = [8, 128], strides = [1, 1]} : vector<8x512xf32> to vector<8x128xf32>
    %166 = arith.negf %165 : vector<8x128xf32>
    %167 = math.exp %166 : vector<8x128xf32>
    %cst_57 = arith.constant 1.000000e+00 : f32
    %168 = vector.broadcast %cst_57 : f32 to vector<8x128xf32>
    %169 = arith.addf %168, %167 : vector<8x128xf32>
    %170 = arith.divf %168, %169 : vector<8x128xf32>
    %171 = vector.extract_strided_slice %158 {offsets = [0, 256], sizes = [8, 128], strides = [1, 1]} : vector<8x512xf32> to vector<8x128xf32>
    %172 = math.tanh %171 : vector<8x128xf32>
    %173 = vector.extract_strided_slice %158 {offsets = [0, 384], sizes = [8, 128], strides = [1, 1]} : vector<8x512xf32> to vector<8x128xf32>
    %174 = arith.negf %173 : vector<8x128xf32>
    %175 = math.exp %174 : vector<8x128xf32>
    %cst_58 = arith.constant 1.000000e+00 : f32
    %176 = vector.broadcast %cst_58 : f32 to vector<8x128xf32>
    %177 = arith.addf %176, %175 : vector<8x128xf32>
    %178 = arith.divf %176, %177 : vector<8x128xf32>
    %179 = arith.mulf %170, %146 : vector<8x128xf32>
    %180 = arith.mulf %164, %172 : vector<8x128xf32>
    %181 = arith.addf %179, %180 : vector<8x128xf32>
    %182 = math.tanh %181 : vector<8x128xf32>
    %183 = arith.mulf %178, %182 : vector<8x128xf32>
    %184 = arith.index_cast %152 : i32 to index
    %c0_59 = arith.constant 0 : index
    %185 = vector.load %arg7[%184, %c0_59] : memref<64x128xf32, #tpu.memory_space<vmem>>, vector<8x128xf32>
    tpu.vector_store %arg7[%184, %c0_59], %183 {strides = array<i32>} : memref<64x128xf32, #tpu.memory_space<vmem>>, vector<8x128xf32>,
    %c5_i32 = arith.constant 5 : i32
    %c8_i32_60 = arith.constant 8 : i32
    %186 = arith.muli %c5_i32, %c8_i32_60 : i32
    %187 = tpu.assume_multiple %186, 8 : i32
    %188 = arith.index_cast %187 : i32 to index
    %c0_61 = arith.constant 0 : index
    %189 = vector.load %arg6[%188, %c0_61] : memref<64x512xf32, #tpu.memory_space<vmem>>, vector<8x512xf32>
    %c0_62 = arith.constant 0 : index
    %c0_63 = arith.constant 0 : index
    %c0_64 = arith.constant 0 : index
    %190 = vector.load %arg2[%c0_62, %c0_63, %c0_64] : memref<2x128x512xf32, #tpu.memory_space<vmem>>, vector<1x128x512xf32>
    %191 = vector.shape_cast %190 : vector<1x128x512xf32> to vector<128x512xf32>
    %cst_65 = arith.constant dense<0.000000e+00> : vector<8x512xf32>
    %192 = tpu.matmul %183, %191, %cst_65 {dimension_numbers = #tpu.dot_dimension_numbers<[1], [0], [0], [1], [0, 0, 1, 1], [], []>} : vector<8x128xf32>, vector<128x512xf32>, vector<8x512xf32> -> vector<8x512xf32>
    %193 = arith.addf %189, %192 : vector<8x512xf32>
    %194 = vector.extract_strided_slice %193 {offsets = [0, 0], sizes = [8, 128], strides = [1, 1]} : vector<8x512xf32> to vector<8x128xf32>
    %195 = arith.negf %194 : vector<8x128xf32>
    %196 = math.exp %195 : vector<8x128xf32>
    %cst_66 = arith.constant 1.000000e+00 : f32
    %197 = vector.broadcast %cst_66 : f32 to vector<8x128xf32>
    %198 = arith.addf %197, %196 : vector<8x128xf32>
    %199 = arith.divf %197, %198 : vector<8x128xf32>
    %200 = vector.extract_strided_slice %193 {offsets = [0, 128], sizes = [8, 128], strides = [1, 1]} : vector<8x512xf32> to vector<8x128xf32>
    %201 = arith.negf %200 : vector<8x128xf32>
    %202 = math.exp %201 : vector<8x128xf32>
    %cst_67 = arith.constant 1.000000e+00 : f32
    %203 = vector.broadcast %cst_67 : f32 to vector<8x128xf32>
    %204 = arith.addf %203, %202 : vector<8x128xf32>
    %205 = arith.divf %203, %204 : vector<8x128xf32>
    %206 = vector.extract_strided_slice %193 {offsets = [0, 256], sizes = [8, 128], strides = [1, 1]} : vector<8x512xf32> to vector<8x128xf32>
    %207 = math.tanh %206 : vector<8x128xf32>
    %208 = vector.extract_strided_slice %193 {offsets = [0, 384], sizes = [8, 128], strides = [1, 1]} : vector<8x512xf32> to vector<8x128xf32>
    %209 = arith.negf %208 : vector<8x128xf32>
    %210 = math.exp %209 : vector<8x128xf32>
    %cst_68 = arith.constant 1.000000e+00 : f32
    %211 = vector.broadcast %cst_68 : f32 to vector<8x128xf32>
    %212 = arith.addf %211, %210 : vector<8x128xf32>
    %213 = arith.divf %211, %212 : vector<8x128xf32>
    %214 = arith.mulf %205, %181 : vector<8x128xf32>
    %215 = arith.mulf %199, %207 : vector<8x128xf32>
    %216 = arith.addf %214, %215 : vector<8x128xf32>
    %217 = math.tanh %216 : vector<8x128xf32>
    %218 = arith.mulf %213, %217 : vector<8x128xf32>
    %219 = arith.index_cast %187 : i32 to index
    %c0_69 = arith.constant 0 : index
    %220 = vector.load %arg7[%219, %c0_69] : memref<64x128xf32, #tpu.memory_space<vmem>>, vector<8x128xf32>
    tpu.vector_store %arg7[%219, %c0_69], %218 {strides = array<i32>} : memref<64x128xf32, #tpu.memory_space<vmem>>, vector<8x128xf32>,
    %c6_i32 = arith.constant 6 : i32
    %c8_i32_70 = arith.constant 8 : i32
    %221 = arith.muli %c6_i32, %c8_i32_70 : i32
    %222 = tpu.assume_multiple %221, 8 : i32
    %223 = arith.index_cast %222 : i32 to index
    %c0_71 = arith.constant 0 : index
    %224 = vector.load %arg6[%223, %c0_71] : memref<64x512xf32, #tpu.memory_space<vmem>>, vector<8x512xf32>
    %c0_72 = arith.constant 0 : index
    %c0_73 = arith.constant 0 : index
    %c0_74 = arith.constant 0 : index
    %225 = vector.load %arg2[%c0_72, %c0_73, %c0_74] : memref<2x128x512xf32, #tpu.memory_space<vmem>>, vector<1x128x512xf32>
    %226 = vector.shape_cast %225 : vector<1x128x512xf32> to vector<128x512xf32>
    %cst_75 = arith.constant dense<0.000000e+00> : vector<8x512xf32>
    %227 = tpu.matmul %218, %226, %cst_75 {dimension_numbers = #tpu.dot_dimension_numbers<[1], [0], [0], [1], [0, 0, 1, 1], [], []>} : vector<8x128xf32>, vector<128x512xf32>, vector<8x512xf32> -> vector<8x512xf32>
    %228 = arith.addf %224, %227 : vector<8x512xf32>
    %229 = vector.extract_strided_slice %228 {offsets = [0, 0], sizes = [8, 128], strides = [1, 1]} : vector<8x512xf32> to vector<8x128xf32>
    %230 = arith.negf %229 : vector<8x128xf32>
    %231 = math.exp %230 : vector<8x128xf32>
    %cst_76 = arith.constant 1.000000e+00 : f32
    %232 = vector.broadcast %cst_76 : f32 to vector<8x128xf32>
    %233 = arith.addf %232, %231 : vector<8x128xf32>
    %234 = arith.divf %232, %233 : vector<8x128xf32>
    %235 = vector.extract_strided_slice %228 {offsets = [0, 128], sizes = [8, 128], strides = [1, 1]} : vector<8x512xf32> to vector<8x128xf32>
    %236 = arith.negf %235 : vector<8x128xf32>
    %237 = math.exp %236 : vector<8x128xf32>
    %cst_77 = arith.constant 1.000000e+00 : f32
    %238 = vector.broadcast %cst_77 : f32 to vector<8x128xf32>
    %239 = arith.addf %238, %237 : vector<8x128xf32>
    %240 = arith.divf %238, %239 : vector<8x128xf32>
    %241 = vector.extract_strided_slice %228 {offsets = [0, 256], sizes = [8, 128], strides = [1, 1]} : vector<8x512xf32> to vector<8x128xf32>
    %242 = math.tanh %241 : vector<8x128xf32>
    %243 = vector.extract_strided_slice %228 {offsets = [0, 384], sizes = [8, 128], strides = [1, 1]} : vector<8x512xf32> to vector<8x128xf32>
    %244 = arith.negf %243 : vector<8x128xf32>
    %245 = math.exp %244 : vector<8x128xf32>
    %cst_78 = arith.constant 1.000000e+00 : f32
    %246 = vector.broadcast %cst_78 : f32 to vector<8x128xf32>
    %247 = arith.addf %246, %245 : vector<8x128xf32>
    %248 = arith.divf %246, %247 : vector<8x128xf32>
    %249 = arith.mulf %240, %216 : vector<8x128xf32>
    %250 = arith.mulf %234, %242 : vector<8x128xf32>
    %251 = arith.addf %249, %250 : vector<8x128xf32>
    %252 = math.tanh %251 : vector<8x128xf32>
    %253 = arith.mulf %248, %252 : vector<8x128xf32>
    %254 = arith.index_cast %222 : i32 to index
    %c0_79 = arith.constant 0 : index
    %255 = vector.load %arg7[%254, %c0_79] : memref<64x128xf32, #tpu.memory_space<vmem>>, vector<8x128xf32>
    tpu.vector_store %arg7[%254, %c0_79], %253 {strides = array<i32>} : memref<64x128xf32, #tpu.memory_space<vmem>>, vector<8x128xf32>,
    %c7_i32 = arith.constant 7 : i32
    %c8_i32_80 = arith.constant 8 : i32
    %256 = arith.muli %c7_i32, %c8_i32_80 : i32
    %257 = tpu.assume_multiple %256, 8 : i32
    %258 = arith.index_cast %257 : i32 to index
    %c0_81 = arith.constant 0 : index
    %259 = vector.load %arg6[%258, %c0_81] : memref<64x512xf32, #tpu.memory_space<vmem>>, vector<8x512xf32>
    %c0_82 = arith.constant 0 : index
    %c0_83 = arith.constant 0 : index
    %c0_84 = arith.constant 0 : index
    %260 = vector.load %arg2[%c0_82, %c0_83, %c0_84] : memref<2x128x512xf32, #tpu.memory_space<vmem>>, vector<1x128x512xf32>
    %261 = vector.shape_cast %260 : vector<1x128x512xf32> to vector<128x512xf32>
    %cst_85 = arith.constant dense<0.000000e+00> : vector<8x512xf32>
    %262 = tpu.matmul %253, %261, %cst_85 {dimension_numbers = #tpu.dot_dimension_numbers<[1], [0], [0], [1], [0, 0, 1, 1], [], []>} : vector<8x128xf32>, vector<128x512xf32>, vector<8x512xf32> -> vector<8x512xf32>
    %263 = arith.addf %259, %262 : vector<8x512xf32>
    %264 = vector.extract_strided_slice %263 {offsets = [0, 0], sizes = [8, 128], strides = [1, 1]} : vector<8x512xf32> to vector<8x128xf32>
    %265 = arith.negf %264 : vector<8x128xf32>
    %266 = math.exp %265 : vector<8x128xf32>
    %cst_86 = arith.constant 1.000000e+00 : f32
    %267 = vector.broadcast %cst_86 : f32 to vector<8x128xf32>
    %268 = arith.addf %267, %266 : vector<8x128xf32>
    %269 = arith.divf %267, %268 : vector<8x128xf32>
    %270 = vector.extract_strided_slice %263 {offsets = [0, 128], sizes = [8, 128], strides = [1, 1]} : vector<8x512xf32> to vector<8x128xf32>
    %271 = arith.negf %270 : vector<8x128xf32>
    %272 = math.exp %271 : vector<8x128xf32>
    %cst_87 = arith.constant 1.000000e+00 : f32
    %273 = vector.broadcast %cst_87 : f32 to vector<8x128xf32>
    %274 = arith.addf %273, %272 : vector<8x128xf32>
    %275 = arith.divf %273, %274 : vector<8x128xf32>
    %276 = vector.extract_strided_slice %263 {offsets = [0, 256], sizes = [8, 128], strides = [1, 1]} : vector<8x512xf32> to vector<8x128xf32>
    %277 = math.tanh %276 : vector<8x128xf32>
    %278 = vector.extract_strided_slice %263 {offsets = [0, 384], sizes = [8, 128], strides = [1, 1]} : vector<8x512xf32> to vector<8x128xf32>
    %279 = arith.negf %278 : vector<8x128xf32>
    %280 = math.exp %279 : vector<8x128xf32>
    %cst_88 = arith.constant 1.000000e+00 : f32
    %281 = vector.broadcast %cst_88 : f32 to vector<8x128xf32>
    %282 = arith.addf %281, %280 : vector<8x128xf32>
    %283 = arith.divf %281, %282 : vector<8x128xf32>
    %284 = arith.mulf %275, %251 : vector<8x128xf32>
    %285 = arith.mulf %269, %277 : vector<8x128xf32>
    %286 = arith.addf %284, %285 : vector<8x128xf32>
    %287 = math.tanh %286 : vector<8x128xf32>
    %288 = arith.mulf %283, %287 : vector<8x128xf32>
    %289 = arith.index_cast %257 : i32 to index
    %c0_89 = arith.constant 0 : index
    %290 = vector.load %arg7[%289, %c0_89] : memref<64x128xf32, #tpu.memory_space<vmem>>, vector<8x128xf32>
    tpu.vector_store %arg7[%289, %c0_89], %288 {strides = array<i32>} : memref<64x128xf32, #tpu.memory_space<vmem>>, vector<8x128xf32>,
    %c8_i32_90 = arith.constant 8 : i32
    %c0_91 = arith.constant 0 : index
    %c0_92 = arith.constant 0 : index
    %c0_93 = arith.constant 0 : index
    %291 = vector.load %arg4[%c0_91, %c0_92, %c0_93] : memref<2x8x128xf32, #tpu.memory_space<vmem>>, vector<1x8x128xf32>
    %292 = vector.shape_cast %291 : vector<1x8x128xf32> to vector<8x128xf32>
    %293 = vector.shape_cast %288 : vector<8x128xf32> to vector<1x8x128xf32>
    tpu.vector_store %arg4[%c0_91, %c0_92, %c0_93], %293 {strides = array<i32>} : memref<2x8x128xf32, #tpu.memory_space<vmem>>, vector<1x8x128xf32>,
    %c0_94 = arith.constant 0 : index
    %c0_95 = arith.constant 0 : index
    %c0_96 = arith.constant 0 : index
    %294 = vector.load %arg5[%c0_94, %c0_95, %c0_96] : memref<2x8x128xf32, #tpu.memory_space<vmem>>, vector<1x8x128xf32>
    %295 = vector.shape_cast %294 : vector<1x8x128xf32> to vector<8x128xf32>
    %296 = vector.shape_cast %286 : vector<8x128xf32> to vector<1x8x128xf32>
    tpu.vector_store %arg5[%c0_94, %c0_95, %c0_96], %296 {strides = array<i32>} : memref<2x8x128xf32, #tpu.memory_space<vmem>>, vector<1x8x128xf32>,
    %c0_97 = arith.constant 0 : index
    %c0_98 = arith.constant 0 : index
    %297 = vector.load %arg7[%c0_97, %c0_98] : memref<64x128xf32, #tpu.memory_space<vmem>>, vector<64x128xf32>
    %c1 = arith.constant 1 : index
    %c0_99 = arith.constant 0 : index
    %c0_100 = arith.constant 0 : index
    %298 = vector.load %arg1[%c1, %c0_99, %c0_100] : memref<2x128x512xf32, #tpu.memory_space<vmem>>, vector<1x128x512xf32>
    %299 = vector.shape_cast %298 : vector<1x128x512xf32> to vector<128x512xf32>
    %cst_101 = arith.constant dense<0.000000e+00> : vector<64x512xf32>
    %300 = tpu.matmul %297, %299, %cst_101 {dimension_numbers = #tpu.dot_dimension_numbers<[1], [0], [0], [1], [0, 0, 1, 1], [], []>} : vector<64x128xf32>, vector<128x512xf32>, vector<64x512xf32> -> vector<64x512xf32>
    %c1_102 = arith.constant 1 : index
    %c0_103 = arith.constant 0 : index
    %c0_104 = arith.constant 0 : index
    %301 = vector.load %arg3[%c1_102, %c0_103, %c0_104] : memref<2x1x512xf32, #tpu.memory_space<vmem>>, vector<1x1x512xf32>
    %302 = vector.shape_cast %301 : vector<1x1x512xf32> to vector<1x512xf32>
    %303 = vector.broadcast %302 : vector<1x512xf32> to vector<64x512xf32>
    %304 = arith.addf %300, %303 : vector<64x512xf32>
    %c0_105 = arith.constant 0 : index
    %c0_106 = arith.constant 0 : index
    %305 = vector.load %arg6[%c0_105, %c0_106] : memref<64x512xf32, #tpu.memory_space<vmem>>, vector<64x512xf32>
    tpu.vector_store %arg6[%c0_105, %c0_106], %304 {strides = array<i32>} : memref<64x512xf32, #tpu.memory_space<vmem>>, vector<64x512xf32>,
    %cst_107 = arith.constant 0.000000e+00 : f32
    %306 = vector.broadcast %cst_107 : f32 to vector<8x128xf32>
    %cst_108 = arith.constant 0.000000e+00 : f32
    %307 = vector.broadcast %cst_108 : f32 to vector<8x128xf32>
    %c0_i32_109 = arith.constant 0 : i32
    %c8_i32_110 = arith.constant 8 : i32
    %308 = arith.muli %c0_i32_109, %c8_i32_110 : i32
    %309 = tpu.assume_multiple %308, 8 : i32
    %310 = arith.index_cast %309 : i32 to index
    %c0_111 = arith.constant 0 : index
    %311 = vector.load %arg6[%310, %c0_111] : memref<64x512xf32, #tpu.memory_space<vmem>>, vector<8x512xf32>
    %c1_112 = arith.constant 1 : index
    %c0_113 = arith.constant 0 : index
    %c0_114 = arith.constant 0 : index
    %312 = vector.load %arg2[%c1_112, %c0_113, %c0_114] : memref<2x128x512xf32, #tpu.memory_space<vmem>>, vector<1x128x512xf32>
    %313 = vector.shape_cast %312 : vector<1x128x512xf32> to vector<128x512xf32>
    %cst_115 = arith.constant dense<0.000000e+00> : vector<8x512xf32>
    %314 = tpu.matmul %306, %313, %cst_115 {dimension_numbers = #tpu.dot_dimension_numbers<[1], [0], [0], [1], [0, 0, 1, 1], [], []>} : vector<8x128xf32>, vector<128x512xf32>, vector<8x512xf32> -> vector<8x512xf32>
    %315 = arith.addf %311, %314 : vector<8x512xf32>
    %316 = vector.extract_strided_slice %315 {offsets = [0, 0], sizes = [8, 128], strides = [1, 1]} : vector<8x512xf32> to vector<8x128xf32>
    %317 = arith.negf %316 : vector<8x128xf32>
    %318 = math.exp %317 : vector<8x128xf32>
    %cst_116 = arith.constant 1.000000e+00 : f32
    %319 = vector.broadcast %cst_116 : f32 to vector<8x128xf32>
    %320 = arith.addf %319, %318 : vector<8x128xf32>
    %321 = arith.divf %319, %320 : vector<8x128xf32>
    %322 = vector.extract_strided_slice %315 {offsets = [0, 128], sizes = [8, 128], strides = [1, 1]} : vector<8x512xf32> to vector<8x128xf32>
    %323 = arith.negf %322 : vector<8x128xf32>
    %324 = math.exp %323 : vector<8x128xf32>
    %cst_117 = arith.constant 1.000000e+00 : f32
    %325 = vector.broadcast %cst_117 : f32 to vector<8x128xf32>
    %326 = arith.addf %325, %324 : vector<8x128xf32>
    %327 = arith.divf %325, %326 : vector<8x128xf32>
    %328 = vector.extract_strided_slice %315 {offsets = [0, 256], sizes = [8, 128], strides = [1, 1]} : vector<8x512xf32> to vector<8x128xf32>
    %329 = math.tanh %328 : vector<8x128xf32>
    %330 = vector.extract_strided_slice %315 {offsets = [0, 384], sizes = [8, 128], strides = [1, 1]} : vector<8x512xf32> to vector<8x128xf32>
    %331 = arith.negf %330 : vector<8x128xf32>
    %332 = math.exp %331 : vector<8x128xf32>
    %cst_118 = arith.constant 1.000000e+00 : f32
    %333 = vector.broadcast %cst_118 : f32 to vector<8x128xf32>
    %334 = arith.addf %333, %332 : vector<8x128xf32>
    %335 = arith.divf %333, %334 : vector<8x128xf32>
    %336 = arith.mulf %327, %307 : vector<8x128xf32>
    %337 = arith.mulf %321, %329 : vector<8x128xf32>
    %338 = arith.addf %336, %337 : vector<8x128xf32>
    %339 = math.tanh %338 : vector<8x128xf32>
    %340 = arith.mulf %335, %339 : vector<8x128xf32>
    %c1_i32_119 = arith.constant 1 : i32
    %c8_i32_120 = arith.constant 8 : i32
    %341 = arith.muli %c1_i32_119, %c8_i32_120 : i32
    %342 = tpu.assume_multiple %341, 8 : i32
    %343 = arith.index_cast %342 : i32 to index
    %c0_121 = arith.constant 0 : index
    %344 = vector.load %arg6[%343, %c0_121] : memref<64x512xf32, #tpu.memory_space<vmem>>, vector<8x512xf32>
    %c1_122 = arith.constant 1 : index
    %c0_123 = arith.constant 0 : index
    %c0_124 = arith.constant 0 : index
    %345 = vector.load %arg2[%c1_122, %c0_123, %c0_124] : memref<2x128x512xf32, #tpu.memory_space<vmem>>, vector<1x128x512xf32>
    %346 = vector.shape_cast %345 : vector<1x128x512xf32> to vector<128x512xf32>
    %cst_125 = arith.constant dense<0.000000e+00> : vector<8x512xf32>
    %347 = tpu.matmul %340, %346, %cst_125 {dimension_numbers = #tpu.dot_dimension_numbers<[1], [0], [0], [1], [0, 0, 1, 1], [], []>} : vector<8x128xf32>, vector<128x512xf32>, vector<8x512xf32> -> vector<8x512xf32>
    %348 = arith.addf %344, %347 : vector<8x512xf32>
    %349 = vector.extract_strided_slice %348 {offsets = [0, 0], sizes = [8, 128], strides = [1, 1]} : vector<8x512xf32> to vector<8x128xf32>
    %350 = arith.negf %349 : vector<8x128xf32>
    %351 = math.exp %350 : vector<8x128xf32>
    %cst_126 = arith.constant 1.000000e+00 : f32
    %352 = vector.broadcast %cst_126 : f32 to vector<8x128xf32>
    %353 = arith.addf %352, %351 : vector<8x128xf32>
    %354 = arith.divf %352, %353 : vector<8x128xf32>
    %355 = vector.extract_strided_slice %348 {offsets = [0, 128], sizes = [8, 128], strides = [1, 1]} : vector<8x512xf32> to vector<8x128xf32>
    %356 = arith.negf %355 : vector<8x128xf32>
    %357 = math.exp %356 : vector<8x128xf32>
    %cst_127 = arith.constant 1.000000e+00 : f32
    %358 = vector.broadcast %cst_127 : f32 to vector<8x128xf32>
    %359 = arith.addf %358, %357 : vector<8x128xf32>
    %360 = arith.divf %358, %359 : vector<8x128xf32>
    %361 = vector.extract_strided_slice %348 {offsets = [0, 256], sizes = [8, 128], strides = [1, 1]} : vector<8x512xf32> to vector<8x128xf32>
    %362 = math.tanh %361 : vector<8x128xf32>
    %363 = vector.extract_strided_slice %348 {offsets = [0, 384], sizes = [8, 128], strides = [1, 1]} : vector<8x512xf32> to vector<8x128xf32>
    %364 = arith.negf %363 : vector<8x128xf32>
    %365 = math.exp %364 : vector<8x128xf32>
    %cst_128 = arith.constant 1.000000e+00 : f32
    %366 = vector.broadcast %cst_128 : f32 to vector<8x128xf32>
    %367 = arith.addf %366, %365 : vector<8x128xf32>
    %368 = arith.divf %366, %367 : vector<8x128xf32>
    %369 = arith.mulf %360, %338 : vector<8x128xf32>
    %370 = arith.mulf %354, %362 : vector<8x128xf32>
    %371 = arith.addf %369, %370 : vector<8x128xf32>
    %372 = math.tanh %371 : vector<8x128xf32>
    %373 = arith.mulf %368, %372 : vector<8x128xf32>
    %c2_i32_129 = arith.constant 2 : i32
    %c8_i32_130 = arith.constant 8 : i32
    %374 = arith.muli %c2_i32_129, %c8_i32_130 : i32
    %375 = tpu.assume_multiple %374, 8 : i32
    %376 = arith.index_cast %375 : i32 to index
    %c0_131 = arith.constant 0 : index
    %377 = vector.load %arg6[%376, %c0_131] : memref<64x512xf32, #tpu.memory_space<vmem>>, vector<8x512xf32>
    %c1_132 = arith.constant 1 : index
    %c0_133 = arith.constant 0 : index
    %c0_134 = arith.constant 0 : index
    %378 = vector.load %arg2[%c1_132, %c0_133, %c0_134] : memref<2x128x512xf32, #tpu.memory_space<vmem>>, vector<1x128x512xf32>
    %379 = vector.shape_cast %378 : vector<1x128x512xf32> to vector<128x512xf32>
    %cst_135 = arith.constant dense<0.000000e+00> : vector<8x512xf32>
    %380 = tpu.matmul %373, %379, %cst_135 {dimension_numbers = #tpu.dot_dimension_numbers<[1], [0], [0], [1], [0, 0, 1, 1], [], []>} : vector<8x128xf32>, vector<128x512xf32>, vector<8x512xf32> -> vector<8x512xf32>
    %381 = arith.addf %377, %380 : vector<8x512xf32>
    %382 = vector.extract_strided_slice %381 {offsets = [0, 0], sizes = [8, 128], strides = [1, 1]} : vector<8x512xf32> to vector<8x128xf32>
    %383 = arith.negf %382 : vector<8x128xf32>
    %384 = math.exp %383 : vector<8x128xf32>
    %cst_136 = arith.constant 1.000000e+00 : f32
    %385 = vector.broadcast %cst_136 : f32 to vector<8x128xf32>
    %386 = arith.addf %385, %384 : vector<8x128xf32>
    %387 = arith.divf %385, %386 : vector<8x128xf32>
    %388 = vector.extract_strided_slice %381 {offsets = [0, 128], sizes = [8, 128], strides = [1, 1]} : vector<8x512xf32> to vector<8x128xf32>
    %389 = arith.negf %388 : vector<8x128xf32>
    %390 = math.exp %389 : vector<8x128xf32>
    %cst_137 = arith.constant 1.000000e+00 : f32
    %391 = vector.broadcast %cst_137 : f32 to vector<8x128xf32>
    %392 = arith.addf %391, %390 : vector<8x128xf32>
    %393 = arith.divf %391, %392 : vector<8x128xf32>
    %394 = vector.extract_strided_slice %381 {offsets = [0, 256], sizes = [8, 128], strides = [1, 1]} : vector<8x512xf32> to vector<8x128xf32>
    %395 = math.tanh %394 : vector<8x128xf32>
    %396 = vector.extract_strided_slice %381 {offsets = [0, 384], sizes = [8, 128], strides = [1, 1]} : vector<8x512xf32> to vector<8x128xf32>
    %397 = arith.negf %396 : vector<8x128xf32>
    %398 = math.exp %397 : vector<8x128xf32>
    %cst_138 = arith.constant 1.000000e+00 : f32
    %399 = vector.broadcast %cst_138 : f32 to vector<8x128xf32>
    %400 = arith.addf %399, %398 : vector<8x128xf32>
    %401 = arith.divf %399, %400 : vector<8x128xf32>
    %402 = arith.mulf %393, %371 : vector<8x128xf32>
    %403 = arith.mulf %387, %395 : vector<8x128xf32>
    %404 = arith.addf %402, %403 : vector<8x128xf32>
    %405 = math.tanh %404 : vector<8x128xf32>
    %406 = arith.mulf %401, %405 : vector<8x128xf32>
    %c3_i32_139 = arith.constant 3 : i32
    %c8_i32_140 = arith.constant 8 : i32
    %407 = arith.muli %c3_i32_139, %c8_i32_140 : i32
    %408 = tpu.assume_multiple %407, 8 : i32
    %409 = arith.index_cast %408 : i32 to index
    %c0_141 = arith.constant 0 : index
    %410 = vector.load %arg6[%409, %c0_141] : memref<64x512xf32, #tpu.memory_space<vmem>>, vector<8x512xf32>
    %c1_142 = arith.constant 1 : index
    %c0_143 = arith.constant 0 : index
    %c0_144 = arith.constant 0 : index
    %411 = vector.load %arg2[%c1_142, %c0_143, %c0_144] : memref<2x128x512xf32, #tpu.memory_space<vmem>>, vector<1x128x512xf32>
    %412 = vector.shape_cast %411 : vector<1x128x512xf32> to vector<128x512xf32>
    %cst_145 = arith.constant dense<0.000000e+00> : vector<8x512xf32>
    %413 = tpu.matmul %406, %412, %cst_145 {dimension_numbers = #tpu.dot_dimension_numbers<[1], [0], [0], [1], [0, 0, 1, 1], [], []>} : vector<8x128xf32>, vector<128x512xf32>, vector<8x512xf32> -> vector<8x512xf32>
    %414 = arith.addf %410, %413 : vector<8x512xf32>
    %415 = vector.extract_strided_slice %414 {offsets = [0, 0], sizes = [8, 128], strides = [1, 1]} : vector<8x512xf32> to vector<8x128xf32>
    %416 = arith.negf %415 : vector<8x128xf32>
    %417 = math.exp %416 : vector<8x128xf32>
    %cst_146 = arith.constant 1.000000e+00 : f32
    %418 = vector.broadcast %cst_146 : f32 to vector<8x128xf32>
    %419 = arith.addf %418, %417 : vector<8x128xf32>
    %420 = arith.divf %418, %419 : vector<8x128xf32>
    %421 = vector.extract_strided_slice %414 {offsets = [0, 128], sizes = [8, 128], strides = [1, 1]} : vector<8x512xf32> to vector<8x128xf32>
    %422 = arith.negf %421 : vector<8x128xf32>
    %423 = math.exp %422 : vector<8x128xf32>
    %cst_147 = arith.constant 1.000000e+00 : f32
    %424 = vector.broadcast %cst_147 : f32 to vector<8x128xf32>
    %425 = arith.addf %424, %423 : vector<8x128xf32>
    %426 = arith.divf %424, %425 : vector<8x128xf32>
    %427 = vector.extract_strided_slice %414 {offsets = [0, 256], sizes = [8, 128], strides = [1, 1]} : vector<8x512xf32> to vector<8x128xf32>
    %428 = math.tanh %427 : vector<8x128xf32>
    %429 = vector.extract_strided_slice %414 {offsets = [0, 384], sizes = [8, 128], strides = [1, 1]} : vector<8x512xf32> to vector<8x128xf32>
    %430 = arith.negf %429 : vector<8x128xf32>
    %431 = math.exp %430 : vector<8x128xf32>
    %cst_148 = arith.constant 1.000000e+00 : f32
    %432 = vector.broadcast %cst_148 : f32 to vector<8x128xf32>
    %433 = arith.addf %432, %431 : vector<8x128xf32>
    %434 = arith.divf %432, %433 : vector<8x128xf32>
    %435 = arith.mulf %426, %404 : vector<8x128xf32>
    %436 = arith.mulf %420, %428 : vector<8x128xf32>
    %437 = arith.addf %435, %436 : vector<8x128xf32>
    %438 = math.tanh %437 : vector<8x128xf32>
    %439 = arith.mulf %434, %438 : vector<8x128xf32>
    %c4_i32_149 = arith.constant 4 : i32
    %c8_i32_150 = arith.constant 8 : i32
    %440 = arith.muli %c4_i32_149, %c8_i32_150 : i32
    %441 = tpu.assume_multiple %440, 8 : i32
    %442 = arith.index_cast %441 : i32 to index
    %c0_151 = arith.constant 0 : index
    %443 = vector.load %arg6[%442, %c0_151] : memref<64x512xf32, #tpu.memory_space<vmem>>, vector<8x512xf32>
    %c1_152 = arith.constant 1 : index
    %c0_153 = arith.constant 0 : index
    %c0_154 = arith.constant 0 : index
    %444 = vector.load %arg2[%c1_152, %c0_153, %c0_154] : memref<2x128x512xf32, #tpu.memory_space<vmem>>, vector<1x128x512xf32>
    %445 = vector.shape_cast %444 : vector<1x128x512xf32> to vector<128x512xf32>
    %cst_155 = arith.constant dense<0.000000e+00> : vector<8x512xf32>
    %446 = tpu.matmul %439, %445, %cst_155 {dimension_numbers = #tpu.dot_dimension_numbers<[1], [0], [0], [1], [0, 0, 1, 1], [], []>} : vector<8x128xf32>, vector<128x512xf32>, vector<8x512xf32> -> vector<8x512xf32>
    %447 = arith.addf %443, %446 : vector<8x512xf32>
    %448 = vector.extract_strided_slice %447 {offsets = [0, 0], sizes = [8, 128], strides = [1, 1]} : vector<8x512xf32> to vector<8x128xf32>
    %449 = arith.negf %448 : vector<8x128xf32>
    %450 = math.exp %449 : vector<8x128xf32>
    %cst_156 = arith.constant 1.000000e+00 : f32
    %451 = vector.broadcast %cst_156 : f32 to vector<8x128xf32>
    %452 = arith.addf %451, %450 : vector<8x128xf32>
    %453 = arith.divf %451, %452 : vector<8x128xf32>
    %454 = vector.extract_strided_slice %447 {offsets = [0, 128], sizes = [8, 128], strides = [1, 1]} : vector<8x512xf32> to vector<8x128xf32>
    %455 = arith.negf %454 : vector<8x128xf32>
    %456 = math.exp %455 : vector<8x128xf32>
    %cst_157 = arith.constant 1.000000e+00 : f32
    %457 = vector.broadcast %cst_157 : f32 to vector<8x128xf32>
    %458 = arith.addf %457, %456 : vector<8x128xf32>
    %459 = arith.divf %457, %458 : vector<8x128xf32>
    %460 = vector.extract_strided_slice %447 {offsets = [0, 256], sizes = [8, 128], strides = [1, 1]} : vector<8x512xf32> to vector<8x128xf32>
    %461 = math.tanh %460 : vector<8x128xf32>
    %462 = vector.extract_strided_slice %447 {offsets = [0, 384], sizes = [8, 128], strides = [1, 1]} : vector<8x512xf32> to vector<8x128xf32>
    %463 = arith.negf %462 : vector<8x128xf32>
    %464 = math.exp %463 : vector<8x128xf32>
    %cst_158 = arith.constant 1.000000e+00 : f32
    %465 = vector.broadcast %cst_158 : f32 to vector<8x128xf32>
    %466 = arith.addf %465, %464 : vector<8x128xf32>
    %467 = arith.divf %465, %466 : vector<8x128xf32>
    %468 = arith.mulf %459, %437 : vector<8x128xf32>
    %469 = arith.mulf %453, %461 : vector<8x128xf32>
    %470 = arith.addf %468, %469 : vector<8x128xf32>
    %471 = math.tanh %470 : vector<8x128xf32>
    %472 = arith.mulf %467, %471 : vector<8x128xf32>
    %c5_i32_159 = arith.constant 5 : i32
    %c8_i32_160 = arith.constant 8 : i32
    %473 = arith.muli %c5_i32_159, %c8_i32_160 : i32
    %474 = tpu.assume_multiple %473, 8 : i32
    %475 = arith.index_cast %474 : i32 to index
    %c0_161 = arith.constant 0 : index
    %476 = vector.load %arg6[%475, %c0_161] : memref<64x512xf32, #tpu.memory_space<vmem>>, vector<8x512xf32>
    %c1_162 = arith.constant 1 : index
    %c0_163 = arith.constant 0 : index
    %c0_164 = arith.constant 0 : index
    %477 = vector.load %arg2[%c1_162, %c0_163, %c0_164] : memref<2x128x512xf32, #tpu.memory_space<vmem>>, vector<1x128x512xf32>
    %478 = vector.shape_cast %477 : vector<1x128x512xf32> to vector<128x512xf32>
    %cst_165 = arith.constant dense<0.000000e+00> : vector<8x512xf32>
    %479 = tpu.matmul %472, %478, %cst_165 {dimension_numbers = #tpu.dot_dimension_numbers<[1], [0], [0], [1], [0, 0, 1, 1], [], []>} : vector<8x128xf32>, vector<128x512xf32>, vector<8x512xf32> -> vector<8x512xf32>
    %480 = arith.addf %476, %479 : vector<8x512xf32>
    %481 = vector.extract_strided_slice %480 {offsets = [0, 0], sizes = [8, 128], strides = [1, 1]} : vector<8x512xf32> to vector<8x128xf32>
    %482 = arith.negf %481 : vector<8x128xf32>
    %483 = math.exp %482 : vector<8x128xf32>
    %cst_166 = arith.constant 1.000000e+00 : f32
    %484 = vector.broadcast %cst_166 : f32 to vector<8x128xf32>
    %485 = arith.addf %484, %483 : vector<8x128xf32>
    %486 = arith.divf %484, %485 : vector<8x128xf32>
    %487 = vector.extract_strided_slice %480 {offsets = [0, 128], sizes = [8, 128], strides = [1, 1]} : vector<8x512xf32> to vector<8x128xf32>
    %488 = arith.negf %487 : vector<8x128xf32>
    %489 = math.exp %488 : vector<8x128xf32>
    %cst_167 = arith.constant 1.000000e+00 : f32
    %490 = vector.broadcast %cst_167 : f32 to vector<8x128xf32>
    %491 = arith.addf %490, %489 : vector<8x128xf32>
    %492 = arith.divf %490, %491 : vector<8x128xf32>
    %493 = vector.extract_strided_slice %480 {offsets = [0, 256], sizes = [8, 128], strides = [1, 1]} : vector<8x512xf32> to vector<8x128xf32>
    %494 = math.tanh %493 : vector<8x128xf32>
    %495 = vector.extract_strided_slice %480 {offsets = [0, 384], sizes = [8, 128], strides = [1, 1]} : vector<8x512xf32> to vector<8x128xf32>
    %496 = arith.negf %495 : vector<8x128xf32>
    %497 = math.exp %496 : vector<8x128xf32>
    %cst_168 = arith.constant 1.000000e+00 : f32
    %498 = vector.broadcast %cst_168 : f32 to vector<8x128xf32>
    %499 = arith.addf %498, %497 : vector<8x128xf32>
    %500 = arith.divf %498, %499 : vector<8x128xf32>
    %501 = arith.mulf %492, %470 : vector<8x128xf32>
    %502 = arith.mulf %486, %494 : vector<8x128xf32>
    %503 = arith.addf %501, %502 : vector<8x128xf32>
    %504 = math.tanh %503 : vector<8x128xf32>
    %505 = arith.mulf %500, %504 : vector<8x128xf32>
    %c6_i32_169 = arith.constant 6 : i32
    %c8_i32_170 = arith.constant 8 : i32
    %506 = arith.muli %c6_i32_169, %c8_i32_170 : i32
    %507 = tpu.assume_multiple %506, 8 : i32
    %508 = arith.index_cast %507 : i32 to index
    %c0_171 = arith.constant 0 : index
    %509 = vector.load %arg6[%508, %c0_171] : memref<64x512xf32, #tpu.memory_space<vmem>>, vector<8x512xf32>
    %c1_172 = arith.constant 1 : index
    %c0_173 = arith.constant 0 : index
    %c0_174 = arith.constant 0 : index
    %510 = vector.load %arg2[%c1_172, %c0_173, %c0_174] : memref<2x128x512xf32, #tpu.memory_space<vmem>>, vector<1x128x512xf32>
    %511 = vector.shape_cast %510 : vector<1x128x512xf32> to vector<128x512xf32>
    %cst_175 = arith.constant dense<0.000000e+00> : vector<8x512xf32>
    %512 = tpu.matmul %505, %511, %cst_175 {dimension_numbers = #tpu.dot_dimension_numbers<[1], [0], [0], [1], [0, 0, 1, 1], [], []>} : vector<8x128xf32>, vector<128x512xf32>, vector<8x512xf32> -> vector<8x512xf32>
    %513 = arith.addf %509, %512 : vector<8x512xf32>
    %514 = vector.extract_strided_slice %513 {offsets = [0, 0], sizes = [8, 128], strides = [1, 1]} : vector<8x512xf32> to vector<8x128xf32>
    %515 = arith.negf %514 : vector<8x128xf32>
    %516 = math.exp %515 : vector<8x128xf32>
    %cst_176 = arith.constant 1.000000e+00 : f32
    %517 = vector.broadcast %cst_176 : f32 to vector<8x128xf32>
    %518 = arith.addf %517, %516 : vector<8x128xf32>
    %519 = arith.divf %517, %518 : vector<8x128xf32>
    %520 = vector.extract_strided_slice %513 {offsets = [0, 128], sizes = [8, 128], strides = [1, 1]} : vector<8x512xf32> to vector<8x128xf32>
    %521 = arith.negf %520 : vector<8x128xf32>
    %522 = math.exp %521 : vector<8x128xf32>
    %cst_177 = arith.constant 1.000000e+00 : f32
    %523 = vector.broadcast %cst_177 : f32 to vector<8x128xf32>
    %524 = arith.addf %523, %522 : vector<8x128xf32>
    %525 = arith.divf %523, %524 : vector<8x128xf32>
    %526 = vector.extract_strided_slice %513 {offsets = [0, 256], sizes = [8, 128], strides = [1, 1]} : vector<8x512xf32> to vector<8x128xf32>
    %527 = math.tanh %526 : vector<8x128xf32>
    %528 = vector.extract_strided_slice %513 {offsets = [0, 384], sizes = [8, 128], strides = [1, 1]} : vector<8x512xf32> to vector<8x128xf32>
    %529 = arith.negf %528 : vector<8x128xf32>
    %530 = math.exp %529 : vector<8x128xf32>
    %cst_178 = arith.constant 1.000000e+00 : f32
    %531 = vector.broadcast %cst_178 : f32 to vector<8x128xf32>
    %532 = arith.addf %531, %530 : vector<8x128xf32>
    %533 = arith.divf %531, %532 : vector<8x128xf32>
    %534 = arith.mulf %525, %503 : vector<8x128xf32>
    %535 = arith.mulf %519, %527 : vector<8x128xf32>
    %536 = arith.addf %534, %535 : vector<8x128xf32>
    %537 = math.tanh %536 : vector<8x128xf32>
    %538 = arith.mulf %533, %537 : vector<8x128xf32>
    %c7_i32_179 = arith.constant 7 : i32
    %c8_i32_180 = arith.constant 8 : i32
    %539 = arith.muli %c7_i32_179, %c8_i32_180 : i32
    %540 = tpu.assume_multiple %539, 8 : i32
    %541 = arith.index_cast %540 : i32 to index
    %c0_181 = arith.constant 0 : index
    %542 = vector.load %arg6[%541, %c0_181] : memref<64x512xf32, #tpu.memory_space<vmem>>, vector<8x512xf32>
    %c1_182 = arith.constant 1 : index
    %c0_183 = arith.constant 0 : index
    %c0_184 = arith.constant 0 : index
    %543 = vector.load %arg2[%c1_182, %c0_183, %c0_184] : memref<2x128x512xf32, #tpu.memory_space<vmem>>, vector<1x128x512xf32>
    %544 = vector.shape_cast %543 : vector<1x128x512xf32> to vector<128x512xf32>
    %cst_185 = arith.constant dense<0.000000e+00> : vector<8x512xf32>
    %545 = tpu.matmul %538, %544, %cst_185 {dimension_numbers = #tpu.dot_dimension_numbers<[1], [0], [0], [1], [0, 0, 1, 1], [], []>} : vector<8x128xf32>, vector<128x512xf32>, vector<8x512xf32> -> vector<8x512xf32>
    %546 = arith.addf %542, %545 : vector<8x512xf32>
    %547 = vector.extract_strided_slice %546 {offsets = [0, 0], sizes = [8, 128], strides = [1, 1]} : vector<8x512xf32> to vector<8x128xf32>
    %548 = arith.negf %547 : vector<8x128xf32>
    %549 = math.exp %548 : vector<8x128xf32>
    %cst_186 = arith.constant 1.000000e+00 : f32
    %550 = vector.broadcast %cst_186 : f32 to vector<8x128xf32>
    %551 = arith.addf %550, %549 : vector<8x128xf32>
    %552 = arith.divf %550, %551 : vector<8x128xf32>
    %553 = vector.extract_strided_slice %546 {offsets = [0, 128], sizes = [8, 128], strides = [1, 1]} : vector<8x512xf32> to vector<8x128xf32>
    %554 = arith.negf %553 : vector<8x128xf32>
    %555 = math.exp %554 : vector<8x128xf32>
    %cst_187 = arith.constant 1.000000e+00 : f32
    %556 = vector.broadcast %cst_187 : f32 to vector<8x128xf32>
    %557 = arith.addf %556, %555 : vector<8x128xf32>
    %558 = arith.divf %556, %557 : vector<8x128xf32>
    %559 = vector.extract_strided_slice %546 {offsets = [0, 256], sizes = [8, 128], strides = [1, 1]} : vector<8x512xf32> to vector<8x128xf32>
    %560 = math.tanh %559 : vector<8x128xf32>
    %561 = vector.extract_strided_slice %546 {offsets = [0, 384], sizes = [8, 128], strides = [1, 1]} : vector<8x512xf32> to vector<8x128xf32>
    %562 = arith.negf %561 : vector<8x128xf32>
    %563 = math.exp %562 : vector<8x128xf32>
    %cst_188 = arith.constant 1.000000e+00 : f32
    %564 = vector.broadcast %cst_188 : f32 to vector<8x128xf32>
    %565 = arith.addf %564, %563 : vector<8x128xf32>
    %566 = arith.divf %564, %565 : vector<8x128xf32>
    %567 = arith.mulf %558, %536 : vector<8x128xf32>
    %568 = arith.mulf %552, %560 : vector<8x128xf32>
    %569 = arith.addf %567, %568 : vector<8x128xf32>
    %570 = math.tanh %569 : vector<8x128xf32>
    %571 = arith.mulf %566, %570 : vector<8x128xf32>
    %c8_i32_189 = arith.constant 8 : i32
    %c1_190 = arith.constant 1 : index
    %c0_191 = arith.constant 0 : index
    %c0_192 = arith.constant 0 : index
    %572 = vector.load %arg4[%c1_190, %c0_191, %c0_192] : memref<2x8x128xf32, #tpu.memory_space<vmem>>, vector<1x8x128xf32>
    %573 = vector.shape_cast %572 : vector<1x8x128xf32> to vector<8x128xf32>
    %574 = vector.shape_cast %571 : vector<8x128xf32> to vector<1x8x128xf32>
    tpu.vector_store %arg4[%c1_190, %c0_191, %c0_192], %574 {strides = array<i32>} : memref<2x8x128xf32, #tpu.memory_space<vmem>>, vector<1x8x128xf32>,
    %c1_193 = arith.constant 1 : index
    %c0_194 = arith.constant 0 : index
    %c0_195 = arith.constant 0 : index
    %575 = vector.load %arg5[%c1_193, %c0_194, %c0_195] : memref<2x8x128xf32, #tpu.memory_space<vmem>>, vector<1x8x128xf32>
    %576 = vector.shape_cast %575 : vector<1x8x128xf32> to vector<8x128xf32>
    %577 = vector.shape_cast %569 : vector<8x128xf32> to vector<1x8x128xf32>
    tpu.vector_store %arg5[%c1_193, %c0_194, %c0_195], %577 {strides = array<i32>} : memref<2x8x128xf32, #tpu.memory_space<vmem>>, vector<1x8x128xf32>,
    return
  }
}

</mosaic_0001>

<llo_original>
// kernel: tpu_custom_call.1
$region0: #{tpu_custom_call.1}
  #allocation0 [shape = 'u32[]', space=smem, size = 0x4, offset = 0x4, fixed_abs, tag = 'smem constant byte address 0x4 - core index']
  #allocation1 [shape = 'u32[72,128]{1,0:T(1,128)}', space=vmem, size = 0x9000, scoped, tag = 'internal scratch']
  #allocation2 [shape = 'f32[64,512]{1,0:T(8,128)}', space=vmem, size = 0x20000, scoped, tag = 'scratch operand']
  #allocation3 [shape = 'f32[64,128]{1,0:T(8,128)}', space=vmem, size = 0x8000, scoped, tag = 'scratch operand']
  %s0 = inlined_call_operand.hbm [shape: f32[64,128], index: 0, kind: input, shape index: {}]
  %s1 = inlined_call_operand.hbm [shape: f32[2,128,512], index: 1, kind: input, shape index: {}]
  %s2 = inlined_call_operand.hbm [shape: f32[2,128,512], index: 2, kind: input, shape index: {}]
  %s3 = inlined_call_operand.hbm [shape: f32[2,1,512], index: 3, kind: input, shape index: {}]
  %s4 = inlined_call_operand.hbm [shape: f32[2,8,128], index: 4, kind: output, shape index: {0}]
  %s5 = inlined_call_operand.hbm [shape: f32[2,8,128], index: 5, kind: output, shape index: {1}]
  %6 = xla_tuple %s4, %s5
  %s7 = sld [smem:[#allocation0]]
  $region50: #{tpu_custom_call.1} parent=0
    _
  %s9 = ssub.s32 1, %s7
  %s10 = scalar_select 0, %s9, %s7
  $region1: #{tpu_custom_call.1} parent=0
    #allocation4 [shape = 'u8[32768]{0}', space=vmem, size = 0x8000, scoped, tag = 'input window, operand 0, single buffered']
    #allocation5 [shape = 's32[1]{0}', space=sflag, size = 0x4, scoped, tag = 'scoped memory for tpu_custom_call.1']
    #allocation6 [shape = 's32[1]{0}', space=sflag, size = 0x4, scoped, tag = 'scoped memory for tpu_custom_call.1']
    #allocation7 [shape = 'u8[524288]{0}', space=vmem, size = 0x80000, scoped, tag = 'input window, operand 1, single buffered']
    #allocation8 [shape = 's32[1]{0}', space=sflag, size = 0x4, scoped, tag = 'scoped memory for tpu_custom_call.1']
    #allocation9 [shape = 'u8[524288]{0}', space=vmem, size = 0x80000, scoped, tag = 'input window, operand 2, single buffered']
    #allocation10 [shape = 'u8[4096]{0}', space=vmem, size = 0x1000, scoped, tag = 'input window, operand 3, single buffered']
    #allocation11 [shape = 's32[1]{0}', space=sflag, size = 0x4, scoped, tag = 'scoped memory for tpu_custom_call.1']
    #allocation12 [shape = 'u8[8192]{0}', space=vmem, size = 0x2000, scoped, tag = 'output window, operand 0, single buffered']
    #allocation13 [shape = 'u8[8192]{0}', space=vmem, size = 0x2000, scoped, tag = 'output window, operand 1, single buffered']
    #allocation14 [shape = 's32[1]{0}', space=sflag, size = 0x4, scoped, tag = 'scoped memory for tpu_custom_call.1']
    %11 = vsyncpa [#allocation5], 0
    %12 = vsyncpa [#allocation8], 0
    %13 = vsyncpa [#allocation11], 0
    %14 = vsyncpa [#allocation6], 0
    %15 = vsyncpa [#allocation14], 0
    // Predicated region
    $region2: #{tpu_custom_call.1} parent=1 // pred_check
      _
    $region3: #{tpu_custom_call.1} parent=1 // pred_check_branch
      %17 = sbr.rel (0) target = $region5
    $region4: #{tpu_custom_call.1} parent=1 // pred_region
      %19 = vsyncadd [#allocation5], 0
      %s20 = sshll.u32 %s0, 4
      %s21 = int_to_ptr.hbm [resolvable:$true] %s20
      %s22 = sshll.u32 [#allocation4], 4
      %s23 = int_to_ptr.vmem [resolvable:$true] %s22
      %28 = dma.hbm_to_vmem [thread:$0]  %s21, 1024, %s23, [#allocation5], 128, 128, 8
    $region5: #{tpu_custom_call.1} parent=1 // pred_fallthru
      _
    // Predicated region
    $region6: #{tpu_custom_call.1} parent=1 // pred_check
      _
    $region7: #{tpu_custom_call.1} parent=1 // pred_check_branch
      %30 = sbr.rel (0) target = $region9
    $region8: #{tpu_custom_call.1} parent=1 // pred_region
      %32 = vsyncadd [#allocation8], 0
      %s33 = sshll.u32 %s1, 4
      %s34 = int_to_ptr.hbm [resolvable:$true] %s33
      %s35 = sshll.u32 [#allocation7], 4
      %s36 = int_to_ptr.vmem [resolvable:$true] %s35
      %41 = dma.hbm_to_vmem [thread:$0]  %s34, 16384, %s36, [#allocation8], 512, 512, 32
    $region9: #{tpu_custom_call.1} parent=1 // pred_fallthru
      _
    // Predicated region
    $region10: #{tpu_custom_call.1} parent=1 // pred_check
      _
    $region11: #{tpu_custom_call.1} parent=1 // pred_check_branch
      %43 = sbr.rel (0) target = $region13
    $region12: #{tpu_custom_call.1} parent=1 // pred_region
      %45 = vsyncadd [#allocation8], 0
      %s46 = sshll.u32 %s2, 4
      %s47 = int_to_ptr.hbm [resolvable:$true] %s46
      %s48 = sshll.u32 [#allocation9], 4
      %s49 = int_to_ptr.vmem [resolvable:$true] %s48
      %54 = dma.hbm_to_vmem [thread:$0]  %s47, 16384, %s49, [#allocation8], 512, 512, 32
    $region13: #{tpu_custom_call.1} parent=1 // pred_fallthru
      _
    // Predicated region
    $region14: #{tpu_custom_call.1} parent=1 // pred_check
      _
    $region15: #{tpu_custom_call.1} parent=1 // pred_check_branch
      %56 = sbr.rel (0) target = $region17
    $region16: #{tpu_custom_call.1} parent=1 // pred_region
      %58 = vsyncadd [#allocation11], 0
      %s59 = sshll.u32 %s3, 4
      %s60 = int_to_ptr.hbm [resolvable:$true] %s59
      %s61 = sshll.u32 [#allocation10], 4
      %s62 = int_to_ptr.vmem [resolvable:$true] %s61
      %67 = dma.hbm_to_vmem [thread:$0]  %s60, 128, %s62, [#allocation11], 64, 64, 4
    $region17: #{tpu_custom_call.1} parent=1 // pred_fallthru
      _
    // Predicated region
    $region18: #{tpu_custom_call.1} parent=1 // pred_check
      _
    $region19: #{tpu_custom_call.1} parent=1 // pred_check_branch
      %69 = sbr.rel (0) target = $region21
    $region20: #{tpu_custom_call.1} parent=1 // pred_region
      %71 = dma.done [#allocation5], 1024
    $region21: #{tpu_custom_call.1} parent=1 // pred_fallthru
      _
    // Predicated region
    $region22: #{tpu_custom_call.1} parent=1 // pred_check
      _
    $region23: #{tpu_custom_call.1} parent=1 // pred_check_branch
      %73 = sbr.rel (0) target = $region25
    $region24: #{tpu_custom_call.1} parent=1 // pred_region
      %75 = dma.done [#allocation8], 16384
    $region25: #{tpu_custom_call.1} parent=1 // pred_fallthru
      _
    // Predicated region
    $region26: #{tpu_custom_call.1} parent=1 // pred_check
      _
    $region27: #{tpu_custom_call.1} parent=1 // pred_check_branch
      %77 = sbr.rel (0) target = $region29
    $region28: #{tpu_custom_call.1} parent=1 // pred_region
      %79 = dma.done [#allocation8], 16384
    $region29: #{tpu_custom_call.1} parent=1 // pred_fallthru
      _
    // Predicated region
    $region30: #{tpu_custom_call.1} parent=1 // pred_check
      _
    $region31: #{tpu_custom_call.1} parent=1 // pred_check_branch
      %81 = sbr.rel (0) target = $region33
    $region32: #{tpu_custom_call.1} parent=1 // pred_region
      %83 = dma.done [#allocation11], 128
    $region33: #{tpu_custom_call.1} parent=1 // pred_fallthru
      _
    %v84 = vld [vmem:[#allocation4] sm:$0xff]
    %v85 = vld [vmem:[#allocation4 + $0x8] sm:$0xff]
    %v86 = vld [vmem:[#allocation4 + $0x10] sm:$0xff]
    %v87 = vld [vmem:[#allocation4 + $0x18] sm:$0xff]
    %v88 = vld [vmem:[#allocation4 + $0x20] sm:$0xff]
    %v89 = vld [vmem:[#allocation4 + $0x28] sm:$0xff]
    %v90 = vld [vmem:[#allocation4 + $0x30] sm:$0xff]
    %v91 = vld [vmem:[#allocation4 + $0x38] sm:$0xff]
    %v92 = vld [vmem:[#allocation7] sm:$0xff]
    %v93 = vld [vmem:[#allocation7 + $0x8] sm:$0xff]
    %v94 = vld [vmem:[#allocation7 + $0x10] sm:$0xff]
    %v95 = vld [vmem:[#allocation7 + $0x18] sm:$0xff]
    %v96 = vld [vmem:[#allocation7 + $0x20] sm:$0xff]
    %v97 = vld [vmem:[#allocation7 + $0x28] sm:$0xff]
    %v98 = vld [vmem:[#allocation7 + $0x30] sm:$0xff]
    %v99 = vld [vmem:[#allocation7 + $0x38] sm:$0xff]
    %v100 = vld [vmem:[#allocation7 + $0x40] sm:$0xff]
    %v101 = vld [vmem:[#allocation7 + $0x48] sm:$0xff]
    %v102 = vld [vmem:[#allocation7 + $0x50] sm:$0xff]
    %v103 = vld [vmem:[#allocation7 + $0x58] sm:$0xff]
    %v104 = vld [vmem:[#allocation7 + $0x60] sm:$0xff]
    %v105 = vld [vmem:[#allocation7 + $0x68] sm:$0xff]
    %v106 = vld [vmem:[#allocation7 + $0x70] sm:$0xff]
    %v107 = vld [vmem:[#allocation7 + $0x78] sm:$0xff]
    %v108 = vld [vmem:[#allocation7 + $0x80] sm:$0xff]
    %v109 = vld [vmem:[#allocation7 + $0x88] sm:$0xff]
    %v110 = vld [vmem:[#allocation7 + $0x90] sm:$0xff]
    %v111 = vld [vmem:[#allocation7 + $0x98] sm:$0xff]
    %v112 = vld [vmem:[#allocation7 + $0xa0] sm:$0xff]
    %v113 = vld [vmem:[#allocation7 + $0xa8] sm:$0xff]
    %v114 = vld [vmem:[#allocation7 + $0xb0] sm:$0xff]
    %v115 = vld [vmem:[#allocation7 + $0xb8] sm:$0xff]
    %v116 = vld [vmem:[#allocation7 + $0xc0] sm:$0xff]
    %v117 = vld [vmem:[#allocation7 + $0xc8] sm:$0xff]
    %v118 = vld [vmem:[#allocation7 + $0xd0] sm:$0xff]
    %v119 = vld [vmem:[#allocation7 + $0xd8] sm:$0xff]
    %v120 = vld [vmem:[#allocation7 + $0xe0] sm:$0xff]
    %v121 = vld [vmem:[#allocation7 + $0xe8] sm:$0xff]
    %v122 = vld [vmem:[#allocation7 + $0xf0] sm:$0xff]
    %v123 = vld [vmem:[#allocation7 + $0xf8] sm:$0xff]
    %v124 = vld [vmem:[#allocation7 + $0x100] sm:$0xff]
    %v125 = vld [vmem:[#allocation7 + $0x108] sm:$0xff]
    %v126 = vld [vmem:[#allocation7 + $0x110] sm:$0xff]
    %v127 = vld [vmem:[#allocation7 + $0x118] sm:$0xff]
    %v128 = vld [vmem:[#allocation7 + $0x120] sm:$0xff]
    %v129 = vld [vmem:[#allocation7 + $0x128] sm:$0xff]
    %v130 = vld [vmem:[#allocation7 + $0x130] sm:$0xff]
    %v131 = vld [vmem:[#allocation7 + $0x138] sm:$0xff]
    %v132 = vld [vmem:[#allocation7 + $0x140] sm:$0xff]
    %v133 = vld [vmem:[#allocation7 + $0x148] sm:$0xff]
    %v134 = vld [vmem:[#allocation7 + $0x150] sm:$0xff]
    %v135 = vld [vmem:[#allocation7 + $0x158] sm:$0xff]
    %v136 = vld [vmem:[#allocation7 + $0x160] sm:$0xff]
    %v137 = vld [vmem:[#allocation7 + $0x168] sm:$0xff]
    %v138 = vld [vmem:[#allocation7 + $0x170] sm:$0xff]
    %v139 = vld [vmem:[#allocation7 + $0x178] sm:$0xff]
    %v140 = vld [vmem:[#allocation7 + $0x180] sm:$0xff]
    %v141 = vld [vmem:[#allocation7 + $0x188] sm:$0xff]
    %v142 = vld [vmem:[#allocation7 + $0x190] sm:$0xff]
    %v143 = vld [vmem:[#allocation7 + $0x198] sm:$0xff]
    %v144 = vld [vmem:[#allocation7 + $0x1a0] sm:$0xff]
    %v145 = vld [vmem:[#allocation7 + $0x1a8] sm:$0xff]
    %v146 = vld [vmem:[#allocation7 + $0x1b0] sm:$0xff]
    %v147 = vld [vmem:[#allocation7 + $0x1b8] sm:$0xff]
    %v148 = vld [vmem:[#allocation7 + $0x1c0] sm:$0xff]
    %v149 = vld [vmem:[#allocation7 + $0x1c8] sm:$0xff]
    %v150 = vld [vmem:[#allocation7 + $0x1d0] sm:$0xff]
    %v151 = vld [vmem:[#allocation7 + $0x1d8] sm:$0xff]
    %v152 = vld [vmem:[#allocation7 + $0x1e0] sm:$0xff]
    %v153 = vld [vmem:[#allocation7 + $0x1e8] sm:$0xff]
    %v154 = vld [vmem:[#allocation7 + $0x1f0] sm:$0xff]
    %v155 = vld [vmem:[#allocation7 + $0x1f8] sm:$0xff]
    %v156 = vld [vmem:[#allocation10] sm:$0xf]
    %v158 = vperm.slane %v156, 0
    %v159 = vperm.slane %v156, 1
    %v160 = vperm.slane %v156, 2
    %v161 = vperm.slane %v156, 3
    %166 = vmatpush.msra.mxu0 %v152
    %167 = vmatpush.msra.mxu0 %v148
    %168 = vmatpush.msra.mxu0 %v144
    %169 = vmatpush.msra.mxu0 %v140
    %170 = vmatpush.msra.mxu0 %v136
    %171 = vmatpush.msra.mxu0 %v132
    %172 = vmatpush.msra.mxu0 %v128
    %173 = vmatpush.msra.mxu0 %v124
    %174 = vmatpush.msra.mxu0 %v120
    %175 = vmatpush.msra.mxu0 %v116
    %176 = vmatpush.msra.mxu0 %v112
    %177 = vmatpush.msra.mxu0 %v108
    %178 = vmatpush.msra.mxu0 %v104
    %179 = vmatpush.msra.mxu0 %v100
    %180 = vmatpush.msra.mxu0 %v96
    %181 = vmatpush.msra.mxu0 %v92
    %182 = vmatmul.f32.gmra.mxu0 %v84
    %v183 = vpop.f32.mrf.mxu0
    %v184 = vadd.f32 %v158, %v183
    %185 = vmatmul.f32.gmra.mxu0 %v85
    %v186 = vpop.f32.mrf.mxu0
    %v187 = vadd.f32 %v158, %v186
    %188 = vmatmul.f32.gmra.mxu0 %v86
    %v189 = vpop.f32.mrf.mxu0
    %v190 = vadd.f32 %v158, %v189
    %191 = vmatmul.f32.gmra.mxu0 %v87
    %v192 = vpop.f32.mrf.mxu0
    %v193 = vadd.f32 %v158, %v192
    %194 = vmatmul.f32.gmra.mxu0 %v88
    %v195 = vpop.f32.mrf.mxu0
    %v196 = vadd.f32 %v158, %v195
    %197 = vmatmul.f32.gmra.mxu0 %v89
    %v198 = vpop.f32.mrf.mxu0
    %v199 = vadd.f32 %v158, %v198
    %200 = vmatmul.f32.gmra.mxu0 %v90
    %v201 = vpop.f32.mrf.mxu0
    %v202 = vadd.f32 %v158, %v201
    %203 = vmatmul.f32.gmra.mxu0 %v91
    %v204 = vpop.f32.mrf.mxu0
    %v205 = vadd.f32 %v158, %v204
    %206 = vdwg.mxu0
    %207 = vmatpush.msra.mxu0 %v153
    %208 = vmatpush.msra.mxu0 %v149
    %209 = vmatpush.msra.mxu0 %v145
    %210 = vmatpush.msra.mxu0 %v141
    %211 = vmatpush.msra.mxu0 %v137
    %212 = vmatpush.msra.mxu0 %v133
    %213 = vmatpush.msra.mxu0 %v129
    %214 = vmatpush.msra.mxu0 %v125
    %215 = vmatpush.msra.mxu0 %v121
    %216 = vmatpush.msra.mxu0 %v117
    %217 = vmatpush.msra.mxu0 %v113
    %218 = vmatpush.msra.mxu0 %v109
    %219 = vmatpush.msra.mxu0 %v105
    %220 = vmatpush.msra.mxu0 %v101
    %221 = vmatpush.msra.mxu0 %v97
    %222 = vmatpush.msra.mxu0 %v93
    %223 = vmatmul.f32.gmra.mxu0 %v84
    %v224 = vpop.f32.mrf.mxu0
    %v225 = vadd.f32 %v159, %v224
    %226 = vmatmul.f32.gmra.mxu0 %v85
    %v227 = vpop.f32.mrf.mxu0
    %v228 = vadd.f32 %v159, %v227
    %229 = vmatmul.f32.gmra.mxu0 %v86
    %v230 = vpop.f32.mrf.mxu0
    %v231 = vadd.f32 %v159, %v230
    %232 = vmatmul.f32.gmra.mxu0 %v87
    %v233 = vpop.f32.mrf.mxu0
    %v234 = vadd.f32 %v159, %v233
    %235 = vmatmul.f32.gmra.mxu0 %v88
    %v236 = vpop.f32.mrf.mxu0
    %v237 = vadd.f32 %v159, %v236
    %238 = vmatmul.f32.gmra.mxu0 %v89
    %v239 = vpop.f32.mrf.mxu0
    %v240 = vadd.f32 %v159, %v239
    %241 = vmatmul.f32.gmra.mxu0 %v90
    %v242 = vpop.f32.mrf.mxu0
    %v243 = vadd.f32 %v159, %v242
    %244 = vmatmul.f32.gmra.mxu0 %v91
    %v245 = vpop.f32.mrf.mxu0
    %v246 = vadd.f32 %v159, %v245
    %247 = vdwg.mxu0
    %248 = vmatpush.msra.mxu0 %v154
    %249 = vmatpush.msra.mxu0 %v150
    %250 = vmatpush.msra.mxu0 %v146
    %251 = vmatpush.msra.mxu0 %v142
    %252 = vmatpush.msra.mxu0 %v138
    %253 = vmatpush.msra.mxu0 %v134
    %254 = vmatpush.msra.mxu0 %v130
    %255 = vmatpush.msra.mxu0 %v126
    %256 = vmatpush.msra.mxu0 %v122
    %257 = vmatpush.msra.mxu0 %v118
    %258 = vmatpush.msra.mxu0 %v114
    %259 = vmatpush.msra.mxu0 %v110
    %260 = vmatpush.msra.mxu0 %v106
    %261 = vmatpush.msra.mxu0 %v102
    %262 = vmatpush.msra.mxu0 %v98
    %263 = vmatpush.msra.mxu0 %v94
    %264 = vmatmul.f32.gmra.mxu0 %v84
    %v265 = vpop.f32.mrf.mxu0
    %v266 = vadd.f32 %v160, %v265
    %267 = vmatmul.f32.gmra.mxu0 %v85
    %v268 = vpop.f32.mrf.mxu0
    %v269 = vadd.f32 %v160, %v268
    %270 = vmatmul.f32.gmra.mxu0 %v86
    %v271 = vpop.f32.mrf.mxu0
    %v272 = vadd.f32 %v160, %v271
    %273 = vmatmul.f32.gmra.mxu0 %v87
    %v274 = vpop.f32.mrf.mxu0
    %v275 = vadd.f32 %v160, %v274
    %276 = vmatmul.f32.gmra.mxu0 %v88
    %v277 = vpop.f32.mrf.mxu0
    %v278 = vadd.f32 %v160, %v277
    %279 = vmatmul.f32.gmra.mxu0 %v89
    %v280 = vpop.f32.mrf.mxu0
    %v281 = vadd.f32 %v160, %v280
    %282 = vmatmul.f32.gmra.mxu0 %v90
    %v283 = vpop.f32.mrf.mxu0
    %v284 = vadd.f32 %v160, %v283
    %285 = vmatmul.f32.gmra.mxu0 %v91
    %v286 = vpop.f32.mrf.mxu0
    %v287 = vadd.f32 %v160, %v286
    %288 = vdwg.mxu0
    %289 = vmatpush.msra.mxu0 %v155
    %290 = vmatpush.msra.mxu0 %v151
    %291 = vmatpush.msra.mxu0 %v147
    %292 = vmatpush.msra.mxu0 %v143
    %293 = vmatpush.msra.mxu0 %v139
    %294 = vmatpush.msra.mxu0 %v135
    %295 = vmatpush.msra.mxu0 %v131
    %296 = vmatpush.msra.mxu0 %v127
    %297 = vmatpush.msra.mxu0 %v123
    %298 = vmatpush.msra.mxu0 %v119
    %299 = vmatpush.msra.mxu0 %v115
    %300 = vmatpush.msra.mxu0 %v111
    %301 = vmatpush.msra.mxu0 %v107
    %302 = vmatpush.msra.mxu0 %v103
    %303 = vmatpush.msra.mxu0 %v99
    %304 = vmatpush.msra.mxu0 %v95
    %305 = vmatmul.f32.gmra.mxu0 %v84
    %v306 = vpop.f32.mrf.mxu0
    %v307 = vadd.f32 %v161, %v306
    %308 = vmatmul.f32.gmra.mxu0 %v85
    %v309 = vpop.f32.mrf.mxu0
    %v310 = vadd.f32 %v161, %v309
    %311 = vmatmul.f32.gmra.mxu0 %v86
    %v312 = vpop.f32.mrf.mxu0
    %v313 = vadd.f32 %v161, %v312
    %314 = vmatmul.f32.gmra.mxu0 %v87
    %v315 = vpop.f32.mrf.mxu0
    %v316 = vadd.f32 %v161, %v315
    %317 = vmatmul.f32.gmra.mxu0 %v88
    %v318 = vpop.f32.mrf.mxu0
    %v319 = vadd.f32 %v161, %v318
    %320 = vmatmul.f32.gmra.mxu0 %v89
    %v321 = vpop.f32.mrf.mxu0
    %v322 = vadd.f32 %v161, %v321
    %323 = vmatmul.f32.gmra.mxu0 %v90
    %v324 = vpop.f32.mrf.mxu0
    %v325 = vadd.f32 %v161, %v324
    %326 = vmatmul.f32.gmra.mxu0 %v91
    %v327 = vpop.f32.mrf.mxu0
    %v328 = vadd.f32 %v161, %v327
    %329 = vdwg.mxu0
    %330 = vst [vmem:[#allocation2] sm:$0xff] %v184
    %331 = vst [vmem:[#allocation2 + $0x8] sm:$0xff] %v225
    %332 = vst [vmem:[#allocation2 + $0x10] sm:$0xff] %v266
    %333 = vst [vmem:[#allocation2 + $0x18] sm:$0xff] %v307
    %334 = vst [vmem:[#allocation2 + $0x20] sm:$0xff] %v187
    %335 = vst [vmem:[#allocation2 + $0x28] sm:$0xff] %v228
    %336 = vst [vmem:[#allocation2 + $0x30] sm:$0xff] %v269
    %337 = vst [vmem:[#allocation2 + $0x38] sm:$0xff] %v310
    %338 = vst [vmem:[#allocation2 + $0x40] sm:$0xff] %v190
    %339 = vst [vmem:[#allocation2 + $0x48] sm:$0xff] %v231
    %340 = vst [vmem:[#allocation2 + $0x50] sm:$0xff] %v272
    %341 = vst [vmem:[#allocation2 + $0x58] sm:$0xff] %v313
    %342 = vst [vmem:[#allocation2 + $0x60] sm:$0xff] %v193
    %343 = vst [vmem:[#allocation2 + $0x68] sm:$0xff] %v234
    %344 = vst [vmem:[#allocation2 + $0x70] sm:$0xff] %v275
    %345 = vst [vmem:[#allocation2 + $0x78] sm:$0xff] %v316
    %346 = vst [vmem:[#allocation2 + $0x80] sm:$0xff] %v196
    %347 = vst [vmem:[#allocation2 + $0x88] sm:$0xff] %v237
    %348 = vst [vmem:[#allocation2 + $0x90] sm:$0xff] %v278
    %349 = vst [vmem:[#allocation2 + $0x98] sm:$0xff] %v319
    %350 = vst [vmem:[#allocation2 + $0xa0] sm:$0xff] %v199
    %351 = vst [vmem:[#allocation2 + $0xa8] sm:$0xff] %v240
    %352 = vst [vmem:[#allocation2 + $0xb0] sm:$0xff] %v281
    %353 = vst [vmem:[#allocation2 + $0xb8] sm:$0xff] %v322
    %354 = vst [vmem:[#allocation2 + $0xc0] sm:$0xff] %v202
    %355 = vst [vmem:[#allocation2 + $0xc8] sm:$0xff] %v243
    %356 = vst [vmem:[#allocation2 + $0xd0] sm:$0xff] %v284
    %357 = vst [vmem:[#allocation2 + $0xd8] sm:$0xff] %v325
    %358 = vst [vmem:[#allocation2 + $0xe0] sm:$0xff] %v205
    %359 = vst [vmem:[#allocation2 + $0xe8] sm:$0xff] %v246
    %360 = vst [vmem:[#allocation2 + $0xf0] sm:$0xff] %v287
    %361 = vst [vmem:[#allocation2 + $0xf8] sm:$0xff] %v328
    %s362 = smul.u32 0, 4
    %s363 = smul.addr %s362, 8
    %s364 = scalar_lea.vmem [#allocation2], %s363
    %v365 = vld [vmem:[%s364] sm:$0xff]
    %v366 = vld [vmem:[%s364 + $0x8] sm:$0xff]
    %v367 = vld [vmem:[%s364 + $0x10] sm:$0xff]
    %v368 = vld [vmem:[%s364 + $0x18] sm:$0xff]
    %v369 = vld [vmem:[#allocation9] sm:$0xff]
    %v370 = vld [vmem:[#allocation9 + $0x8] sm:$0xff]
    %v371 = vld [vmem:[#allocation9 + $0x10] sm:$0xff]
    %v372 = vld [vmem:[#allocation9 + $0x18] sm:$0xff]
    %v373 = vld [vmem:[#allocation9 + $0x20] sm:$0xff]
    %v374 = vld [vmem:[#allocation9 + $0x28] sm:$0xff]
    %v375 = vld [vmem:[#allocation9 + $0x30] sm:$0xff]
    %v376 = vld [vmem:[#allocation9 + $0x38] sm:$0xff]
    %v377 = vld [vmem:[#allocation9 + $0x40] sm:$0xff]
    %v378 = vld [vmem:[#allocation9 + $0x48] sm:$0xff]
    %v379 = vld [vmem:[#allocation9 + $0x50] sm:$0xff]
    %v380 = vld [vmem:[#allocation9 + $0x58] sm:$0xff]
    %v381 = vld [vmem:[#allocation9 + $0x60] sm:$0xff]
    %v382 = vld [vmem:[#allocation9 + $0x68] sm:$0xff]
    %v383 = vld [vmem:[#allocation9 + $0x70] sm:$0xff]
    %v384 = vld [vmem:[#allocation9 + $0x78] sm:$0xff]
    %v385 = vld [vmem:[#allocation9 + $0x80] sm:$0xff]
    %v386 = vld [vmem:[#allocation9 + $0x88] sm:$0xff]
    %v387 = vld [vmem:[#allocation9 + $0x90] sm:$0xff]
    %v388 = vld [vmem:[#allocation9 + $0x98] sm:$0xff]
    %v389 = vld [vmem:[#allocation9 + $0xa0] sm:$0xff]
    %v390 = vld [vmem:[#allocation9 + $0xa8] sm:$0xff]
    %v391 = vld [vmem:[#allocation9 + $0xb0] sm:$0xff]
    %v392 = vld [vmem:[#allocation9 + $0xb8] sm:$0xff]
    %v393 = vld [vmem:[#allocation9 + $0xc0] sm:$0xff]
    %v394 = vld [vmem:[#allocation9 + $0xc8] sm:$0xff]
    %v395 = vld [vmem:[#allocation9 + $0xd0] sm:$0xff]
    %v396 = vld [vmem:[#allocation9 + $0xd8] sm:$0xff]
    %v397 = vld [vmem:[#allocation9 + $0xe0] sm:$0xff]
    %v398 = vld [vmem:[#allocation9 + $0xe8] sm:$0xff]
    %v399 = vld [vmem:[#allocation9 + $0xf0] sm:$0xff]
    %v400 = vld [vmem:[#allocation9 + $0xf8] sm:$0xff]
    %v401 = vld [vmem:[#allocation9 + $0x100] sm:$0xff]
    %v402 = vld [vmem:[#allocation9 + $0x108] sm:$0xff]
    %v403 = vld [vmem:[#allocation9 + $0x110] sm:$0xff]
    %v404 = vld [vmem:[#allocation9 + $0x118] sm:$0xff]
    %v405 = vld [vmem:[#allocation9 + $0x120] sm:$0xff]
    %v406 = vld [vmem:[#allocation9 + $0x128] sm:$0xff]
    %v407 = vld [vmem:[#allocation9 + $0x130] sm:$0xff]
    %v408 = vld [vmem:[#allocation9 + $0x138] sm:$0xff]
    %v409 = vld [vmem:[#allocation9 + $0x140] sm:$0xff]
    %v410 = vld [vmem:[#allocation9 + $0x148] sm:$0xff]
    %v411 = vld [vmem:[#allocation9 + $0x150] sm:$0xff]
    %v412 = vld [vmem:[#allocation9 + $0x158] sm:$0xff]
    %v413 = vld [vmem:[#allocation9 + $0x160] sm:$0xff]
    %v414 = vld [vmem:[#allocation9 + $0x168] sm:$0xff]
    %v415 = vld [vmem:[#allocation9 + $0x170] sm:$0xff]
    %v416 = vld [vmem:[#allocation9 + $0x178] sm:$0xff]
    %v417 = vld [vmem:[#allocation9 + $0x180] sm:$0xff]
    %v418 = vld [vmem:[#allocation9 + $0x188] sm:$0xff]
    %v419 = vld [vmem:[#allocation9 + $0x190] sm:$0xff]
    %v420 = vld [vmem:[#allocation9 + $0x198] sm:$0xff]
    %v421 = vld [vmem:[#allocation9 + $0x1a0] sm:$0xff]
    %v422 = vld [vmem:[#allocation9 + $0x1a8] sm:$0xff]
    %v423 = vld [vmem:[#allocation9 + $0x1b0] sm:$0xff]
    %v424 = vld [vmem:[#allocation9 + $0x1b8] sm:$0xff]
    %v425 = vld [vmem:[#allocation9 + $0x1c0] sm:$0xff]
    %v426 = vld [vmem:[#allocation9 + $0x1c8] sm:$0xff]
    %v427 = vld [vmem:[#allocation9 + $0x1d0] sm:$0xff]
    %v428 = vld [vmem:[#allocation9 + $0x1d8] sm:$0xff]
    %v429 = vld [vmem:[#allocation9 + $0x1e0] sm:$0xff]
    %v430 = vld [vmem:[#allocation9 + $0x1e8] sm:$0xff]
    %v431 = vld [vmem:[#allocation9 + $0x1f0] sm:$0xff]
    %v432 = vld [vmem:[#allocation9 + $0x1f8] sm:$0xff]
    %433 = vmatpush.msra.mxu0 %v429
    %434 = vmatpush.msra.mxu0 %v425
    %435 = vmatpush.msra.mxu0 %v421
    %436 = vmatpush.msra.mxu0 %v417
    %437 = vmatpush.msra.mxu0 %v413
    %438 = vmatpush.msra.mxu0 %v409
    %439 = vmatpush.msra.mxu0 %v405
    %440 = vmatpush.msra.mxu0 %v401
    %441 = vmatpush.msra.mxu0 %v397
    %442 = vmatpush.msra.mxu0 %v393
    %443 = vmatpush.msra.mxu0 %v389
    %444 = vmatpush.msra.mxu0 %v385
    %445 = vmatpush.msra.mxu0 %v381
    %446 = vmatpush.msra.mxu0 %v377
    %447 = vmatpush.msra.mxu0 %v373
    %448 = vmatpush.msra.mxu0 %v369
    %449 = vmatmul.f32.gmra.mxu0 0.0
    %v450 = vpop.f32.mrf.mxu0
    %v451 = vadd.f32 0.0, %v450
    %452 = vdwg.mxu0
    %453 = vmatpush.msra.mxu0 %v430
    %454 = vmatpush.msra.mxu0 %v426
    %455 = vmatpush.msra.mxu0 %v422
    %456 = vmatpush.msra.mxu0 %v418
    %457 = vmatpush.msra.mxu0 %v414
    %458 = vmatpush.msra.mxu0 %v410
    %459 = vmatpush.msra.mxu0 %v406
    %460 = vmatpush.msra.mxu0 %v402
    %461 = vmatpush.msra.mxu0 %v398
    %462 = vmatpush.msra.mxu0 %v394
    %463 = vmatpush.msra.mxu0 %v390
    %464 = vmatpush.msra.mxu0 %v386
    %465 = vmatpush.msra.mxu0 %v382
    %466 = vmatpush.msra.mxu0 %v378
    %467 = vmatpush.msra.mxu0 %v374
    %468 = vmatpush.msra.mxu0 %v370
    %469 = vmatmul.f32.gmra.mxu0 0.0
    %v470 = vpop.f32.mrf.mxu0
    %v471 = vadd.f32 0.0, %v470
    %472 = vdwg.mxu0
    %473 = vmatpush.msra.mxu0 %v431
    %474 = vmatpush.msra.mxu0 %v427
    %475 = vmatpush.msra.mxu0 %v423
    %476 = vmatpush.msra.mxu0 %v419
    %477 = vmatpush.msra.mxu0 %v415
    %478 = vmatpush.msra.mxu0 %v411
    %479 = vmatpush.msra.mxu0 %v407
    %480 = vmatpush.msra.mxu0 %v403
    %481 = vmatpush.msra.mxu0 %v399
    %482 = vmatpush.msra.mxu0 %v395
    %483 = vmatpush.msra.mxu0 %v391
    %484 = vmatpush.msra.mxu0 %v387
    %485 = vmatpush.msra.mxu0 %v383
    %486 = vmatpush.msra.mxu0 %v379
    %487 = vmatpush.msra.mxu0 %v375
    %488 = vmatpush.msra.mxu0 %v371
    %489 = vmatmul.f32.gmra.mxu0 0.0
    %v490 = vpop.f32.mrf.mxu0
    %v491 = vadd.f32 0.0, %v490
    %492 = vdwg.mxu0
    %493 = vmatpush.msra.mxu0 %v432
    %494 = vmatpush.msra.mxu0 %v428
    %495 = vmatpush.msra.mxu0 %v424
    %496 = vmatpush.msra.mxu0 %v420
    %497 = vmatpush.msra.mxu0 %v416
    %498 = vmatpush.msra.mxu0 %v412
    %499 = vmatpush.msra.mxu0 %v408
    %500 = vmatpush.msra.mxu0 %v404
    %501 = vmatpush.msra.mxu0 %v400
    %502 = vmatpush.msra.mxu0 %v396
    %503 = vmatpush.msra.mxu0 %v392
    %504 = vmatpush.msra.mxu0 %v388
    %505 = vmatpush.msra.mxu0 %v384
    %506 = vmatpush.msra.mxu0 %v380
    %507 = vmatpush.msra.mxu0 %v376
    %508 = vmatpush.msra.mxu0 %v372
    %509 = vmatmul.f32.gmra.mxu0 0.0
    %v510 = vpop.f32.mrf.mxu0
    %v511 = vadd.f32 0.0, %v510
    %512 = vdwg.mxu0
    %v513 = vadd.f32 %v365, %v451
    %v514 = vadd.f32 %v366, %v471
    %v515 = vadd.f32 %v367, %v491
    %v516 = vadd.f32 %v368, %v511
    %v517 = vxor.u32 %v513, 2147483648
    %v518 = vmul.f32 %v517, 1.442695
    %v519 = vpow.pop %v518
    %v520 = vadd.f32 %v519, 1.0
    %v521 = vrcp.pop %v520
    %v522 = vmul.f32 %v520, %v521
    %v523 = vsub.f32 1.0, %v522
    %v524 = vmul.f32 %v521, %v523
    %v525 = vadd.f32 %v521, %v524
    %vm526 = vweird.f32 %v520
    %vm527 = vweird.f32 %v521
    %vm528 = vmor %vm526, %vm527
    %v529 = vsel %vm528, %v521, %v525
    %v530 = vand.u32 2147483647, %v520
    %vm531 = vcmp.eq.f32.partialorder %v530, 8.507059e+37
    %v532 = vand.u32 %v520, 2147483648
    %v533 = vor.u32 1.1754944e-38, %v532
    %v534 = vsel %vm531, %v533, %v529
    %v535 = vmul.f32 1.0, %v534
    %v536 = vxor.u32 %v514, 2147483648
    %v537 = vmul.f32 %v536, 1.442695
    %v538 = vpow.pop %v537
    %v539 = vadd.f32 %v538, 1.0
    %v540 = vrcp.pop %v539
    %v541 = vmul.f32 %v539, %v540
    %v542 = vsub.f32 1.0, %v541
    %v543 = vmul.f32 %v540, %v542
    %v544 = vadd.f32 %v540, %v543
    %vm545 = vweird.f32 %v539
    %vm546 = vweird.f32 %v540
    %vm547 = vmor %vm545, %vm546
    %v548 = vsel %vm547, %v540, %v544
    %v549 = vand.u32 2147483647, %v539
    %vm550 = vcmp.eq.f32.partialorder %v549, 8.507059e+37
    %v551 = vand.u32 %v539, 2147483648
    %v552 = vor.u32 1.1754944e-38, %v551
    %v553 = vsel %vm550, %v552, %v548
    %v554 = vmul.f32 1.0, %v553
    %v555 = vtanh.pop %v515
    %v556 = vxor.u32 %v516, 2147483648
    %v557 = vmul.f32 %v556, 1.442695
    %v558 = vpow.pop %v557
    %v559 = vadd.f32 %v558, 1.0
    %v560 = vrcp.pop %v559
    %v561 = vmul.f32 %v559, %v560
    %v562 = vsub.f32 1.0, %v561
    %v563 = vmul.f32 %v560, %v562
    %v564 = vadd.f32 %v560, %v563
    %vm565 = vweird.f32 %v559
    %vm566 = vweird.f32 %v560
    %vm567 = vmor %vm565, %vm566
    %v568 = vsel %vm567, %v560, %v564
    %v569 = vand.u32 2147483647, %v559
    %vm570 = vcmp.eq.f32.partialorder %v569, 8.507059e+37
    %v571 = vand.u32 %v559, 2147483648
    %v572 = vor.u32 1.1754944e-38, %v571
    %v573 = vsel %vm570, %v572, %v568
    %v574 = vmul.f32 1.0, %v573
    %v575 = vmul.f32 %v554, 0.0
    %v576 = vmul.f32 %v535, %v555
    %v577 = vadd.f32 %v575, %v576
    %v578 = vtanh.pop %v577
    %v579 = vmul.f32 %v574, %v578
    %580 = vst [vmem:[#allocation3] sm:$0xff] %v579
    %s581 = smul.u32 1, 4
    %s582 = smul.addr %s581, 8
    %s583 = scalar_lea.vmem [#allocation2], %s582
    %v584 = vld [vmem:[%s583] sm:$0xff]
    %v585 = vld [vmem:[%s583 + $0x8] sm:$0xff]
    %v586 = vld [vmem:[%s583 + $0x10] sm:$0xff]
    %v587 = vld [vmem:[%s583 + $0x18] sm:$0xff]
    %v588 = vld [vmem:[#allocation9] sm:$0xff]
    %v589 = vld [vmem:[#allocation9 + $0x8] sm:$0xff]
    %v590 = vld [vmem:[#allocation9 + $0x10] sm:$0xff]
    %v591 = vld [vmem:[#allocation9 + $0x18] sm:$0xff]
    %v592 = vld [vmem:[#allocation9 + $0x20] sm:$0xff]
    %v593 = vld [vmem:[#allocation9 + $0x28] sm:$0xff]
    %v594 = vld [vmem:[#allocation9 + $0x30] sm:$0xff]
    %v595 = vld [vmem:[#allocation9 + $0x38] sm:$0xff]
    %v596 = vld [vmem:[#allocation9 + $0x40] sm:$0xff]
    %v597 = vld [vmem:[#allocation9 + $0x48] sm:$0xff]
    %v598 = vld [vmem:[#allocation9 + $0x50] sm:$0xff]
    %v599 = vld [vmem:[#allocation9 + $0x58] sm:$0xff]
    %v600 = vld [vmem:[#allocation9 + $0x60] sm:$0xff]
    %v601 = vld [vmem:[#allocation9 + $0x68] sm:$0xff]
    %v602 = vld [vmem:[#allocation9 + $0x70] sm:$0xff]
    %v603 = vld [vmem:[#allocation9 + $0x78] sm:$0xff]
    %v604 = vld [vmem:[#allocation9 + $0x80] sm:$0xff]
    %v605 = vld [vmem:[#allocation9 + $0x88] sm:$0xff]
    %v606 = vld [vmem:[#allocation9 + $0x90] sm:$0xff]
    %v607 = vld [vmem:[#allocation9 + $0x98] sm:$0xff]
    %v608 = vld [vmem:[#allocation9 + $0xa0] sm:$0xff]
    %v609 = vld [vmem:[#allocation9 + $0xa8] sm:$0xff]
    %v610 = vld [vmem:[#allocation9 + $0xb0] sm:$0xff]
    %v611 = vld [vmem:[#allocation9 + $0xb8] sm:$0xff]
    %v612 = vld [vmem:[#allocation9 + $0xc0] sm:$0xff]
    %v613 = vld [vmem:[#allocation9 + $0xc8] sm:$0xff]
    %v614 = vld [vmem:[#allocation9 + $0xd0] sm:$0xff]
    %v615 = vld [vmem:[#allocation9 + $0xd8] sm:$0xff]
    %v616 = vld [vmem:[#allocation9 + $0xe0] sm:$0xff]
    %v617 = vld [vmem:[#allocation9 + $0xe8] sm:$0xff]
    %v618 = vld [vmem:[#allocation9 + $0xf0] sm:$0xff]
    %v619 = vld [vmem:[#allocation9 + $0xf8] sm:$0xff]
    %v620 = vld [vmem:[#allocation9 + $0x100] sm:$0xff]
    %v621 = vld [vmem:[#allocation9 + $0x108] sm:$0xff]
    %v622 = vld [vmem:[#allocation9 + $0x110] sm:$0xff]
    %v623 = vld [vmem:[#allocation9 + $0x118] sm:$0xff]
    %v624 = vld [vmem:[#allocation9 + $0x120] sm:$0xff]
    %v625 = vld [vmem:[#allocation9 + $0x128] sm:$0xff]
    %v626 = vld [vmem:[#allocation9 + $0x130] sm:$0xff]
    %v627 = vld [vmem:[#allocation9 + $0x138] sm:$0xff]
    %v628 = vld [vmem:[#allocation9 + $0x140] sm:$0xff]
    %v629 = vld [vmem:[#allocation9 + $0x148] sm:$0xff]
    %v630 = vld [vmem:[#allocation9 + $0x150] sm:$0xff]
    %v631 = vld [vmem:[#allocation9 + $0x158] sm:$0xff]
    %v632 = vld [vmem:[#allocation9 + $0x160] sm:$0xff]
    %v633 = vld [vmem:[#allocation9 + $0x168] sm:$0xff]
    %v634 = vld [vmem:[#allocation9 + $0x170] sm:$0xff]
    %v635 = vld [vmem:[#allocation9 + $0x178] sm:$0xff]
    %v636 = vld [vmem:[#allocation9 + $0x180] sm:$0xff]
    %v637 = vld [vmem:[#allocation9 + $0x188] sm:$0xff]
    %v638 = vld [vmem:[#allocation9 + $0x190] sm:$0xff]
    %v639 = vld [vmem:[#allocation9 + $0x198] sm:$0xff]
    %v640 = vld [vmem:[#allocation9 + $0x1a0] sm:$0xff]
    %v641 = vld [vmem:[#allocation9 + $0x1a8] sm:$0xff]
    %v642 = vld [vmem:[#allocation9 + $0x1b0] sm:$0xff]
    %v643 = vld [vmem:[#allocation9 + $0x1b8] sm:$0xff]
    %v644 = vld [vmem:[#allocation9 + $0x1c0] sm:$0xff]
    %v645 = vld [vmem:[#allocation9 + $0x1c8] sm:$0xff]
    %v646 = vld [vmem:[#allocation9 + $0x1d0] sm:$0xff]
    %v647 = vld [vmem:[#allocation9 + $0x1d8] sm:$0xff]
    %v648 = vld [vmem:[#allocation9 + $0x1e0] sm:$0xff]
    %v649 = vld [vmem:[#allocation9 + $0x1e8] sm:$0xff]
    %v650 = vld [vmem:[#allocation9 + $0x1f0] sm:$0xff]
    %v651 = vld [vmem:[#allocation9 + $0x1f8] sm:$0xff]
    %652 = vmatpush.msra.mxu0 %v648
    %653 = vmatpush.msra.mxu0 %v644
    %654 = vmatpush.msra.mxu0 %v640
    %655 = vmatpush.msra.mxu0 %v636
    %656 = vmatpush.msra.mxu0 %v632
    %657 = vmatpush.msra.mxu0 %v628
    %658 = vmatpush.msra.mxu0 %v624
    %659 = vmatpush.msra.mxu0 %v620
    %660 = vmatpush.msra.mxu0 %v616
    %661 = vmatpush.msra.mxu0 %v612
    %662 = vmatpush.msra.mxu0 %v608
    %663 = vmatpush.msra.mxu0 %v604
    %664 = vmatpush.msra.mxu0 %v600
    %665 = vmatpush.msra.mxu0 %v596
    %666 = vmatpush.msra.mxu0 %v592
    %667 = vmatpush.msra.mxu0 %v588
    %668 = vmatmul.f32.gmra.mxu0 %v579
    %v669 = vpop.f32.mrf.mxu0
    %v670 = vadd.f32 0.0, %v669
    %671 = vdwg.mxu0
    %672 = vmatpush.msra.mxu0 %v649
    %673 = vmatpush.msra.mxu0 %v645
    %674 = vmatpush.msra.mxu0 %v641
    %675 = vmatpush.msra.mxu0 %v637
    %676 = vmatpush.msra.mxu0 %v633
    %677 = vmatpush.msra.mxu0 %v629
    %678 = vmatpush.msra.mxu0 %v625
    %679 = vmatpush.msra.mxu0 %v621
    %680 = vmatpush.msra.mxu0 %v617
    %681 = vmatpush.msra.mxu0 %v613
    %682 = vmatpush.msra.mxu0 %v609
    %683 = vmatpush.msra.mxu0 %v605
    %684 = vmatpush.msra.mxu0 %v601
    %685 = vmatpush.msra.mxu0 %v597
    %686 = vmatpush.msra.mxu0 %v593
    %687 = vmatpush.msra.mxu0 %v589
    %688 = vmatmul.f32.gmra.mxu0 %v579
    %v689 = vpop.f32.mrf.mxu0
    %v690 = vadd.f32 0.0, %v689
    %691 = vdwg.mxu0
    %692 = vmatpush.msra.mxu0 %v650
    %693 = vmatpush.msra.mxu0 %v646
    %694 = vmatpush.msra.mxu0 %v642
    %695 = vmatpush.msra.mxu0 %v638
    %696 = vmatpush.msra.mxu0 %v634
    %697 = vmatpush.msra.mxu0 %v630
    %698 = vmatpush.msra.mxu0 %v626
    %699 = vmatpush.msra.mxu0 %v622
    %700 = vmatpush.msra.mxu0 %v618
    %701 = vmatpush.msra.mxu0 %v614
    %702 = vmatpush.msra.mxu0 %v610
    %703 = vmatpush.msra.mxu0 %v606
    %704 = vmatpush.msra.mxu0 %v602
    %705 = vmatpush.msra.mxu0 %v598
    %706 = vmatpush.msra.mxu0 %v594
    %707 = vmatpush.msra.mxu0 %v590
    %708 = vmatmul.f32.gmra.mxu0 %v579
    %v709 = vpop.f32.mrf.mxu0
    %v710 = vadd.f32 0.0, %v709
    %711 = vdwg.mxu0
    %712 = vmatpush.msra.mxu0 %v651
    %713 = vmatpush.msra.mxu0 %v647
    %714 = vmatpush.msra.mxu0 %v643
    %715 = vmatpush.msra.mxu0 %v639
    %716 = vmatpush.msra.mxu0 %v635
    %717 = vmatpush.msra.mxu0 %v631
    %718 = vmatpush.msra.mxu0 %v627
    %719 = vmatpush.msra.mxu0 %v623
    %720 = vmatpush.msra.mxu0 %v619
    %721 = vmatpush.msra.mxu0 %v615
    %722 = vmatpush.msra.mxu0 %v611
    %723 = vmatpush.msra.mxu0 %v607
    %724 = vmatpush.msra.mxu0 %v603
    %725 = vmatpush.msra.mxu0 %v599
    %726 = vmatpush.msra.mxu0 %v595
    %727 = vmatpush.msra.mxu0 %v591
    %728 = vmatmul.f32.gmra.mxu0 %v579
    %v729 = vpop.f32.mrf.mxu0
    %v730 = vadd.f32 0.0, %v729
    %731 = vdwg.mxu0
    %v732 = vadd.f32 %v584, %v670
    %v733 = vadd.f32 %v585, %v690
    %v734 = vadd.f32 %v586, %v710
    %v735 = vadd.f32 %v587, %v730
    %v736 = vxor.u32 %v732, 2147483648
    %v737 = vmul.f32 %v736, 1.442695
    %v738 = vpow.pop %v737
    %v739 = vadd.f32 %v738, 1.0
    %v740 = vrcp.pop %v739
    %v741 = vmul.f32 %v739, %v740
    %v742 = vsub.f32 1.0, %v741
    %v743 = vmul.f32 %v740, %v742
    %v744 = vadd.f32 %v740, %v743
    %vm745 = vweird.f32 %v739
    %vm746 = vweird.f32 %v740
    %vm747 = vmor %vm745, %vm746
    %v748 = vsel %vm747, %v740, %v744
    %v749 = vand.u32 2147483647, %v739
    %vm750 = vcmp.eq.f32.partialorder %v749, 8.507059e+37
    %v751 = vand.u32 %v739, 2147483648
    %v752 = vor.u32 1.1754944e-38, %v751
    %v753 = vsel %vm750, %v752, %v748
    %v754 = vmul.f32 1.0, %v753
    %v755 = vxor.u32 %v733, 2147483648
    %v756 = vmul.f32 %v755, 1.442695
    %v757 = vpow.pop %v756
    %v758 = vadd.f32 %v757, 1.0
    %v759 = vrcp.pop %v758
    %v760 = vmul.f32 %v758, %v759
    %v761 = vsub.f32 1.0, %v760
    %v762 = vmul.f32 %v759, %v761
    %v763 = vadd.f32 %v759, %v762
    %vm764 = vweird.f32 %v758
    %vm765 = vweird.f32 %v759
    %vm766 = vmor %vm764, %vm765
    %v767 = vsel %vm766, %v759, %v763
    %v768 = vand.u32 2147483647, %v758
    %vm769 = vcmp.eq.f32.partialorder %v768, 8.507059e+37
    %v770 = vand.u32 %v758, 2147483648
    %v771 = vor.u32 1.1754944e-38, %v770
    %v772 = vsel %vm769, %v771, %v767
    %v773 = vmul.f32 1.0, %v772
    %v774 = vtanh.pop %v734
    %v775 = vxor.u32 %v735, 2147483648
    %v776 = vmul.f32 %v775, 1.442695
    %v777 = vpow.pop %v776
    %v778 = vadd.f32 %v777, 1.0
    %v779 = vrcp.pop %v778
    %v780 = vmul.f32 %v778, %v779
    %v781 = vsub.f32 1.0, %v780
    %v782 = vmul.f32 %v779, %v781
    %v783 = vadd.f32 %v779, %v782
    %vm784 = vweird.f32 %v778
    %vm785 = vweird.f32 %v779
    %vm786 = vmor %vm784, %vm785
    %v787 = vsel %vm786, %v779, %v783
    %v788 = vand.u32 2147483647, %v778
    %vm789 = vcmp.eq.f32.partialorder %v788, 8.507059e+37
    %v790 = vand.u32 %v778, 2147483648
    %v791 = vor.u32 1.1754944e-38, %v790
    %v792 = vsel %vm789, %v791, %v787
    %v793 = vmul.f32 1.0, %v792
    %v794 = vmul.f32 %v773, %v577
    %v795 = vmul.f32 %v754, %v774
    %v796 = vadd.f32 %v794, %v795
    %v797 = vtanh.pop %v796
    %v798 = vmul.f32 %v793, %v797
    %s799 = scalar_lea.vmem [#allocation3], 8
    %800 = vst [vmem:[%s799] sm:$0xff] %v798
    %s801 = smul.u32 2, 4
    %s802 = smul.addr %s801, 8
    %s803 = scalar_lea.vmem [#allocation2], %s802
    %v804 = vld [vmem:[%s803] sm:$0xff]
    %v805 = vld [vmem:[%s803 + $0x8] sm:$0xff]
    %v806 = vld [vmem:[%s803 + $0x10] sm:$0xff]
    %v807 = vld [vmem:[%s803 + $0x18] sm:$0xff]
    %v808 = vld [vmem:[#allocation9] sm:$0xff]
    %v809 = vld [vmem:[#allocation9 + $0x8] sm:$0xff]
    %v810 = vld [vmem:[#allocation9 + $0x10] sm:$0xff]
    %v811 = vld [vmem:[#allocation9 + $0x18] sm:$0xff]
    %v812 = vld [vmem:[#allocation9 + $0x20] sm:$0xff]
    %v813 = vld [vmem:[#allocation9 + $0x28] sm:$0xff]
    %v814 = vld [vmem:[#allocation9 + $0x30] sm:$0xff]
    %v815 = vld [vmem:[#allocation9 + $0x38] sm:$0xff]
    %v816 = vld [vmem:[#allocation9 + $0x40] sm:$0xff]
    %v817 = vld [vmem:[#allocation9 + $0x48] sm:$0xff]
    %v818 = vld [vmem:[#allocation9 + $0x50] sm:$0xff]
    %v819 = vld [vmem:[#allocation9 + $0x58] sm:$0xff]
    %v820 = vld [vmem:[#allocation9 + $0x60] sm:$0xff]
    %v821 = vld [vmem:[#allocation9 + $0x68] sm:$0xff]
    %v822 = vld [vmem:[#allocation9 + $0x70] sm:$0xff]
    %v823 = vld [vmem:[#allocation9 + $0x78] sm:$0xff]
    %v824 = vld [vmem:[#allocation9 + $0x80] sm:$0xff]
    %v825 = vld [vmem:[#allocation9 + $0x88] sm:$0xff]
    %v826 = vld [vmem:[#allocation9 + $0x90] sm:$0xff]
    %v827 = vld [vmem:[#allocation9 + $0x98] sm:$0xff]
    %v828 = vld [vmem:[#allocation9 + $0xa0] sm:$0xff]
    %v829 = vld [vmem:[#allocation9 + $0xa8] sm:$0xff]
    %v830 = vld [vmem:[#allocation9 + $0xb0] sm:$0xff]
    %v831 = vld [vmem:[#allocation9 + $0xb8] sm:$0xff]
    %v832 = vld [vmem:[#allocation9 + $0xc0] sm:$0xff]
    %v833 = vld [vmem:[#allocation9 + $0xc8] sm:$0xff]
    %v834 = vld [vmem:[#allocation9 + $0xd0] sm:$0xff]
    %v835 = vld [vmem:[#allocation9 + $0xd8] sm:$0xff]
    %v836 = vld [vmem:[#allocation9 + $0xe0] sm:$0xff]
    %v837 = vld [vmem:[#allocation9 + $0xe8] sm:$0xff]
    %v838 = vld [vmem:[#allocation9 + $0xf0] sm:$0xff]
    %v839 = vld [vmem:[#allocation9 + $0xf8] sm:$0xff]
    %v840 = vld [vmem:[#allocation9 + $0x100] sm:$0xff]
    %v841 = vld [vmem:[#allocation9 + $0x108] sm:$0xff]
    %v842 = vld [vmem:[#allocation9 + $0x110] sm:$0xff]
    %v843 = vld [vmem:[#allocation9 + $0x118] sm:$0xff]
    %v844 = vld [vmem:[#allocation9 + $0x120] sm:$0xff]
    %v845 = vld [vmem:[#allocation9 + $0x128] sm:$0xff]
    %v846 = vld [vmem:[#allocation9 + $0x130] sm:$0xff]
    %v847 = vld [vmem:[#allocation9 + $0x138] sm:$0xff]
    %v848 = vld [vmem:[#allocation9 + $0x140] sm:$0xff]
    %v849 = vld [vmem:[#allocation9 + $0x148] sm:$0xff]
    %v850 = vld [vmem:[#allocation9 + $0x150] sm:$0xff]
    %v851 = vld [vmem:[#allocation9 + $0x158] sm:$0xff]
    %v852 = vld [vmem:[#allocation9 + $0x160] sm:$0xff]
    %v853 = vld [vmem:[#allocation9 + $0x168] sm:$0xff]
    %v854 = vld [vmem:[#allocation9 + $0x170] sm:$0xff]
    %v855 = vld [vmem:[#allocation9 + $0x178] sm:$0xff]
    %v856 = vld [vmem:[#allocation9 + $0x180] sm:$0xff]
    %v857 = vld [vmem:[#allocation9 + $0x188] sm:$0xff]
    %v858 = vld [vmem:[#allocation9 + $0x190] sm:$0xff]
    %v859 = vld [vmem:[#allocation9 + $0x198] sm:$0xff]
    %v860 = vld [vmem:[#allocation9 + $0x1a0] sm:$0xff]
    %v861 = vld [vmem:[#allocation9 + $0x1a8] sm:$0xff]
    %v862 = vld [vmem:[#allocation9 + $0x1b0] sm:$0xff]
    %v863 = vld [vmem:[#allocation9 + $0x1b8] sm:$0xff]
    %v864 = vld [vmem:[#allocation9 + $0x1c0] sm:$0xff]
    %v865 = vld [vmem:[#allocation9 + $0x1c8] sm:$0xff]
    %v866 = vld [vmem:[#allocation9 + $0x1d0] sm:$0xff]
    %v867 = vld [vmem:[#allocation9 + $0x1d8] sm:$0xff]
    %v868 = vld [vmem:[#allocation9 + $0x1e0] sm:$0xff]
    %v869 = vld [vmem:[#allocation9 + $0x1e8] sm:$0xff]
    %v870 = vld [vmem:[#allocation9 + $0x1f0] sm:$0xff]
    %v871 = vld [vmem:[#allocation9 + $0x1f8] sm:$0xff]
    %872 = vmatpush.msra.mxu0 %v868
    %873 = vmatpush.msra.mxu0 %v864
    %874 = vmatpush.msra.mxu0 %v860
    %875 = vmatpush.msra.mxu0 %v856
    %876 = vmatpush.msra.mxu0 %v852
    %877 = vmatpush.msra.mxu0 %v848
    %878 = vmatpush.msra.mxu0 %v844
    %879 = vmatpush.msra.mxu0 %v840
    %880 = vmatpush.msra.mxu0 %v836
    %881 = vmatpush.msra.mxu0 %v832
    %882 = vmatpush.msra.mxu0 %v828
    %883 = vmatpush.msra.mxu0 %v824
    %884 = vmatpush.msra.mxu0 %v820
    %885 = vmatpush.msra.mxu0 %v816
    %886 = vmatpush.msra.mxu0 %v812
    %887 = vmatpush.msra.mxu0 %v808
    %888 = vmatmul.f32.gmra.mxu0 %v798
    %v889 = vpop.f32.mrf.mxu0
    %v890 = vadd.f32 0.0, %v889
    %891 = vdwg.mxu0
    %892 = vmatpush.msra.mxu0 %v869
    %893 = vmatpush.msra.mxu0 %v865
    %894 = vmatpush.msra.mxu0 %v861
    %895 = vmatpush.msra.mxu0 %v857
    %896 = vmatpush.msra.mxu0 %v853
    %897 = vmatpush.msra.mxu0 %v849
    %898 = vmatpush.msra.mxu0 %v845
    %899 = vmatpush.msra.mxu0 %v841
    %900 = vmatpush.msra.mxu0 %v837
    %901 = vmatpush.msra.mxu0 %v833
    %902 = vmatpush.msra.mxu0 %v829
    %903 = vmatpush.msra.mxu0 %v825
    %904 = vmatpush.msra.mxu0 %v821
    %905 = vmatpush.msra.mxu0 %v817
    %906 = vmatpush.msra.mxu0 %v813
    %907 = vmatpush.msra.mxu0 %v809
    %908 = vmatmul.f32.gmra.mxu0 %v798
    %v909 = vpop.f32.mrf.mxu0
    %v910 = vadd.f32 0.0, %v909
    %911 = vdwg.mxu0
    %912 = vmatpush.msra.mxu0 %v870
    %913 = vmatpush.msra.mxu0 %v866
    %914 = vmatpush.msra.mxu0 %v862
    %915 = vmatpush.msra.mxu0 %v858
    %916 = vmatpush.msra.mxu0 %v854
    %917 = vmatpush.msra.mxu0 %v850
    %918 = vmatpush.msra.mxu0 %v846
    %919 = vmatpush.msra.mxu0 %v842
    %920 = vmatpush.msra.mxu0 %v838
    %921 = vmatpush.msra.mxu0 %v834
    %922 = vmatpush.msra.mxu0 %v830
    %923 = vmatpush.msra.mxu0 %v826
    %924 = vmatpush.msra.mxu0 %v822
    %925 = vmatpush.msra.mxu0 %v818
    %926 = vmatpush.msra.mxu0 %v814
    %927 = vmatpush.msra.mxu0 %v810
    %928 = vmatmul.f32.gmra.mxu0 %v798
    %v929 = vpop.f32.mrf.mxu0
    %v930 = vadd.f32 0.0, %v929
    %931 = vdwg.mxu0
    %932 = vmatpush.msra.mxu0 %v871
    %933 = vmatpush.msra.mxu0 %v867
    %934 = vmatpush.msra.mxu0 %v863
    %935 = vmatpush.msra.mxu0 %v859
    %936 = vmatpush.msra.mxu0 %v855
    %937 = vmatpush.msra.mxu0 %v851
    %938 = vmatpush.msra.mxu0 %v847
    %939 = vmatpush.msra.mxu0 %v843
    %940 = vmatpush.msra.mxu0 %v839
    %941 = vmatpush.msra.mxu0 %v835
    %942 = vmatpush.msra.mxu0 %v831
    %943 = vmatpush.msra.mxu0 %v827
    %944 = vmatpush.msra.mxu0 %v823
    %945 = vmatpush.msra.mxu0 %v819
    %946 = vmatpush.msra.mxu0 %v815
    %947 = vmatpush.msra.mxu0 %v811
    %948 = vmatmul.f32.gmra.mxu0 %v798
    %v949 = vpop.f32.mrf.mxu0
    %v950 = vadd.f32 0.0, %v949
    %951 = vdwg.mxu0
    %v952 = vadd.f32 %v804, %v890
    %v953 = vadd.f32 %v805, %v910
    %v954 = vadd.f32 %v806, %v930
    %v955 = vadd.f32 %v807, %v950
    %v956 = vxor.u32 %v952, 2147483648
    %v957 = vmul.f32 %v956, 1.442695
    %v958 = vpow.pop %v957
    %v959 = vadd.f32 %v958, 1.0
    %v960 = vrcp.pop %v959
    %v961 = vmul.f32 %v959, %v960
    %v962 = vsub.f32 1.0, %v961
    %v963 = vmul.f32 %v960, %v962
    %v964 = vadd.f32 %v960, %v963
    %vm965 = vweird.f32 %v959
    %vm966 = vweird.f32 %v960
    %vm967 = vmor %vm965, %vm966
    %v968 = vsel %vm967, %v960, %v964
    %v969 = vand.u32 2147483647, %v959
    %vm970 = vcmp.eq.f32.partialorder %v969, 8.507059e+37
    %v971 = vand.u32 %v959, 2147483648
    %v972 = vor.u32 1.1754944e-38, %v971
    %v973 = vsel %vm970, %v972, %v968
    %v974 = vmul.f32 1.0, %v973
    %v975 = vxor.u32 %v953, 2147483648
    %v976 = vmul.f32 %v975, 1.442695
    %v977 = vpow.pop %v976
    %v978 = vadd.f32 %v977, 1.0
    %v979 = vrcp.pop %v978
    %v980 = vmul.f32 %v978, %v979
    %v981 = vsub.f32 1.0, %v980
    %v982 = vmul.f32 %v979, %v981
    %v983 = vadd.f32 %v979, %v982
    %vm984 = vweird.f32 %v978
    %vm985 = vweird.f32 %v979
    %vm986 = vmor %vm984, %vm985
    %v987 = vsel %vm986, %v979, %v983
    %v988 = vand.u32 2147483647, %v978
    %vm989 = vcmp.eq.f32.partialorder %v988, 8.507059e+37
    %v990 = vand.u32 %v978, 2147483648
    %v991 = vor.u32 1.1754944e-38, %v990
    %v992 = vsel %vm989, %v991, %v987
    %v993 = vmul.f32 1.0, %v992
    %v994 = vtanh.pop %v954
    %v995 = vxor.u32 %v955, 2147483648
    %v996 = vmul.f32 %v995, 1.442695
    %v997 = vpow.pop %v996
    %v998 = vadd.f32 %v997, 1.0
    %v999 = vrcp.pop %v998
    %v1000 = vmul.f32 %v998, %v999
    %v1001 = vsub.f32 1.0, %v1000
    %v1002 = vmul.f32 %v999, %v1001
    %v1003 = vadd.f32 %v999, %v1002
    %vm1004 = vweird.f32 %v998
    %vm1005 = vweird.f32 %v999
    %vm1006 = vmor %vm1004, %vm1005
    %v1007 = vsel %vm1006, %v999, %v1003
    %v1008 = vand.u32 2147483647, %v998
    %vm1009 = vcmp.eq.f32.partialorder %v1008, 8.507059e+37
    %v1010 = vand.u32 %v998, 2147483648
    %v1011 = vor.u32 1.1754944e-38, %v1010
    %v1012 = vsel %vm1009, %v1011, %v1007
    %v1013 = vmul.f32 1.0, %v1012
    %v1014 = vmul.f32 %v993, %v796
    %v1015 = vmul.f32 %v974, %v994
    %v1016 = vadd.f32 %v1014, %v1015
    %v1017 = vtanh.pop %v1016
    %v1018 = vmul.f32 %v1013, %v1017
    %s1019 = scalar_lea.vmem [#allocation3], 16
    %1020 = vst [vmem:[%s1019] sm:$0xff] %v1018
    %s1021 = smul.u32 3, 4
    %s1022 = smul.addr %s1021, 8
    %s1023 = scalar_lea.vmem [#allocation2], %s1022
    %v1024 = vld [vmem:[%s1023] sm:$0xff]
    %v1025 = vld [vmem:[%s1023 + $0x8] sm:$0xff]
    %v1026 = vld [vmem:[%s1023 + $0x10] sm:$0xff]
    %v1027 = vld [vmem:[%s1023 + $0x18] sm:$0xff]
    %v1028 = vld [vmem:[#allocation9] sm:$0xff]
    %v1029 = vld [vmem:[#allocation9 + $0x8] sm:$0xff]
    %v1030 = vld [vmem:[#allocation9 + $0x10] sm:$0xff]
    %v1031 = vld [vmem:[#allocation9 + $0x18] sm:$0xff]
    %v1032 = vld [vmem:[#allocation9 + $0x20] sm:$0xff]
    %v1033 = vld [vmem:[#allocation9 + $0x28] sm:$0xff]
    %v1034 = vld [vmem:[#allocation9 + $0x30] sm:$0xff]
    %v1035 = vld [vmem:[#allocation9 + $0x38] sm:$0xff]
    %v1036 = vld [vmem:[#allocation9 + $0x40] sm:$0xff]
    %v1037 = vld [vmem:[#allocation9 + $0x48] sm:$0xff]
    %v1038 = vld [vmem:[#allocation9 + $0x50] sm:$0xff]
    %v1039 = vld [vmem:[#allocation9 + $0x58] sm:$0xff]
    %v1040 = vld [vmem:[#allocation9 + $0x60] sm:$0xff]
    %v1041 = vld [vmem:[#allocation9 + $0x68] sm:$0xff]
    %v1042 = vld [vmem:[#allocation9 + $0x70] sm:$0xff]
    %v1043 = vld [vmem:[#allocation9 + $0x78] sm:$0xff]
    %v1044 = vld [vmem:[#allocation9 + $0x80] sm:$0xff]
    %v1045 = vld [vmem:[#allocation9 + $0x88] sm:$0xff]
    %v1046 = vld [vmem:[#allocation9 + $0x90] sm:$0xff]
    %v1047 = vld [vmem:[#allocation9 + $0x98] sm:$0xff]
    %v1048 = vld [vmem:[#allocation9 + $0xa0] sm:$0xff]
    %v1049 = vld [vmem:[#allocation9 + $0xa8] sm:$0xff]
    %v1050 = vld [vmem:[#allocation9 + $0xb0] sm:$0xff]
    %v1051 = vld [vmem:[#allocation9 + $0xb8] sm:$0xff]
    %v1052 = vld [vmem:[#allocation9 + $0xc0] sm:$0xff]
    %v1053 = vld [vmem:[#allocation9 + $0xc8] sm:$0xff]
    %v1054 = vld [vmem:[#allocation9 + $0xd0] sm:$0xff]
    %v1055 = vld [vmem:[#allocation9 + $0xd8] sm:$0xff]
    %v1056 = vld [vmem:[#allocation9 + $0xe0] sm:$0xff]
    %v1057 = vld [vmem:[#allocation9 + $0xe8] sm:$0xff]
    %v1058 = vld [vmem:[#allocation9 + $0xf0] sm:$0xff]
    %v1059 = vld [vmem:[#allocation9 + $0xf8] sm:$0xff]
    %v1060 = vld [vmem:[#allocation9 + $0x100] sm:$0xff]
    %v1061 = vld [vmem:[#allocation9 + $0x108] sm:$0xff]
    %v1062 = vld [vmem:[#allocation9 + $0x110] sm:$0xff]
    %v1063 = vld [vmem:[#allocation9 + $0x118] sm:$0xff]
    %v1064 = vld [vmem:[#allocation9 + $0x120] sm:$0xff]
    %v1065 = vld [vmem:[#allocation9 + $0x128] sm:$0xff]
    %v1066 = vld [vmem:[#allocation9 + $0x130] sm:$0xff]
    %v1067 = vld [vmem:[#allocation9 + $0x138] sm:$0xff]
    %v1068 = vld [vmem:[#allocation9 + $0x140] sm:$0xff]
    %v1069 = vld [vmem:[#allocation9 + $0x148] sm:$0xff]
    %v1070 = vld [vmem:[#allocation9 + $0x150] sm:$0xff]
    %v1071 = vld [vmem:[#allocation9 + $0x158] sm:$0xff]
    %v1072 = vld [vmem:[#allocation9 + $0x160] sm:$0xff]
    %v1073 = vld [vmem:[#allocation9 + $0x168] sm:$0xff]
    %v1074 = vld [vmem:[#allocation9 + $0x170] sm:$0xff]
    %v1075 = vld [vmem:[#allocation9 + $0x178] sm:$0xff]
    %v1076 = vld [vmem:[#allocation9 + $0x180] sm:$0xff]
    %v1077 = vld [vmem:[#allocation9 + $0x188] sm:$0xff]
    %v1078 = vld [vmem:[#allocation9 + $0x190] sm:$0xff]
    %v1079 = vld [vmem:[#allocation9 + $0x198] sm:$0xff]
    %v1080 = vld [vmem:[#allocation9 + $0x1a0] sm:$0xff]
    %v1081 = vld [vmem:[#allocation9 + $0x1a8] sm:$0xff]
    %v1082 = vld [vmem:[#allocation9 + $0x1b0] sm:$0xff]
    %v1083 = vld [vmem:[#allocation9 + $0x1b8] sm:$0xff]
    %v1084 = vld [vmem:[#allocation9 + $0x1c0] sm:$0xff]
    %v1085 = vld [vmem:[#allocation9 + $0x1c8] sm:$0xff]
    %v1086 = vld [vmem:[#allocation9 + $0x1d0] sm:$0xff]
    %v1087 = vld [vmem:[#allocation9 + $0x1d8] sm:$0xff]
    %v1088 = vld [vmem:[#allocation9 + $0x1e0] sm:$0xff]
    %v1089 = vld [vmem:[#allocation9 + $0x1e8] sm:$0xff]
    %v1090 = vld [vmem:[#allocation9 + $0x1f0] sm:$0xff]
    %v1091 = vld [vmem:[#allocation9 + $0x1f8] sm:$0xff]
    %1092 = vmatpush.msra.mxu0 %v1088
    %1093 = vmatpush.msra.mxu0 %v1084
    %1094 = vmatpush.msra.mxu0 %v1080
    %1095 = vmatpush.msra.mxu0 %v1076
    %1096 = vmatpush.msra.mxu0 %v1072
    %1097 = vmatpush.msra.mxu0 %v1068
    %1098 = vmatpush.msra.mxu0 %v1064
    %1099 = vmatpush.msra.mxu0 %v1060
    %1100 = vmatpush.msra.mxu0 %v1056
    %1101 = vmatpush.msra.mxu0 %v1052
    %1102 = vmatpush.msra.mxu0 %v1048
    %1103 = vmatpush.msra.mxu0 %v1044
    %1104 = vmatpush.msra.mxu0 %v1040
    %1105 = vmatpush.msra.mxu0 %v1036
    %1106 = vmatpush.msra.mxu0 %v1032
    %1107 = vmatpush.msra.mxu0 %v1028
    %1108 = vmatmul.f32.gmra.mxu0 %v1018
    %v1109 = vpop.f32.mrf.mxu0
    %v1110 = vadd.f32 0.0, %v1109
    %1111 = vdwg.mxu0
    %1112 = vmatpush.msra.mxu0 %v1089
    %1113 = vmatpush.msra.mxu0 %v1085
    %1114 = vmatpush.msra.mxu0 %v1081
    %1115 = vmatpush.msra.mxu0 %v1077
    %1116 = vmatpush.msra.mxu0 %v1073
    %1117 = vmatpush.msra.mxu0 %v1069
    %1118 = vmatpush.msra.mxu0 %v1065
    %1119 = vmatpush.msra.mxu0 %v1061
    %1120 = vmatpush.msra.mxu0 %v1057
    %1121 = vmatpush.msra.mxu0 %v1053
    %1122 = vmatpush.msra.mxu0 %v1049
    %1123 = vmatpush.msra.mxu0 %v1045
    %1124 = vmatpush.msra.mxu0 %v1041
    %1125 = vmatpush.msra.mxu0 %v1037
    %1126 = vmatpush.msra.mxu0 %v1033
    %1127 = vmatpush.msra.mxu0 %v1029
    %1128 = vmatmul.f32.gmra.mxu0 %v1018
    %v1129 = vpop.f32.mrf.mxu0
    %v1130 = vadd.f32 0.0, %v1129
    %1131 = vdwg.mxu0
    %1132 = vmatpush.msra.mxu0 %v1090
    %1133 = vmatpush.msra.mxu0 %v1086
    %1134 = vmatpush.msra.mxu0 %v1082
    %1135 = vmatpush.msra.mxu0 %v1078
    %1136 = vmatpush.msra.mxu0 %v1074
    %1137 = vmatpush.msra.mxu0 %v1070
    %1138 = vmatpush.msra.mxu0 %v1066
    %1139 = vmatpush.msra.mxu0 %v1062
    %1140 = vmatpush.msra.mxu0 %v1058
    %1141 = vmatpush.msra.mxu0 %v1054
    %1142 = vmatpush.msra.mxu0 %v1050
    %1143 = vmatpush.msra.mxu0 %v1046
    %1144 = vmatpush.msra.mxu0 %v1042
    %1145 = vmatpush.msra.mxu0 %v1038
    %1146 = vmatpush.msra.mxu0 %v1034
    %1147 = vmatpush.msra.mxu0 %v1030
    %1148 = vmatmul.f32.gmra.mxu0 %v1018
    %v1149 = vpop.f32.mrf.mxu0
    %v1150 = vadd.f32 0.0, %v1149
    %1151 = vdwg.mxu0
    %1152 = vmatpush.msra.mxu0 %v1091
    %1153 = vmatpush.msra.mxu0 %v1087
    %1154 = vmatpush.msra.mxu0 %v1083
    %1155 = vmatpush.msra.mxu0 %v1079
    %1156 = vmatpush.msra.mxu0 %v1075
    %1157 = vmatpush.msra.mxu0 %v1071
    %1158 = vmatpush.msra.mxu0 %v1067
    %1159 = vmatpush.msra.mxu0 %v1063
    %1160 = vmatpush.msra.mxu0 %v1059
    %1161 = vmatpush.msra.mxu0 %v1055
    %1162 = vmatpush.msra.mxu0 %v1051
    %1163 = vmatpush.msra.mxu0 %v1047
    %1164 = vmatpush.msra.mxu0 %v1043
    %1165 = vmatpush.msra.mxu0 %v1039
    %1166 = vmatpush.msra.mxu0 %v1035
    %1167 = vmatpush.msra.mxu0 %v1031
    %1168 = vmatmul.f32.gmra.mxu0 %v1018
    %v1169 = vpop.f32.mrf.mxu0
    %v1170 = vadd.f32 0.0, %v1169
    %1171 = vdwg.mxu0
    %v1172 = vadd.f32 %v1024, %v1110
    %v1173 = vadd.f32 %v1025, %v1130
    %v1174 = vadd.f32 %v1026, %v1150
    %v1175 = vadd.f32 %v1027, %v1170
    %v1176 = vxor.u32 %v1172, 2147483648
    %v1177 = vmul.f32 %v1176, 1.442695
    %v1178 = vpow.pop %v1177
    %v1179 = vadd.f32 %v1178, 1.0
    %v1180 = vrcp.pop %v1179
    %v1181 = vmul.f32 %v1179, %v1180
    %v1182 = vsub.f32 1.0, %v1181
    %v1183 = vmul.f32 %v1180, %v1182
    %v1184 = vadd.f32 %v1180, %v1183
    %vm1185 = vweird.f32 %v1179
    %vm1186 = vweird.f32 %v1180
    %vm1187 = vmor %vm1185, %vm1186
    %v1188 = vsel %vm1187, %v1180, %v1184
    %v1189 = vand.u32 2147483647, %v1179
    %vm1190 = vcmp.eq.f32.partialorder %v1189, 8.507059e+37
    %v1191 = vand.u32 %v1179, 2147483648
    %v1192 = vor.u32 1.1754944e-38, %v1191
    %v1193 = vsel %vm1190, %v1192, %v1188
    %v1194 = vmul.f32 1.0, %v1193
    %v1195 = vxor.u32 %v1173, 2147483648
    %v1196 = vmul.f32 %v1195, 1.442695
    %v1197 = vpow.pop %v1196
    %v1198 = vadd.f32 %v1197, 1.0
    %v1199 = vrcp.pop %v1198
    %v1200 = vmul.f32 %v1198, %v1199
    %v1201 = vsub.f32 1.0, %v1200
    %v1202 = vmul.f32 %v1199, %v1201
    %v1203 = vadd.f32 %v1199, %v1202
    %vm1204 = vweird.f32 %v1198
    %vm1205 = vweird.f32 %v1199
    %vm1206 = vmor %vm1204, %vm1205
    %v1207 = vsel %vm1206, %v1199, %v1203
    %v1208 = vand.u32 2147483647, %v1198
    %vm1209 = vcmp.eq.f32.partialorder %v1208, 8.507059e+37
    %v1210 = vand.u32 %v1198, 2147483648
    %v1211 = vor.u32 1.1754944e-38, %v1210
    %v1212 = vsel %vm1209, %v1211, %v1207
    %v1213 = vmul.f32 1.0, %v1212
    %v1214 = vtanh.pop %v1174
    %v1215 = vxor.u32 %v1175, 2147483648
    %v1216 = vmul.f32 %v1215, 1.442695
    %v1217 = vpow.pop %v1216
    %v1218 = vadd.f32 %v1217, 1.0
    %v1219 = vrcp.pop %v1218
    %v1220 = vmul.f32 %v1218, %v1219
    %v1221 = vsub.f32 1.0, %v1220
    %v1222 = vmul.f32 %v1219, %v1221
    %v1223 = vadd.f32 %v1219, %v1222
    %vm1224 = vweird.f32 %v1218
    %vm1225 = vweird.f32 %v1219
    %vm1226 = vmor %vm1224, %vm1225
    %v1227 = vsel %vm1226, %v1219, %v1223
    %v1228 = vand.u32 2147483647, %v1218
    %vm1229 = vcmp.eq.f32.partialorder %v1228, 8.507059e+37
    %v1230 = vand.u32 %v1218, 2147483648
    %v1231 = vor.u32 1.1754944e-38, %v1230
    %v1232 = vsel %vm1229, %v1231, %v1227
    %v1233 = vmul.f32 1.0, %v1232
    %v1234 = vmul.f32 %v1213, %v1016
    %v1235 = vmul.f32 %v1194, %v1214
    %v1236 = vadd.f32 %v1234, %v1235
    %v1237 = vtanh.pop %v1236
    %v1238 = vmul.f32 %v1233, %v1237
    %s1239 = scalar_lea.vmem [#allocation3], 24
    %1240 = vst [vmem:[%s1239] sm:$0xff] %v1238
    %s1241 = smul.u32 4, 4
    %s1242 = smul.addr %s1241, 8
    %s1243 = scalar_lea.vmem [#allocation2], %s1242
    %v1244 = vld [vmem:[%s1243] sm:$0xff]
    %v1245 = vld [vmem:[%s1243 + $0x8] sm:$0xff]
    %v1246 = vld [vmem:[%s1243 + $0x10] sm:$0xff]
    %v1247 = vld [vmem:[%s1243 + $0x18] sm:$0xff]
    %v1248 = vld [vmem:[#allocation9] sm:$0xff]
    %v1249 = vld [vmem:[#allocation9 + $0x8] sm:$0xff]
    %v1250 = vld [vmem:[#allocation9 + $0x10] sm:$0xff]
    %v1251 = vld [vmem:[#allocation9 + $0x18] sm:$0xff]
    %v1252 = vld [vmem:[#allocation9 + $0x20] sm:$0xff]
    %v1253 = vld [vmem:[#allocation9 + $0x28] sm:$0xff]
    %v1254 = vld [vmem:[#allocation9 + $0x30] sm:$0xff]
    %v1255 = vld [vmem:[#allocation9 + $0x38] sm:$0xff]
    %v1256 = vld [vmem:[#allocation9 + $0x40] sm:$0xff]
    %v1257 = vld [vmem:[#allocation9 + $0x48] sm:$0xff]
    %v1258 = vld [vmem:[#allocation9 + $0x50] sm:$0xff]
    %v1259 = vld [vmem:[#allocation9 + $0x58] sm:$0xff]
    %v1260 = vld [vmem:[#allocation9 + $0x60] sm:$0xff]
    %v1261 = vld [vmem:[#allocation9 + $0x68] sm:$0xff]
    %v1262 = vld [vmem:[#allocation9 + $0x70] sm:$0xff]
    %v1263 = vld [vmem:[#allocation9 + $0x78] sm:$0xff]
    %v1264 = vld [vmem:[#allocation9 + $0x80] sm:$0xff]
    %v1265 = vld [vmem:[#allocation9 + $0x88] sm:$0xff]
    %v1266 = vld [vmem:[#allocation9 + $0x90] sm:$0xff]
    %v1267 = vld [vmem:[#allocation9 + $0x98] sm:$0xff]
    %v1268 = vld [vmem:[#allocation9 + $0xa0] sm:$0xff]
    %v1269 = vld [vmem:[#allocation9 + $0xa8] sm:$0xff]
    %v1270 = vld [vmem:[#allocation9 + $0xb0] sm:$0xff]
    %v1271 = vld [vmem:[#allocation9 + $0xb8] sm:$0xff]
    %v1272 = vld [vmem:[#allocation9 + $0xc0] sm:$0xff]
    %v1273 = vld [vmem:[#allocation9 + $0xc8] sm:$0xff]
    %v1274 = vld [vmem:[#allocation9 + $0xd0] sm:$0xff]
    %v1275 = vld [vmem:[#allocation9 + $0xd8] sm:$0xff]
    %v1276 = vld [vmem:[#allocation9 + $0xe0] sm:$0xff]
    %v1277 = vld [vmem:[#allocation9 + $0xe8] sm:$0xff]
    %v1278 = vld [vmem:[#allocation9 + $0xf0] sm:$0xff]
    %v1279 = vld [vmem:[#allocation9 + $0xf8] sm:$0xff]
    %v1280 = vld [vmem:[#allocation9 + $0x100] sm:$0xff]
    %v1281 = vld [vmem:[#allocation9 + $0x108] sm:$0xff]
    %v1282 = vld [vmem:[#allocation9 + $0x110] sm:$0xff]
    %v1283 = vld [vmem:[#allocation9 + $0x118] sm:$0xff]
    %v1284 = vld [vmem:[#allocation9 + $0x120] sm:$0xff]
    %v1285 = vld [vmem:[#allocation9 + $0x128] sm:$0xff]
    %v1286 = vld [vmem:[#allocation9 + $0x130] sm:$0xff]
    %v1287 = vld [vmem:[#allocation9 + $0x138] sm:$0xff]
    %v1288 = vld [vmem:[#allocation9 + $0x140] sm:$0xff]
    %v1289 = vld [vmem:[#allocation9 + $0x148] sm:$0xff]
    %v1290 = vld [vmem:[#allocation9 + $0x150] sm:$0xff]
    %v1291 = vld [vmem:[#allocation9 + $0x158] sm:$0xff]
    %v1292 = vld [vmem:[#allocation9 + $0x160] sm:$0xff]
    %v1293 = vld [vmem:[#allocation9 + $0x168] sm:$0xff]
    %v1294 = vld [vmem:[#allocation9 + $0x170] sm:$0xff]
    %v1295 = vld [vmem:[#allocation9 + $0x178] sm:$0xff]
    %v1296 = vld [vmem:[#allocation9 + $0x180] sm:$0xff]
    %v1297 = vld [vmem:[#allocation9 + $0x188] sm:$0xff]
    %v1298 = vld [vmem:[#allocation9 + $0x190] sm:$0xff]
    %v1299 = vld [vmem:[#allocation9 + $0x198] sm:$0xff]
    %v1300 = vld [vmem:[#allocation9 + $0x1a0] sm:$0xff]
    %v1301 = vld [vmem:[#allocation9 + $0x1a8] sm:$0xff]
    %v1302 = vld [vmem:[#allocation9 + $0x1b0] sm:$0xff]
    %v1303 = vld [vmem:[#allocation9 + $0x1b8] sm:$0xff]
    %v1304 = vld [vmem:[#allocation9 + $0x1c0] sm:$0xff]
    %v1305 = vld [vmem:[#allocation9 + $0x1c8] sm:$0xff]
    %v1306 = vld [vmem:[#allocation9 + $0x1d0] sm:$0xff]
    %v1307 = vld [vmem:[#allocation9 + $0x1d8] sm:$0xff]
    %v1308 = vld [vmem:[#allocation9 + $0x1e0] sm:$0xff]
    %v1309 = vld [vmem:[#allocation9 + $0x1e8] sm:$0xff]
    %v1310 = vld [vmem:[#allocation9 + $0x1f0] sm:$0xff]
    %v1311 = vld [vmem:[#allocation9 + $0x1f8] sm:$0xff]
    %1312 = vmatpush.msra.mxu0 %v1308
    %1313 = vmatpush.msra.mxu0 %v1304
    %1314 = vmatpush.msra.mxu0 %v1300
    %1315 = vmatpush.msra.mxu0 %v1296
    %1316 = vmatpush.msra.mxu0 %v1292
    %1317 = vmatpush.msra.mxu0 %v1288
    %1318 = vmatpush.msra.mxu0 %v1284
    %1319 = vmatpush.msra.mxu0 %v1280
    %1320 = vmatpush.msra.mxu0 %v1276
    %1321 = vmatpush.msra.mxu0 %v1272
    %1322 = vmatpush.msra.mxu0 %v1268
    %1323 = vmatpush.msra.mxu0 %v1264
    %1324 = vmatpush.msra.mxu0 %v1260
    %1325 = vmatpush.msra.mxu0 %v1256
    %1326 = vmatpush.msra.mxu0 %v1252
    %1327 = vmatpush.msra.mxu0 %v1248
    %1328 = vmatmul.f32.gmra.mxu0 %v1238
    %v1329 = vpop.f32.mrf.mxu0
    %v1330 = vadd.f32 0.0, %v1329
    %1331 = vdwg.mxu0
    %1332 = vmatpush.msra.mxu0 %v1309
    %1333 = vmatpush.msra.mxu0 %v1305
    %1334 = vmatpush.msra.mxu0 %v1301
    %1335 = vmatpush.msra.mxu0 %v1297
    %1336 = vmatpush.msra.mxu0 %v1293
    %1337 = vmatpush.msra.mxu0 %v1289
    %1338 = vmatpush.msra.mxu0 %v1285
    %1339 = vmatpush.msra.mxu0 %v1281
    %1340 = vmatpush.msra.mxu0 %v1277
    %1341 = vmatpush.msra.mxu0 %v1273
    %1342 = vmatpush.msra.mxu0 %v1269
    %1343 = vmatpush.msra.mxu0 %v1265
    %1344 = vmatpush.msra.mxu0 %v1261
    %1345 = vmatpush.msra.mxu0 %v1257
    %1346 = vmatpush.msra.mxu0 %v1253
    %1347 = vmatpush.msra.mxu0 %v1249
    %1348 = vmatmul.f32.gmra.mxu0 %v1238
    %v1349 = vpop.f32.mrf.mxu0
    %v1350 = vadd.f32 0.0, %v1349
    %1351 = vdwg.mxu0
    %1352 = vmatpush.msra.mxu0 %v1310
    %1353 = vmatpush.msra.mxu0 %v1306
    %1354 = vmatpush.msra.mxu0 %v1302
    %1355 = vmatpush.msra.mxu0 %v1298
    %1356 = vmatpush.msra.mxu0 %v1294
    %1357 = vmatpush.msra.mxu0 %v1290
    %1358 = vmatpush.msra.mxu0 %v1286
    %1359 = vmatpush.msra.mxu0 %v1282
    %1360 = vmatpush.msra.mxu0 %v1278
    %1361 = vmatpush.msra.mxu0 %v1274
    %1362 = vmatpush.msra.mxu0 %v1270
    %1363 = vmatpush.msra.mxu0 %v1266
    %1364 = vmatpush.msra.mxu0 %v1262
    %1365 = vmatpush.msra.mxu0 %v1258
    %1366 = vmatpush.msra.mxu0 %v1254
    %1367 = vmatpush.msra.mxu0 %v1250
    %1368 = vmatmul.f32.gmra.mxu0 %v1238
    %v1369 = vpop.f32.mrf.mxu0
    %v1370 = vadd.f32 0.0, %v1369
    %1371 = vdwg.mxu0
    %1372 = vmatpush.msra.mxu0 %v1311
    %1373 = vmatpush.msra.mxu0 %v1307
    %1374 = vmatpush.msra.mxu0 %v1303
    %1375 = vmatpush.msra.mxu0 %v1299
    %1376 = vmatpush.msra.mxu0 %v1295
    %1377 = vmatpush.msra.mxu0 %v1291
    %1378 = vmatpush.msra.mxu0 %v1287
    %1379 = vmatpush.msra.mxu0 %v1283
    %1380 = vmatpush.msra.mxu0 %v1279
    %1381 = vmatpush.msra.mxu0 %v1275
    %1382 = vmatpush.msra.mxu0 %v1271
    %1383 = vmatpush.msra.mxu0 %v1267
    %1384 = vmatpush.msra.mxu0 %v1263
    %1385 = vmatpush.msra.mxu0 %v1259
    %1386 = vmatpush.msra.mxu0 %v1255
    %1387 = vmatpush.msra.mxu0 %v1251
    %1388 = vmatmul.f32.gmra.mxu0 %v1238
    %v1389 = vpop.f32.mrf.mxu0
    %v1390 = vadd.f32 0.0, %v1389
    %1391 = vdwg.mxu0
    %v1392 = vadd.f32 %v1244, %v1330
    %v1393 = vadd.f32 %v1245, %v1350
    %v1394 = vadd.f32 %v1246, %v1370
    %v1395 = vadd.f32 %v1247, %v1390
    %v1396 = vxor.u32 %v1392, 2147483648
    %v1397 = vmul.f32 %v1396, 1.442695
    %v1398 = vpow.pop %v1397
    %v1399 = vadd.f32 %v1398, 1.0
    %v1400 = vrcp.pop %v1399
    %v1401 = vmul.f32 %v1399, %v1400
    %v1402 = vsub.f32 1.0, %v1401
    %v1403 = vmul.f32 %v1400, %v1402
    %v1404 = vadd.f32 %v1400, %v1403
    %vm1405 = vweird.f32 %v1399
    %vm1406 = vweird.f32 %v1400
    %vm1407 = vmor %vm1405, %vm1406
    %v1408 = vsel %vm1407, %v1400, %v1404
    %v1409 = vand.u32 2147483647, %v1399
    %vm1410 = vcmp.eq.f32.partialorder %v1409, 8.507059e+37
    %v1411 = vand.u32 %v1399, 2147483648
    %v1412 = vor.u32 1.1754944e-38, %v1411
    %v1413 = vsel %vm1410, %v1412, %v1408
    %v1414 = vmul.f32 1.0, %v1413
    %v1415 = vxor.u32 %v1393, 2147483648
    %v1416 = vmul.f32 %v1415, 1.442695
    %v1417 = vpow.pop %v1416
    %v1418 = vadd.f32 %v1417, 1.0
    %v1419 = vrcp.pop %v1418
    %v1420 = vmul.f32 %v1418, %v1419
    %v1421 = vsub.f32 1.0, %v1420
    %v1422 = vmul.f32 %v1419, %v1421
    %v1423 = vadd.f32 %v1419, %v1422
    %vm1424 = vweird.f32 %v1418
    %vm1425 = vweird.f32 %v1419
    %vm1426 = vmor %vm1424, %vm1425
    %v1427 = vsel %vm1426, %v1419, %v1423
    %v1428 = vand.u32 2147483647, %v1418
    %vm1429 = vcmp.eq.f32.partialorder %v1428, 8.507059e+37
    %v1430 = vand.u32 %v1418, 2147483648
    %v1431 = vor.u32 1.1754944e-38, %v1430
    %v1432 = vsel %vm1429, %v1431, %v1427
    %v1433 = vmul.f32 1.0, %v1432
    %v1434 = vtanh.pop %v1394
    %v1435 = vxor.u32 %v1395, 2147483648
    %v1436 = vmul.f32 %v1435, 1.442695
    %v1437 = vpow.pop %v1436
    %v1438 = vadd.f32 %v1437, 1.0
    %v1439 = vrcp.pop %v1438
    %v1440 = vmul.f32 %v1438, %v1439
    %v1441 = vsub.f32 1.0, %v1440
    %v1442 = vmul.f32 %v1439, %v1441
    %v1443 = vadd.f32 %v1439, %v1442
    %vm1444 = vweird.f32 %v1438
    %vm1445 = vweird.f32 %v1439
    %vm1446 = vmor %vm1444, %vm1445
    %v1447 = vsel %vm1446, %v1439, %v1443
    %v1448 = vand.u32 2147483647, %v1438
    %vm1449 = vcmp.eq.f32.partialorder %v1448, 8.507059e+37
    %v1450 = vand.u32 %v1438, 2147483648
    %v1451 = vor.u32 1.1754944e-38, %v1450
    %v1452 = vsel %vm1449, %v1451, %v1447
    %v1453 = vmul.f32 1.0, %v1452
    %v1454 = vmul.f32 %v1433, %v1236
    %v1455 = vmul.f32 %v1414, %v1434
    %v1456 = vadd.f32 %v1454, %v1455
    %v1457 = vtanh.pop %v1456
    %v1458 = vmul.f32 %v1453, %v1457
    %s1459 = scalar_lea.vmem [#allocation3], 32
    %1460 = vst [vmem:[%s1459] sm:$0xff] %v1458
    %s1461 = smul.u32 5, 4
    %s1462 = smul.addr %s1461, 8
    %s1463 = scalar_lea.vmem [#allocation2], %s1462
    %v1464 = vld [vmem:[%s1463] sm:$0xff]
    %v1465 = vld [vmem:[%s1463 + $0x8] sm:$0xff]
    %v1466 = vld [vmem:[%s1463 + $0x10] sm:$0xff]
    %v1467 = vld [vmem:[%s1463 + $0x18] sm:$0xff]
    %v1468 = vld [vmem:[#allocation9] sm:$0xff]
    %v1469 = vld [vmem:[#allocation9 + $0x8] sm:$0xff]
    %v1470 = vld [vmem:[#allocation9 + $0x10] sm:$0xff]
    %v1471 = vld [vmem:[#allocation9 + $0x18] sm:$0xff]
    %v1472 = vld [vmem:[#allocation9 + $0x20] sm:$0xff]
    %v1473 = vld [vmem:[#allocation9 + $0x28] sm:$0xff]
    %v1474 = vld [vmem:[#allocation9 + $0x30] sm:$0xff]
    %v1475 = vld [vmem:[#allocation9 + $0x38] sm:$0xff]
    %v1476 = vld [vmem:[#allocation9 + $0x40] sm:$0xff]
    %v1477 = vld [vmem:[#allocation9 + $0x48] sm:$0xff]
    %v1478 = vld [vmem:[#allocation9 + $0x50] sm:$0xff]
    %v1479 = vld [vmem:[#allocation9 + $0x58] sm:$0xff]
    %v1480 = vld [vmem:[#allocation9 + $0x60] sm:$0xff]
    %v1481 = vld [vmem:[#allocation9 + $0x68] sm:$0xff]
    %v1482 = vld [vmem:[#allocation9 + $0x70] sm:$0xff]
    %v1483 = vld [vmem:[#allocation9 + $0x78] sm:$0xff]
    %v1484 = vld [vmem:[#allocation9 + $0x80] sm:$0xff]
    %v1485 = vld [vmem:[#allocation9 + $0x88] sm:$0xff]
    %v1486 = vld [vmem:[#allocation9 + $0x90] sm:$0xff]
    %v1487 = vld [vmem:[#allocation9 + $0x98] sm:$0xff]
    %v1488 = vld [vmem:[#allocation9 + $0xa0] sm:$0xff]
    %v1489 = vld [vmem:[#allocation9 + $0xa8] sm:$0xff]
    %v1490 = vld [vmem:[#allocation9 + $0xb0] sm:$0xff]
    %v1491 = vld [vmem:[#allocation9 + $0xb8] sm:$0xff]
    %v1492 = vld [vmem:[#allocation9 + $0xc0] sm:$0xff]
    %v1493 = vld [vmem:[#allocation9 + $0xc8] sm:$0xff]
    %v1494 = vld [vmem:[#allocation9 + $0xd0] sm:$0xff]
    %v1495 = vld [vmem:[#allocation9 + $0xd8] sm:$0xff]
    %v1496 = vld [vmem:[#allocation9 + $0xe0] sm:$0xff]
    %v1497 = vld [vmem:[#allocation9 + $0xe8] sm:$0xff]
    %v1498 = vld [vmem:[#allocation9 + $0xf0] sm:$0xff]
    %v1499 = vld [vmem:[#allocation9 + $0xf8] sm:$0xff]
    %v1500 = vld [vmem:[#allocation9 + $0x100] sm:$0xff]
    %v1501 = vld [vmem:[#allocation9 + $0x108] sm:$0xff]
    %v1502 = vld [vmem:[#allocation9 + $0x110] sm:$0xff]
    %v1503 = vld [vmem:[#allocation9 + $0x118] sm:$0xff]
    %v1504 = vld [vmem:[#allocation9 + $0x120] sm:$0xff]
    %v1505 = vld [vmem:[#allocation9 + $0x128] sm:$0xff]
    %v1506 = vld [vmem:[#allocation9 + $0x130] sm:$0xff]
    %v1507 = vld [vmem:[#allocation9 + $0x138] sm:$0xff]
    %v1508 = vld [vmem:[#allocation9 + $0x140] sm:$0xff]
    %v1509 = vld [vmem:[#allocation9 + $0x148] sm:$0xff]
    %v1510 = vld [vmem:[#allocation9 + $0x150] sm:$0xff]
    %v1511 = vld [vmem:[#allocation9 + $0x158] sm:$0xff]
    %v1512 = vld [vmem:[#allocation9 + $0x160] sm:$0xff]
    %v1513 = vld [vmem:[#allocation9 + $0x168] sm:$0xff]
    %v1514 = vld [vmem:[#allocation9 + $0x170] sm:$0xff]
    %v1515 = vld [vmem:[#allocation9 + $0x178] sm:$0xff]
    %v1516 = vld [vmem:[#allocation9 + $0x180] sm:$0xff]
    %v1517 = vld [vmem:[#allocation9 + $0x188] sm:$0xff]
    %v1518 = vld [vmem:[#allocation9 + $0x190] sm:$0xff]
    %v1519 = vld [vmem:[#allocation9 + $0x198] sm:$0xff]
    %v1520 = vld [vmem:[#allocation9 + $0x1a0] sm:$0xff]
    %v1521 = vld [vmem:[#allocation9 + $0x1a8] sm:$0xff]
    %v1522 = vld [vmem:[#allocation9 + $0x1b0] sm:$0xff]
    %v1523 = vld [vmem:[#allocation9 + $0x1b8] sm:$0xff]
    %v1524 = vld [vmem:[#allocation9 + $0x1c0] sm:$0xff]
    %v1525 = vld [vmem:[#allocation9 + $0x1c8] sm:$0xff]
    %v1526 = vld [vmem:[#allocation9 + $0x1d0] sm:$0xff]
    %v1527 = vld [vmem:[#allocation9 + $0x1d8] sm:$0xff]
    %v1528 = vld [vmem:[#allocation9 + $0x1e0] sm:$0xff]
    %v1529 = vld [vmem:[#allocation9 + $0x1e8] sm:$0xff]
    %v1530 = vld [vmem:[#allocation9 + $0x1f0] sm:$0xff]
    %v1531 = vld [vmem:[#allocation9 + $0x1f8] sm:$0xff]
    %1532 = vmatpush.msra.mxu0 %v1528
    %1533 = vmatpush.msra.mxu0 %v1524
    %1534 = vmatpush.msra.mxu0 %v1520
    %1535 = vmatpush.msra.mxu0 %v1516
    %1536 = vmatpush.msra.mxu0 %v1512
    %1537 = vmatpush.msra.mxu0 %v1508
    %1538 = vmatpush.msra.mxu0 %v1504
    %1539 = vmatpush.msra.mxu0 %v1500
    %1540 = vmatpush.msra.mxu0 %v1496
    %1541 = vmatpush.msra.mxu0 %v1492
    %1542 = vmatpush.msra.mxu0 %v1488
    %1543 = vmatpush.msra.mxu0 %v1484
    %1544 = vmatpush.msra.mxu0 %v1480
    %1545 = vmatpush.msra.mxu0 %v1476
    %1546 = vmatpush.msra.mxu0 %v1472
    %1547 = vmatpush.msra.mxu0 %v1468
    %1548 = vmatmul.f32.gmra.mxu0 %v1458
    %v1549 = vpop.f32.mrf.mxu0
    %v1550 = vadd.f32 0.0, %v1549
    %1551 = vdwg.mxu0
    %1552 = vmatpush.msra.mxu0 %v1529
    %1553 = vmatpush.msra.mxu0 %v1525
    %1554 = vmatpush.msra.mxu0 %v1521
    %1555 = vmatpush.msra.mxu0 %v1517
    %1556 = vmatpush.msra.mxu0 %v1513
    %1557 = vmatpush.msra.mxu0 %v1509
    %1558 = vmatpush.msra.mxu0 %v1505
    %1559 = vmatpush.msra.mxu0 %v1501
    %1560 = vmatpush.msra.mxu0 %v1497
    %1561 = vmatpush.msra.mxu0 %v1493
    %1562 = vmatpush.msra.mxu0 %v1489
    %1563 = vmatpush.msra.mxu0 %v1485
    %1564 = vmatpush.msra.mxu0 %v1481
    %1565 = vmatpush.msra.mxu0 %v1477
    %1566 = vmatpush.msra.mxu0 %v1473
    %1567 = vmatpush.msra.mxu0 %v1469
    %1568 = vmatmul.f32.gmra.mxu0 %v1458
    %v1569 = vpop.f32.mrf.mxu0
    %v1570 = vadd.f32 0.0, %v1569
    %1571 = vdwg.mxu0
    %1572 = vmatpush.msra.mxu0 %v1530
    %1573 = vmatpush.msra.mxu0 %v1526
    %1574 = vmatpush.msra.mxu0 %v1522
    %1575 = vmatpush.msra.mxu0 %v1518
    %1576 = vmatpush.msra.mxu0 %v1514
    %1577 = vmatpush.msra.mxu0 %v1510
    %1578 = vmatpush.msra.mxu0 %v1506
    %1579 = vmatpush.msra.mxu0 %v1502
    %1580 = vmatpush.msra.mxu0 %v1498
    %1581 = vmatpush.msra.mxu0 %v1494
    %1582 = vmatpush.msra.mxu0 %v1490
    %1583 = vmatpush.msra.mxu0 %v1486
    %1584 = vmatpush.msra.mxu0 %v1482
    %1585 = vmatpush.msra.mxu0 %v1478
    %1586 = vmatpush.msra.mxu0 %v1474
    %1587 = vmatpush.msra.mxu0 %v1470
    %1588 = vmatmul.f32.gmra.mxu0 %v1458
    %v1589 = vpop.f32.mrf.mxu0
    %v1590 = vadd.f32 0.0, %v1589
    %1591 = vdwg.mxu0
    %1592 = vmatpush.msra.mxu0 %v1531
    %1593 = vmatpush.msra.mxu0 %v1527
    %1594 = vmatpush.msra.mxu0 %v1523
    %1595 = vmatpush.msra.mxu0 %v1519
    %1596 = vmatpush.msra.mxu0 %v1515
    %1597 = vmatpush.msra.mxu0 %v1511
    %1598 = vmatpush.msra.mxu0 %v1507
    %1599 = vmatpush.msra.mxu0 %v1503
    %1600 = vmatpush.msra.mxu0 %v1499
    %1601 = vmatpush.msra.mxu0 %v1495
    %1602 = vmatpush.msra.mxu0 %v1491
    %1603 = vmatpush.msra.mxu0 %v1487
    %1604 = vmatpush.msra.mxu0 %v1483
    %1605 = vmatpush.msra.mxu0 %v1479
    %1606 = vmatpush.msra.mxu0 %v1475
    %1607 = vmatpush.msra.mxu0 %v1471
    %1608 = vmatmul.f32.gmra.mxu0 %v1458
    %v1609 = vpop.f32.mrf.mxu0
    %v1610 = vadd.f32 0.0, %v1609
    %1611 = vdwg.mxu0
    %v1612 = vadd.f32 %v1464, %v1550
    %v1613 = vadd.f32 %v1465, %v1570
    %v1614 = vadd.f32 %v1466, %v1590
    %v1615 = vadd.f32 %v1467, %v1610
    %v1616 = vxor.u32 %v1612, 2147483648
    %v1617 = vmul.f32 %v1616, 1.442695
    %v1618 = vpow.pop %v1617
    %v1619 = vadd.f32 %v1618, 1.0
    %v1620 = vrcp.pop %v1619
    %v1621 = vmul.f32 %v1619, %v1620
    %v1622 = vsub.f32 1.0, %v1621
    %v1623 = vmul.f32 %v1620, %v1622
    %v1624 = vadd.f32 %v1620, %v1623
    %vm1625 = vweird.f32 %v1619
    %vm1626 = vweird.f32 %v1620
    %vm1627 = vmor %vm1625, %vm1626
    %v1628 = vsel %vm1627, %v1620, %v1624
    %v1629 = vand.u32 2147483647, %v1619
    %vm1630 = vcmp.eq.f32.partialorder %v1629, 8.507059e+37
    %v1631 = vand.u32 %v1619, 2147483648
    %v1632 = vor.u32 1.1754944e-38, %v1631
    %v1633 = vsel %vm1630, %v1632, %v1628
    %v1634 = vmul.f32 1.0, %v1633
    %v1635 = vxor.u32 %v1613, 2147483648
    %v1636 = vmul.f32 %v1635, 1.442695
    %v1637 = vpow.pop %v1636
    %v1638 = vadd.f32 %v1637, 1.0
    %v1639 = vrcp.pop %v1638
    %v1640 = vmul.f32 %v1638, %v1639
    %v1641 = vsub.f32 1.0, %v1640
    %v1642 = vmul.f32 %v1639, %v1641
    %v1643 = vadd.f32 %v1639, %v1642
    %vm1644 = vweird.f32 %v1638
    %vm1645 = vweird.f32 %v1639
    %vm1646 = vmor %vm1644, %vm1645
    %v1647 = vsel %vm1646, %v1639, %v1643
    %v1648 = vand.u32 2147483647, %v1638
    %vm1649 = vcmp.eq.f32.partialorder %v1648, 8.507059e+37
    %v1650 = vand.u32 %v1638, 2147483648
    %v1651 = vor.u32 1.1754944e-38, %v1650
    %v1652 = vsel %vm1649, %v1651, %v1647
    %v1653 = vmul.f32 1.0, %v1652
    %v1654 = vtanh.pop %v1614
    %v1655 = vxor.u32 %v1615, 2147483648
    %v1656 = vmul.f32 %v1655, 1.442695
    %v1657 = vpow.pop %v1656
    %v1658 = vadd.f32 %v1657, 1.0
    %v1659 = vrcp.pop %v1658
    %v1660 = vmul.f32 %v1658, %v1659
    %v1661 = vsub.f32 1.0, %v1660
    %v1662 = vmul.f32 %v1659, %v1661
    %v1663 = vadd.f32 %v1659, %v1662
    %vm1664 = vweird.f32 %v1658
    %vm1665 = vweird.f32 %v1659
    %vm1666 = vmor %vm1664, %vm1665
    %v1667 = vsel %vm1666, %v1659, %v1663
    %v1668 = vand.u32 2147483647, %v1658
    %vm1669 = vcmp.eq.f32.partialorder %v1668, 8.507059e+37
    %v1670 = vand.u32 %v1658, 2147483648
    %v1671 = vor.u32 1.1754944e-38, %v1670
    %v1672 = vsel %vm1669, %v1671, %v1667
    %v1673 = vmul.f32 1.0, %v1672
    %v1674 = vmul.f32 %v1653, %v1456
    %v1675 = vmul.f32 %v1634, %v1654
    %v1676 = vadd.f32 %v1674, %v1675
    %v1677 = vtanh.pop %v1676
    %v1678 = vmul.f32 %v1673, %v1677
    %s1679 = scalar_lea.vmem [#allocation3], 40
    %1680 = vst [vmem:[%s1679] sm:$0xff] %v1678
    %s1681 = smul.u32 6, 4
    %s1682 = smul.addr %s1681, 8
    %s1683 = scalar_lea.vmem [#allocation2], %s1682
    %v1684 = vld [vmem:[%s1683] sm:$0xff]
    %v1685 = vld [vmem:[%s1683 + $0x8] sm:$0xff]
    %v1686 = vld [vmem:[%s1683 + $0x10] sm:$0xff]
    %v1687 = vld [vmem:[%s1683 + $0x18] sm:$0xff]
    %v1688 = vld [vmem:[#allocation9] sm:$0xff]
    %v1689 = vld [vmem:[#allocation9 + $0x8] sm:$0xff]
    %v1690 = vld [vmem:[#allocation9 + $0x10] sm:$0xff]
    %v1691 = vld [vmem:[#allocation9 + $0x18] sm:$0xff]
    %v1692 = vld [vmem:[#allocation9 + $0x20] sm:$0xff]
    %v1693 = vld [vmem:[#allocation9 + $0x28] sm:$0xff]
    %v1694 = vld [vmem:[#allocation9 + $0x30] sm:$0xff]
    %v1695 = vld [vmem:[#allocation9 + $0x38] sm:$0xff]
    %v1696 = vld [vmem:[#allocation9 + $0x40] sm:$0xff]
    %v1697 = vld [vmem:[#allocation9 + $0x48] sm:$0xff]
    %v1698 = vld [vmem:[#allocation9 + $0x50] sm:$0xff]
    %v1699 = vld [vmem:[#allocation9 + $0x58] sm:$0xff]
    %v1700 = vld [vmem:[#allocation9 + $0x60] sm:$0xff]
    %v1701 = vld [vmem:[#allocation9 + $0x68] sm:$0xff]
    %v1702 = vld [vmem:[#allocation9 + $0x70] sm:$0xff]
    %v1703 = vld [vmem:[#allocation9 + $0x78] sm:$0xff]
    %v1704 = vld [vmem:[#allocation9 + $0x80] sm:$0xff]
    %v1705 = vld [vmem:[#allocation9 + $0x88] sm:$0xff]
    %v1706 = vld [vmem:[#allocation9 + $0x90] sm:$0xff]
    %v1707 = vld [vmem:[#allocation9 + $0x98] sm:$0xff]
    %v1708 = vld [vmem:[#allocation9 + $0xa0] sm:$0xff]
    %v1709 = vld [vmem:[#allocation9 + $0xa8] sm:$0xff]
    %v1710 = vld [vmem:[#allocation9 + $0xb0] sm:$0xff]
    %v1711 = vld [vmem:[#allocation9 + $0xb8] sm:$0xff]
    %v1712 = vld [vmem:[#allocation9 + $0xc0] sm:$0xff]
    %v1713 = vld [vmem:[#allocation9 + $0xc8] sm:$0xff]
    %v1714 = vld [vmem:[#allocation9 + $0xd0] sm:$0xff]
    %v1715 = vld [vmem:[#allocation9 + $0xd8] sm:$0xff]
    %v1716 = vld [vmem:[#allocation9 + $0xe0] sm:$0xff]
    %v1717 = vld [vmem:[#allocation9 + $0xe8] sm:$0xff]
    %v1718 = vld [vmem:[#allocation9 + $0xf0] sm:$0xff]
    %v1719 = vld [vmem:[#allocation9 + $0xf8] sm:$0xff]
    %v1720 = vld [vmem:[#allocation9 + $0x100] sm:$0xff]
    %v1721 = vld [vmem:[#allocation9 + $0x108] sm:$0xff]
    %v1722 = vld [vmem:[#allocation9 + $0x110] sm:$0xff]
    %v1723 = vld [vmem:[#allocation9 + $0x118] sm:$0xff]
    %v1724 = vld [vmem:[#allocation9 + $0x120] sm:$0xff]
    %v1725 = vld [vmem:[#allocation9 + $0x128] sm:$0xff]
    %v1726 = vld [vmem:[#allocation9 + $0x130] sm:$0xff]
    %v1727 = vld [vmem:[#allocation9 + $0x138] sm:$0xff]
    %v1728 = vld [vmem:[#allocation9 + $0x140] sm:$0xff]
    %v1729 = vld [vmem:[#allocation9 + $0x148] sm:$0xff]
    %v1730 = vld [vmem:[#allocation9 + $0x150] sm:$0xff]
    %v1731 = vld [vmem:[#allocation9 + $0x158] sm:$0xff]
    %v1732 = vld [vmem:[#allocation9 + $0x160] sm:$0xff]
    %v1733 = vld [vmem:[#allocation9 + $0x168] sm:$0xff]
    %v1734 = vld [vmem:[#allocation9 + $0x170] sm:$0xff]
    %v1735 = vld [vmem:[#allocation9 + $0x178] sm:$0xff]
    %v1736 = vld [vmem:[#allocation9 + $0x180] sm:$0xff]
    %v1737 = vld [vmem:[#allocation9 + $0x188] sm:$0xff]
    %v1738 = vld [vmem:[#allocation9 + $0x190] sm:$0xff]
    %v1739 = vld [vmem:[#allocation9 + $0x198] sm:$0xff]
    %v1740 = vld [vmem:[#allocation9 + $0x1a0] sm:$0xff]
    %v1741 = vld [vmem:[#allocation9 + $0x1a8] sm:$0xff]
    %v1742 = vld [vmem:[#allocation9 + $0x1b0] sm:$0xff]
    %v1743 = vld [vmem:[#allocation9 + $0x1b8] sm:$0xff]
    %v1744 = vld [vmem:[#allocation9 + $0x1c0] sm:$0xff]
    %v1745 = vld [vmem:[#allocation9 + $0x1c8] sm:$0xff]
    %v1746 = vld [vmem:[#allocation9 + $0x1d0] sm:$0xff]
    %v1747 = vld [vmem:[#allocation9 + $0x1d8] sm:$0xff]
    %v1748 = vld [vmem:[#allocation9 + $0x1e0] sm:$0xff]
    %v1749 = vld [vmem:[#allocation9 + $0x1e8] sm:$0xff]
    %v1750 = vld [vmem:[#allocation9 + $0x1f0] sm:$0xff]
    %v1751 = vld [vmem:[#allocation9 + $0x1f8] sm:$0xff]
    %1752 = vmatpush.msra.mxu0 %v1748
    %1753 = vmatpush.msra.mxu0 %v1744
    %1754 = vmatpush.msra.mxu0 %v1740
    %1755 = vmatpush.msra.mxu0 %v1736
    %1756 = vmatpush.msra.mxu0 %v1732
    %1757 = vmatpush.msra.mxu0 %v1728
    %1758 = vmatpush.msra.mxu0 %v1724
    %1759 = vmatpush.msra.mxu0 %v1720
    %1760 = vmatpush.msra.mxu0 %v1716
    %1761 = vmatpush.msra.mxu0 %v1712
    %1762 = vmatpush.msra.mxu0 %v1708
    %1763 = vmatpush.msra.mxu0 %v1704
    %1764 = vmatpush.msra.mxu0 %v1700
    %1765 = vmatpush.msra.mxu0 %v1696
    %1766 = vmatpush.msra.mxu0 %v1692
    %1767 = vmatpush.msra.mxu0 %v1688
    %1768 = vmatmul.f32.gmra.mxu0 %v1678
    %v1769 = vpop.f32.mrf.mxu0
    %v1770 = vadd.f32 0.0, %v1769
    %1771 = vdwg.mxu0
    %1772 = vmatpush.msra.mxu0 %v1749
    %1773 = vmatpush.msra.mxu0 %v1745
    %1774 = vmatpush.msra.mxu0 %v1741
    %1775 = vmatpush.msra.mxu0 %v1737
    %1776 = vmatpush.msra.mxu0 %v1733
    %1777 = vmatpush.msra.mxu0 %v1729
    %1778 = vmatpush.msra.mxu0 %v1725
    %1779 = vmatpush.msra.mxu0 %v1721
    %1780 = vmatpush.msra.mxu0 %v1717
    %1781 = vmatpush.msra.mxu0 %v1713
    %1782 = vmatpush.msra.mxu0 %v1709
    %1783 = vmatpush.msra.mxu0 %v1705
    %1784 = vmatpush.msra.mxu0 %v1701
    %1785 = vmatpush.msra.mxu0 %v1697
    %1786 = vmatpush.msra.mxu0 %v1693
    %1787 = vmatpush.msra.mxu0 %v1689
    %1788 = vmatmul.f32.gmra.mxu0 %v1678
    %v1789 = vpop.f32.mrf.mxu0
    %v1790 = vadd.f32 0.0, %v1789
    %1791 = vdwg.mxu0
    %1792 = vmatpush.msra.mxu0 %v1750
    %1793 = vmatpush.msra.mxu0 %v1746
    %1794 = vmatpush.msra.mxu0 %v1742
    %1795 = vmatpush.msra.mxu0 %v1738
    %1796 = vmatpush.msra.mxu0 %v1734
    %1797 = vmatpush.msra.mxu0 %v1730
    %1798 = vmatpush.msra.mxu0 %v1726
    %1799 = vmatpush.msra.mxu0 %v1722
    %1800 = vmatpush.msra.mxu0 %v1718
    %1801 = vmatpush.msra.mxu0 %v1714
    %1802 = vmatpush.msra.mxu0 %v1710
    %1803 = vmatpush.msra.mxu0 %v1706
    %1804 = vmatpush.msra.mxu0 %v1702
    %1805 = vmatpush.msra.mxu0 %v1698
    %1806 = vmatpush.msra.mxu0 %v1694
    %1807 = vmatpush.msra.mxu0 %v1690
    %1808 = vmatmul.f32.gmra.mxu0 %v1678
    %v1809 = vpop.f32.mrf.mxu0
    %v1810 = vadd.f32 0.0, %v1809
    %1811 = vdwg.mxu0
    %1812 = vmatpush.msra.mxu0 %v1751
    %1813 = vmatpush.msra.mxu0 %v1747
    %1814 = vmatpush.msra.mxu0 %v1743
    %1815 = vmatpush.msra.mxu0 %v1739
    %1816 = vmatpush.msra.mxu0 %v1735
    %1817 = vmatpush.msra.mxu0 %v1731
    %1818 = vmatpush.msra.mxu0 %v1727
    %1819 = vmatpush.msra.mxu0 %v1723
    %1820 = vmatpush.msra.mxu0 %v1719
    %1821 = vmatpush.msra.mxu0 %v1715
    %1822 = vmatpush.msra.mxu0 %v1711
    %1823 = vmatpush.msra.mxu0 %v1707
    %1824 = vmatpush.msra.mxu0 %v1703
    %1825 = vmatpush.msra.mxu0 %v1699
    %1826 = vmatpush.msra.mxu0 %v1695
    %1827 = vmatpush.msra.mxu0 %v1691
    %1828 = vmatmul.f32.gmra.mxu0 %v1678
    %v1829 = vpop.f32.mrf.mxu0
    %v1830 = vadd.f32 0.0, %v1829
    %1831 = vdwg.mxu0
    %v1832 = vadd.f32 %v1684, %v1770
    %v1833 = vadd.f32 %v1685, %v1790
    %v1834 = vadd.f32 %v1686, %v1810
    %v1835 = vadd.f32 %v1687, %v1830
    %v1836 = vxor.u32 %v1832, 2147483648
    %v1837 = vmul.f32 %v1836, 1.442695
    %v1838 = vpow.pop %v1837
    %v1839 = vadd.f32 %v1838, 1.0
    %v1840 = vrcp.pop %v1839
    %v1841 = vmul.f32 %v1839, %v1840
    %v1842 = vsub.f32 1.0, %v1841
    %v1843 = vmul.f32 %v1840, %v1842
    %v1844 = vadd.f32 %v1840, %v1843
    %vm1845 = vweird.f32 %v1839
    %vm1846 = vweird.f32 %v1840
    %vm1847 = vmor %vm1845, %vm1846
    %v1848 = vsel %vm1847, %v1840, %v1844
    %v1849 = vand.u32 2147483647, %v1839
    %vm1850 = vcmp.eq.f32.partialorder %v1849, 8.507059e+37
    %v1851 = vand.u32 %v1839, 2147483648
    %v1852 = vor.u32 1.1754944e-38, %v1851
    %v1853 = vsel %vm1850, %v1852, %v1848
    %v1854 = vmul.f32 1.0, %v1853
    %v1855 = vxor.u32 %v1833, 2147483648
    %v1856 = vmul.f32 %v1855, 1.442695
    %v1857 = vpow.pop %v1856
    %v1858 = vadd.f32 %v1857, 1.0
    %v1859 = vrcp.pop %v1858
    %v1860 = vmul.f32 %v1858, %v1859
    %v1861 = vsub.f32 1.0, %v1860
    %v1862 = vmul.f32 %v1859, %v1861
    %v1863 = vadd.f32 %v1859, %v1862
    %vm1864 = vweird.f32 %v1858
    %vm1865 = vweird.f32 %v1859
    %vm1866 = vmor %vm1864, %vm1865
    %v1867 = vsel %vm1866, %v1859, %v1863
    %v1868 = vand.u32 2147483647, %v1858
    %vm1869 = vcmp.eq.f32.partialorder %v1868, 8.507059e+37
    %v1870 = vand.u32 %v1858, 2147483648
    %v1871 = vor.u32 1.1754944e-38, %v1870
    %v1872 = vsel %vm1869, %v1871, %v1867
    %v1873 = vmul.f32 1.0, %v1872
    %v1874 = vtanh.pop %v1834
    %v1875 = vxor.u32 %v1835, 2147483648
    %v1876 = vmul.f32 %v1875, 1.442695
    %v1877 = vpow.pop %v1876
    %v1878 = vadd.f32 %v1877, 1.0
    %v1879 = vrcp.pop %v1878
    %v1880 = vmul.f32 %v1878, %v1879
    %v1881 = vsub.f32 1.0, %v1880
    %v1882 = vmul.f32 %v1879, %v1881
    %v1883 = vadd.f32 %v1879, %v1882
    %vm1884 = vweird.f32 %v1878
    %vm1885 = vweird.f32 %v1879
    %vm1886 = vmor %vm1884, %vm1885
    %v1887 = vsel %vm1886, %v1879, %v1883
    %v1888 = vand.u32 2147483647, %v1878
    %vm1889 = vcmp.eq.f32.partialorder %v1888, 8.507059e+37
    %v1890 = vand.u32 %v1878, 2147483648
    %v1891 = vor.u32 1.1754944e-38, %v1890
    %v1892 = vsel %vm1889, %v1891, %v1887
    %v1893 = vmul.f32 1.0, %v1892
    %v1894 = vmul.f32 %v1873, %v1676
    %v1895 = vmul.f32 %v1854, %v1874
    %v1896 = vadd.f32 %v1894, %v1895
    %v1897 = vtanh.pop %v1896
    %v1898 = vmul.f32 %v1893, %v1897
    %s1899 = scalar_lea.vmem [#allocation3], 48
    %1900 = vst [vmem:[%s1899] sm:$0xff] %v1898
    %s1901 = smul.u32 7, 4
    %s1902 = smul.addr %s1901, 8
    %s1903 = scalar_lea.vmem [#allocation2], %s1902
    %v1904 = vld [vmem:[%s1903] sm:$0xff]
    %v1905 = vld [vmem:[%s1903 + $0x8] sm:$0xff]
    %v1906 = vld [vmem:[%s1903 + $0x10] sm:$0xff]
    %v1907 = vld [vmem:[%s1903 + $0x18] sm:$0xff]
    %v1908 = vld [vmem:[#allocation9] sm:$0xff]
    %v1909 = vld [vmem:[#allocation9 + $0x8] sm:$0xff]
    %v1910 = vld [vmem:[#allocation9 + $0x10] sm:$0xff]
    %v1911 = vld [vmem:[#allocation9 + $0x18] sm:$0xff]
    %v1912 = vld [vmem:[#allocation9 + $0x20] sm:$0xff]
    %v1913 = vld [vmem:[#allocation9 + $0x28] sm:$0xff]
    %v1914 = vld [vmem:[#allocation9 + $0x30] sm:$0xff]
    %v1915 = vld [vmem:[#allocation9 + $0x38] sm:$0xff]
    %v1916 = vld [vmem:[#allocation9 + $0x40] sm:$0xff]
    %v1917 = vld [vmem:[#allocation9 + $0x48] sm:$0xff]
    %v1918 = vld [vmem:[#allocation9 + $0x50] sm:$0xff]
    %v1919 = vld [vmem:[#allocation9 + $0x58] sm:$0xff]
    %v1920 = vld [vmem:[#allocation9 + $0x60] sm:$0xff]
    %v1921 = vld [vmem:[#allocation9 + $0x68] sm:$0xff]
    %v1922 = vld [vmem:[#allocation9 + $0x70] sm:$0xff]
    %v1923 = vld [vmem:[#allocation9 + $0x78] sm:$0xff]
    %v1924 = vld [vmem:[#allocation9 + $0x80] sm:$0xff]
    %v1925 = vld [vmem:[#allocation9 + $0x88] sm:$0xff]
    %v1926 = vld [vmem:[#allocation9 + $0x90] sm:$0xff]
    %v1927 = vld [vmem:[#allocation9 + $0x98] sm:$0xff]
    %v1928 = vld [vmem:[#allocation9 + $0xa0] sm:$0xff]
    %v1929 = vld [vmem:[#allocation9 + $0xa8] sm:$0xff]
    %v1930 = vld [vmem:[#allocation9 + $0xb0] sm:$0xff]
    %v1931 = vld [vmem:[#allocation9 + $0xb8] sm:$0xff]
    %v1932 = vld [vmem:[#allocation9 + $0xc0] sm:$0xff]
    %v1933 = vld [vmem:[#allocation9 + $0xc8] sm:$0xff]
    %v1934 = vld [vmem:[#allocation9 + $0xd0] sm:$0xff]
    %v1935 = vld [vmem:[#allocation9 + $0xd8] sm:$0xff]
    %v1936 = vld [vmem:[#allocation9 + $0xe0] sm:$0xff]
    %v1937 = vld [vmem:[#allocation9 + $0xe8] sm:$0xff]
    %v1938 = vld [vmem:[#allocation9 + $0xf0] sm:$0xff]
    %v1939 = vld [vmem:[#allocation9 + $0xf8] sm:$0xff]
    %v1940 = vld [vmem:[#allocation9 + $0x100] sm:$0xff]
    %v1941 = vld [vmem:[#allocation9 + $0x108] sm:$0xff]
    %v1942 = vld [vmem:[#allocation9 + $0x110] sm:$0xff]
    %v1943 = vld [vmem:[#allocation9 + $0x118] sm:$0xff]
    %v1944 = vld [vmem:[#allocation9 + $0x120] sm:$0xff]
    %v1945 = vld [vmem:[#allocation9 + $0x128] sm:$0xff]
    %v1946 = vld [vmem:[#allocation9 + $0x130] sm:$0xff]
    %v1947 = vld [vmem:[#allocation9 + $0x138] sm:$0xff]
    %v1948 = vld [vmem:[#allocation9 + $0x140] sm:$0xff]
    %v1949 = vld [vmem:[#allocation9 + $0x148] sm:$0xff]
    %v1950 = vld [vmem:[#allocation9 + $0x150] sm:$0xff]
    %v1951 = vld [vmem:[#allocation9 + $0x158] sm:$0xff]
    %v1952 = vld [vmem:[#allocation9 + $0x160] sm:$0xff]
    %v1953 = vld [vmem:[#allocation9 + $0x168] sm:$0xff]
    %v1954 = vld [vmem:[#allocation9 + $0x170] sm:$0xff]
    %v1955 = vld [vmem:[#allocation9 + $0x178] sm:$0xff]
    %v1956 = vld [vmem:[#allocation9 + $0x180] sm:$0xff]
    %v1957 = vld [vmem:[#allocation9 + $0x188] sm:$0xff]
    %v1958 = vld [vmem:[#allocation9 + $0x190] sm:$0xff]
    %v1959 = vld [vmem:[#allocation9 + $0x198] sm:$0xff]
    %v1960 = vld [vmem:[#allocation9 + $0x1a0] sm:$0xff]
    %v1961 = vld [vmem:[#allocation9 + $0x1a8] sm:$0xff]
    %v1962 = vld [vmem:[#allocation9 + $0x1b0] sm:$0xff]
    %v1963 = vld [vmem:[#allocation9 + $0x1b8] sm:$0xff]
    %v1964 = vld [vmem:[#allocation9 + $0x1c0] sm:$0xff]
    %v1965 = vld [vmem:[#allocation9 + $0x1c8] sm:$0xff]
    %v1966 = vld [vmem:[#allocation9 + $0x1d0] sm:$0xff]
    %v1967 = vld [vmem:[#allocation9 + $0x1d8] sm:$0xff]
    %v1968 = vld [vmem:[#allocation9 + $0x1e0] sm:$0xff]
    %v1969 = vld [vmem:[#allocation9 + $0x1e8] sm:$0xff]
    %v1970 = vld [vmem:[#allocation9 + $0x1f0] sm:$0xff]
    %v1971 = vld [vmem:[#allocation9 + $0x1f8] sm:$0xff]
    %1972 = vmatpush.msra.mxu0 %v1968
    %1973 = vmatpush.msra.mxu0 %v1964
    %1974 = vmatpush.msra.mxu0 %v1960
    %1975 = vmatpush.msra.mxu0 %v1956
    %1976 = vmatpush.msra.mxu0 %v1952
    %1977 = vmatpush.msra.mxu0 %v1948
    %1978 = vmatpush.msra.mxu0 %v1944
    %1979 = vmatpush.msra.mxu0 %v1940
    %1980 = vmatpush.msra.mxu0 %v1936
    %1981 = vmatpush.msra.mxu0 %v1932
    %1982 = vmatpush.msra.mxu0 %v1928
    %1983 = vmatpush.msra.mxu0 %v1924
    %1984 = vmatpush.msra.mxu0 %v1920
    %1985 = vmatpush.msra.mxu0 %v1916
    %1986 = vmatpush.msra.mxu0 %v1912
    %1987 = vmatpush.msra.mxu0 %v1908
    %1988 = vmatmul.f32.gmra.mxu0 %v1898
    %v1989 = vpop.f32.mrf.mxu0
    %v1990 = vadd.f32 0.0, %v1989
    %1991 = vdwg.mxu0
    %1992 = vmatpush.msra.mxu0 %v1969
    %1993 = vmatpush.msra.mxu0 %v1965
    %1994 = vmatpush.msra.mxu0 %v1961
    %1995 = vmatpush.msra.mxu0 %v1957
    %1996 = vmatpush.msra.mxu0 %v1953
    %1997 = vmatpush.msra.mxu0 %v1949
    %1998 = vmatpush.msra.mxu0 %v1945
    %1999 = vmatpush.msra.mxu0 %v1941
    %2000 = vmatpush.msra.mxu0 %v1937
    %2001 = vmatpush.msra.mxu0 %v1933
    %2002 = vmatpush.msra.mxu0 %v1929
    %2003 = vmatpush.msra.mxu0 %v1925
    %2004 = vmatpush.msra.mxu0 %v1921
    %2005 = vmatpush.msra.mxu0 %v1917
    %2006 = vmatpush.msra.mxu0 %v1913
    %2007 = vmatpush.msra.mxu0 %v1909
    %2008 = vmatmul.f32.gmra.mxu0 %v1898
    %v2009 = vpop.f32.mrf.mxu0
    %v2010 = vadd.f32 0.0, %v2009
    %2011 = vdwg.mxu0
    %2012 = vmatpush.msra.mxu0 %v1970
    %2013 = vmatpush.msra.mxu0 %v1966
    %2014 = vmatpush.msra.mxu0 %v1962
    %2015 = vmatpush.msra.mxu0 %v1958
    %2016 = vmatpush.msra.mxu0 %v1954
    %2017 = vmatpush.msra.mxu0 %v1950
    %2018 = vmatpush.msra.mxu0 %v1946
    %2019 = vmatpush.msra.mxu0 %v1942
    %2020 = vmatpush.msra.mxu0 %v1938
    %2021 = vmatpush.msra.mxu0 %v1934
    %2022 = vmatpush.msra.mxu0 %v1930
    %2023 = vmatpush.msra.mxu0 %v1926
    %2024 = vmatpush.msra.mxu0 %v1922
    %2025 = vmatpush.msra.mxu0 %v1918
    %2026 = vmatpush.msra.mxu0 %v1914
    %2027 = vmatpush.msra.mxu0 %v1910
    %2028 = vmatmul.f32.gmra.mxu0 %v1898
    %v2029 = vpop.f32.mrf.mxu0
    %v2030 = vadd.f32 0.0, %v2029
    %2031 = vdwg.mxu0
    %2032 = vmatpush.msra.mxu0 %v1971
    %2033 = vmatpush.msra.mxu0 %v1967
    %2034 = vmatpush.msra.mxu0 %v1963
    %2035 = vmatpush.msra.mxu0 %v1959
    %2036 = vmatpush.msra.mxu0 %v1955
    %2037 = vmatpush.msra.mxu0 %v1951
    %2038 = vmatpush.msra.mxu0 %v1947
    %2039 = vmatpush.msra.mxu0 %v1943
    %2040 = vmatpush.msra.mxu0 %v1939
    %2041 = vmatpush.msra.mxu0 %v1935
    %2042 = vmatpush.msra.mxu0 %v1931
    %2043 = vmatpush.msra.mxu0 %v1927
    %2044 = vmatpush.msra.mxu0 %v1923
    %2045 = vmatpush.msra.mxu0 %v1919
    %2046 = vmatpush.msra.mxu0 %v1915
    %2047 = vmatpush.msra.mxu0 %v1911
    %2048 = vmatmul.f32.gmra.mxu0 %v1898
    %v2049 = vpop.f32.mrf.mxu0
    %v2050 = vadd.f32 0.0, %v2049
    %2051 = vdwg.mxu0
    %v2052 = vadd.f32 %v1904, %v1990
    %v2053 = vadd.f32 %v1905, %v2010
    %v2054 = vadd.f32 %v1906, %v2030
    %v2055 = vadd.f32 %v1907, %v2050
    %v2056 = vxor.u32 %v2052, 2147483648
    %v2057 = vmul.f32 %v2056, 1.442695
    %v2058 = vpow.pop %v2057
    %v2059 = vadd.f32 %v2058, 1.0
    %v2060 = vrcp.pop %v2059
    %v2061 = vmul.f32 %v2059, %v2060
    %v2062 = vsub.f32 1.0, %v2061
    %v2063 = vmul.f32 %v2060, %v2062
    %v2064 = vadd.f32 %v2060, %v2063
    %vm2065 = vweird.f32 %v2059
    %vm2066 = vweird.f32 %v2060
    %vm2067 = vmor %vm2065, %vm2066
    %v2068 = vsel %vm2067, %v2060, %v2064
    %v2069 = vand.u32 2147483647, %v2059
    %vm2070 = vcmp.eq.f32.partialorder %v2069, 8.507059e+37
    %v2071 = vand.u32 %v2059, 2147483648
    %v2072 = vor.u32 1.1754944e-38, %v2071
    %v2073 = vsel %vm2070, %v2072, %v2068
    %v2074 = vmul.f32 1.0, %v2073
    %v2075 = vxor.u32 %v2053, 2147483648
    %v2076 = vmul.f32 %v2075, 1.442695
    %v2077 = vpow.pop %v2076
    %v2078 = vadd.f32 %v2077, 1.0
    %v2079 = vrcp.pop %v2078
    %v2080 = vmul.f32 %v2078, %v2079
    %v2081 = vsub.f32 1.0, %v2080
    %v2082 = vmul.f32 %v2079, %v2081
    %v2083 = vadd.f32 %v2079, %v2082
    %vm2084 = vweird.f32 %v2078
    %vm2085 = vweird.f32 %v2079
    %vm2086 = vmor %vm2084, %vm2085
    %v2087 = vsel %vm2086, %v2079, %v2083
    %v2088 = vand.u32 2147483647, %v2078
    %vm2089 = vcmp.eq.f32.partialorder %v2088, 8.507059e+37
    %v2090 = vand.u32 %v2078, 2147483648
    %v2091 = vor.u32 1.1754944e-38, %v2090
    %v2092 = vsel %vm2089, %v2091, %v2087
    %v2093 = vmul.f32 1.0, %v2092
    %v2094 = vtanh.pop %v2054
    %v2095 = vxor.u32 %v2055, 2147483648
    %v2096 = vmul.f32 %v2095, 1.442695
    %v2097 = vpow.pop %v2096
    %v2098 = vadd.f32 %v2097, 1.0
    %v2099 = vrcp.pop %v2098
    %v2100 = vmul.f32 %v2098, %v2099
    %v2101 = vsub.f32 1.0, %v2100
    %v2102 = vmul.f32 %v2099, %v2101
    %v2103 = vadd.f32 %v2099, %v2102
    %vm2104 = vweird.f32 %v2098
    %vm2105 = vweird.f32 %v2099
    %vm2106 = vmor %vm2104, %vm2105
    %v2107 = vsel %vm2106, %v2099, %v2103
    %v2108 = vand.u32 2147483647, %v2098
    %vm2109 = vcmp.eq.f32.partialorder %v2108, 8.507059e+37
    %v2110 = vand.u32 %v2098, 2147483648
    %v2111 = vor.u32 1.1754944e-38, %v2110
    %v2112 = vsel %vm2109, %v2111, %v2107
    %v2113 = vmul.f32 1.0, %v2112
    %v2114 = vmul.f32 %v2093, %v1896
    %v2115 = vmul.f32 %v2074, %v2094
    %v2116 = vadd.f32 %v2114, %v2115
    %v2117 = vtanh.pop %v2116
    %v2118 = vmul.f32 %v2113, %v2117
    %s2119 = scalar_lea.vmem [#allocation3], 56
    %2120 = vst [vmem:[%s2119] sm:$0xff] %v2118
    %2121 = vst [vmem:[#allocation12] sm:$0xff] %v2118
    %2122 = vst [vmem:[#allocation13] sm:$0xff] %v2116
    %v2123 = vld [vmem:[#allocation3] sm:$0xff]
    %v2124 = vld [vmem:[#allocation3 + $0x8] sm:$0xff]
    %v2125 = vld [vmem:[#allocation3 + $0x10] sm:$0xff]
    %v2126 = vld [vmem:[#allocation3 + $0x18] sm:$0xff]
    %v2127 = vld [vmem:[#allocation3 + $0x20] sm:$0xff]
    %v2128 = vld [vmem:[#allocation3 + $0x28] sm:$0xff]
    %v2129 = vld [vmem:[#allocation3 + $0x30] sm:$0xff]
    %v2130 = vld [vmem:[#allocation3 + $0x38] sm:$0xff]
    %s2131 = scalar_lea.vmem [#allocation7], 512
    %v2132 = vld [vmem:[%s2131] sm:$0xff]
    %v2133 = vld [vmem:[%s2131 + $0x8] sm:$0xff]
    %v2134 = vld [vmem:[%s2131 + $0x10] sm:$0xff]
    %v2135 = vld [vmem:[%s2131 + $0x18] sm:$0xff]
    %v2136 = vld [vmem:[%s2131 + $0x20] sm:$0xff]
    %v2137 = vld [vmem:[%s2131 + $0x28] sm:$0xff]
    %v2138 = vld [vmem:[%s2131 + $0x30] sm:$0xff]
    %v2139 = vld [vmem:[%s2131 + $0x38] sm:$0xff]
    %v2140 = vld [vmem:[%s2131 + $0x40] sm:$0xff]
    %v2141 = vld [vmem:[%s2131 + $0x48] sm:$0xff]
    %v2142 = vld [vmem:[%s2131 + $0x50] sm:$0xff]
    %v2143 = vld [vmem:[%s2131 + $0x58] sm:$0xff]
    %v2144 = vld [vmem:[%s2131 + $0x60] sm:$0xff]
    %v2145 = vld [vmem:[%s2131 + $0x68] sm:$0xff]
    %v2146 = vld [vmem:[%s2131 + $0x70] sm:$0xff]
    %v2147 = vld [vmem:[%s2131 + $0x78] sm:$0xff]
    %v2148 = vld [vmem:[%s2131 + $0x80] sm:$0xff]
    %v2149 = vld [vmem:[%s2131 + $0x88] sm:$0xff]
    %v2150 = vld [vmem:[%s2131 + $0x90] sm:$0xff]
    %v2151 = vld [vmem:[%s2131 + $0x98] sm:$0xff]
    %v2152 = vld [vmem:[%s2131 + $0xa0] sm:$0xff]
    %v2153 = vld [vmem:[%s2131 + $0xa8] sm:$0xff]
    %v2154 = vld [vmem:[%s2131 + $0xb0] sm:$0xff]
    %v2155 = vld [vmem:[%s2131 + $0xb8] sm:$0xff]
    %v2156 = vld [vmem:[%s2131 + $0xc0] sm:$0xff]
    %v2157 = vld [vmem:[%s2131 + $0xc8] sm:$0xff]
    %v2158 = vld [vmem:[%s2131 + $0xd0] sm:$0xff]
    %v2159 = vld [vmem:[%s2131 + $0xd8] sm:$0xff]
    %v2160 = vld [vmem:[%s2131 + $0xe0] sm:$0xff]
    %v2161 = vld [vmem:[%s2131 + $0xe8] sm:$0xff]
    %v2162 = vld [vmem:[%s2131 + $0xf0] sm:$0xff]
    %v2163 = vld [vmem:[%s2131 + $0xf8] sm:$0xff]
    %v2164 = vld [vmem:[%s2131 + $0x100] sm:$0xff]
    %v2165 = vld [vmem:[%s2131 + $0x108] sm:$0xff]
    %v2166 = vld [vmem:[%s2131 + $0x110] sm:$0xff]
    %v2167 = vld [vmem:[%s2131 + $0x118] sm:$0xff]
    %v2168 = vld [vmem:[%s2131 + $0x120] sm:$0xff]
    %v2169 = vld [vmem:[%s2131 + $0x128] sm:$0xff]
    %v2170 = vld [vmem:[%s2131 + $0x130] sm:$0xff]
    %v2171 = vld [vmem:[%s2131 + $0x138] sm:$0xff]
    %v2172 = vld [vmem:[%s2131 + $0x140] sm:$0xff]
    %v2173 = vld [vmem:[%s2131 + $0x148] sm:$0xff]
    %v2174 = vld [vmem:[%s2131 + $0x150] sm:$0xff]
    %v2175 = vld [vmem:[%s2131 + $0x158] sm:$0xff]
    %v2176 = vld [vmem:[%s2131 + $0x160] sm:$0xff]
    %v2177 = vld [vmem:[%s2131 + $0x168] sm:$0xff]
    %v2178 = vld [vmem:[%s2131 + $0x170] sm:$0xff]
    %v2179 = vld [vmem:[%s2131 + $0x178] sm:$0xff]
    %v2180 = vld [vmem:[%s2131 + $0x180] sm:$0xff]
    %v2181 = vld [vmem:[%s2131 + $0x188] sm:$0xff]
    %v2182 = vld [vmem:[%s2131 + $0x190] sm:$0xff]
    %v2183 = vld [vmem:[%s2131 + $0x198] sm:$0xff]
    %v2184 = vld [vmem:[%s2131 + $0x1a0] sm:$0xff]
    %v2185 = vld [vmem:[%s2131 + $0x1a8] sm:$0xff]
    %v2186 = vld [vmem:[%s2131 + $0x1b0] sm:$0xff]
    %v2187 = vld [vmem:[%s2131 + $0x1b8] sm:$0xff]
    %v2188 = vld [vmem:[%s2131 + $0x1c0] sm:$0xff]
    %v2189 = vld [vmem:[%s2131 + $0x1c8] sm:$0xff]
    %v2190 = vld [vmem:[%s2131 + $0x1d0] sm:$0xff]
    %v2191 = vld [vmem:[%s2131 + $0x1d8] sm:$0xff]
    %v2192 = vld [vmem:[%s2131 + $0x1e0] sm:$0xff]
    %v2193 = vld [vmem:[%s2131 + $0x1e8] sm:$0xff]
    %v2194 = vld [vmem:[%s2131 + $0x1f0] sm:$0xff]
    %v2195 = vld [vmem:[%s2131 + $0x1f8] sm:$0xff]
    %s2196 = scalar_lea.vmem [#allocation10], 4
    %v2197 = vld [vmem:[%s2196] sm:$0xf]
    %v2199 = vperm.slane %v2197, 0
    %v2200 = vperm.slane %v2197, 1
    %v2201 = vperm.slane %v2197, 2
    %v2202 = vperm.slane %v2197, 3
    %2207 = vmatpush.msra.mxu0 %v2192
    %2208 = vmatpush.msra.mxu0 %v2188
    %2209 = vmatpush.msra.mxu0 %v2184
    %2210 = vmatpush.msra.mxu0 %v2180
    %2211 = vmatpush.msra.mxu0 %v2176
    %2212 = vmatpush.msra.mxu0 %v2172
    %2213 = vmatpush.msra.mxu0 %v2168
    %2214 = vmatpush.msra.mxu0 %v2164
    %2215 = vmatpush.msra.mxu0 %v2160
    %2216 = vmatpush.msra.mxu0 %v2156
    %2217 = vmatpush.msra.mxu0 %v2152
    %2218 = vmatpush.msra.mxu0 %v2148
    %2219 = vmatpush.msra.mxu0 %v2144
    %2220 = vmatpush.msra.mxu0 %v2140
    %2221 = vmatpush.msra.mxu0 %v2136
    %2222 = vmatpush.msra.mxu0 %v2132
    %2223 = vmatmul.f32.gmra.mxu0 %v2123
    %v2224 = vpop.f32.mrf.mxu0
    %v2225 = vadd.f32 %v2199, %v2224
    %2226 = vmatmul.f32.gmra.mxu0 %v2124
    %v2227 = vpop.f32.mrf.mxu0
    %v2228 = vadd.f32 %v2199, %v2227
    %2229 = vmatmul.f32.gmra.mxu0 %v2125
    %v2230 = vpop.f32.mrf.mxu0
    %v2231 = vadd.f32 %v2199, %v2230
    %2232 = vmatmul.f32.gmra.mxu0 %v2126
    %v2233 = vpop.f32.mrf.mxu0
    %v2234 = vadd.f32 %v2199, %v2233
    %2235 = vmatmul.f32.gmra.mxu0 %v2127
    %v2236 = vpop.f32.mrf.mxu0
    %v2237 = vadd.f32 %v2199, %v2236
    %2238 = vmatmul.f32.gmra.mxu0 %v2128
    %v2239 = vpop.f32.mrf.mxu0
    %v2240 = vadd.f32 %v2199, %v2239
    %2241 = vmatmul.f32.gmra.mxu0 %v2129
    %v2242 = vpop.f32.mrf.mxu0
    %v2243 = vadd.f32 %v2199, %v2242
    %2244 = vmatmul.f32.gmra.mxu0 %v2130
    %v2245 = vpop.f32.mrf.mxu0
    %v2246 = vadd.f32 %v2199, %v2245
    %2247 = vdwg.mxu0
    %2248 = vmatpush.msra.mxu0 %v2193
    %2249 = vmatpush.msra.mxu0 %v2189
    %2250 = vmatpush.msra.mxu0 %v2185
    %2251 = vmatpush.msra.mxu0 %v2181
    %2252 = vmatpush.msra.mxu0 %v2177
    %2253 = vmatpush.msra.mxu0 %v2173
    %2254 = vmatpush.msra.mxu0 %v2169
    %2255 = vmatpush.msra.mxu0 %v2165
    %2256 = vmatpush.msra.mxu0 %v2161
    %2257 = vmatpush.msra.mxu0 %v2157
    %2258 = vmatpush.msra.mxu0 %v2153
    %2259 = vmatpush.msra.mxu0 %v2149
    %2260 = vmatpush.msra.mxu0 %v2145
    %2261 = vmatpush.msra.mxu0 %v2141
    %2262 = vmatpush.msra.mxu0 %v2137
    %2263 = vmatpush.msra.mxu0 %v2133
    %2264 = vmatmul.f32.gmra.mxu0 %v2123
    %v2265 = vpop.f32.mrf.mxu0
    %v2266 = vadd.f32 %v2200, %v2265
    %2267 = vmatmul.f32.gmra.mxu0 %v2124
    %v2268 = vpop.f32.mrf.mxu0
    %v2269 = vadd.f32 %v2200, %v2268
    %2270 = vmatmul.f32.gmra.mxu0 %v2125
    %v2271 = vpop.f32.mrf.mxu0
    %v2272 = vadd.f32 %v2200, %v2271
    %2273 = vmatmul.f32.gmra.mxu0 %v2126
    %v2274 = vpop.f32.mrf.mxu0
    %v2275 = vadd.f32 %v2200, %v2274
    %2276 = vmatmul.f32.gmra.mxu0 %v2127
    %v2277 = vpop.f32.mrf.mxu0
    %v2278 = vadd.f32 %v2200, %v2277
    %2279 = vmatmul.f32.gmra.mxu0 %v2128
    %v2280 = vpop.f32.mrf.mxu0
    %v2281 = vadd.f32 %v2200, %v2280
    %2282 = vmatmul.f32.gmra.mxu0 %v2129
    %v2283 = vpop.f32.mrf.mxu0
    %v2284 = vadd.f32 %v2200, %v2283
    %2285 = vmatmul.f32.gmra.mxu0 %v2130
    %v2286 = vpop.f32.mrf.mxu0
    %v2287 = vadd.f32 %v2200, %v2286
    %2288 = vdwg.mxu0
    %2289 = vmatpush.msra.mxu0 %v2194
    %2290 = vmatpush.msra.mxu0 %v2190
    %2291 = vmatpush.msra.mxu0 %v2186
    %2292 = vmatpush.msra.mxu0 %v2182
    %2293 = vmatpush.msra.mxu0 %v2178
    %2294 = vmatpush.msra.mxu0 %v2174
    %2295 = vmatpush.msra.mxu0 %v2170
    %2296 = vmatpush.msra.mxu0 %v2166
    %2297 = vmatpush.msra.mxu0 %v2162
    %2298 = vmatpush.msra.mxu0 %v2158
    %2299 = vmatpush.msra.mxu0 %v2154
    %2300 = vmatpush.msra.mxu0 %v2150
    %2301 = vmatpush.msra.mxu0 %v2146
    %2302 = vmatpush.msra.mxu0 %v2142
    %2303 = vmatpush.msra.mxu0 %v2138
    %2304 = vmatpush.msra.mxu0 %v2134
    %2305 = vmatmul.f32.gmra.mxu0 %v2123
    %v2306 = vpop.f32.mrf.mxu0
    %v2307 = vadd.f32 %v2201, %v2306
    %2308 = vmatmul.f32.gmra.mxu0 %v2124
    %v2309 = vpop.f32.mrf.mxu0
    %v2310 = vadd.f32 %v2201, %v2309
    %2311 = vmatmul.f32.gmra.mxu0 %v2125
    %v2312 = vpop.f32.mrf.mxu0
    %v2313 = vadd.f32 %v2201, %v2312
    %2314 = vmatmul.f32.gmra.mxu0 %v2126
    %v2315 = vpop.f32.mrf.mxu0
    %v2316 = vadd.f32 %v2201, %v2315
    %2317 = vmatmul.f32.gmra.mxu0 %v2127
    %v2318 = vpop.f32.mrf.mxu0
    %v2319 = vadd.f32 %v2201, %v2318
    %2320 = vmatmul.f32.gmra.mxu0 %v2128
    %v2321 = vpop.f32.mrf.mxu0
    %v2322 = vadd.f32 %v2201, %v2321
    %2323 = vmatmul.f32.gmra.mxu0 %v2129
    %v2324 = vpop.f32.mrf.mxu0
    %v2325 = vadd.f32 %v2201, %v2324
    %2326 = vmatmul.f32.gmra.mxu0 %v2130
    %v2327 = vpop.f32.mrf.mxu0
    %v2328 = vadd.f32 %v2201, %v2327
    %2329 = vdwg.mxu0
    %2330 = vmatpush.msra.mxu0 %v2195
    %2331 = vmatpush.msra.mxu0 %v2191
    %2332 = vmatpush.msra.mxu0 %v2187
    %2333 = vmatpush.msra.mxu0 %v2183
    %2334 = vmatpush.msra.mxu0 %v2179
    %2335 = vmatpush.msra.mxu0 %v2175
    %2336 = vmatpush.msra.mxu0 %v2171
    %2337 = vmatpush.msra.mxu0 %v2167
    %2338 = vmatpush.msra.mxu0 %v2163
    %2339 = vmatpush.msra.mxu0 %v2159
    %2340 = vmatpush.msra.mxu0 %v2155
    %2341 = vmatpush.msra.mxu0 %v2151
    %2342 = vmatpush.msra.mxu0 %v2147
    %2343 = vmatpush.msra.mxu0 %v2143
    %2344 = vmatpush.msra.mxu0 %v2139
    %2345 = vmatpush.msra.mxu0 %v2135
    %2346 = vmatmul.f32.gmra.mxu0 %v2123
    %v2347 = vpop.f32.mrf.mxu0
    %v2348 = vadd.f32 %v2202, %v2347
    %2349 = vmatmul.f32.gmra.mxu0 %v2124
    %v2350 = vpop.f32.mrf.mxu0
    %v2351 = vadd.f32 %v2202, %v2350
    %2352 = vmatmul.f32.gmra.mxu0 %v2125
    %v2353 = vpop.f32.mrf.mxu0
    %v2354 = vadd.f32 %v2202, %v2353
    %2355 = vmatmul.f32.gmra.mxu0 %v2126
    %v2356 = vpop.f32.mrf.mxu0
    %v2357 = vadd.f32 %v2202, %v2356
    %2358 = vmatmul.f32.gmra.mxu0 %v2127
    %v2359 = vpop.f32.mrf.mxu0
    %v2360 = vadd.f32 %v2202, %v2359
    %2361 = vmatmul.f32.gmra.mxu0 %v2128
    %v2362 = vpop.f32.mrf.mxu0
    %v2363 = vadd.f32 %v2202, %v2362
    %2364 = vmatmul.f32.gmra.mxu0 %v2129
    %v2365 = vpop.f32.mrf.mxu0
    %v2366 = vadd.f32 %v2202, %v2365
    %2367 = vmatmul.f32.gmra.mxu0 %v2130
    %v2368 = vpop.f32.mrf.mxu0
    %v2369 = vadd.f32 %v2202, %v2368
    %2370 = vdwg.mxu0
    %2371 = vst [vmem:[#allocation2] sm:$0xff] %v2225
    %2372 = vst [vmem:[#allocation2 + $0x8] sm:$0xff] %v2266
    %2373 = vst [vmem:[#allocation2 + $0x10] sm:$0xff] %v2307
    %2374 = vst [vmem:[#allocation2 + $0x18] sm:$0xff] %v2348
    %2375 = vst [vmem:[#allocation2 + $0x20] sm:$0xff] %v2228
    %2376 = vst [vmem:[#allocation2 + $0x28] sm:$0xff] %v2269
    %2377 = vst [vmem:[#allocation2 + $0x30] sm:$0xff] %v2310
    %2378 = vst [vmem:[#allocation2 + $0x38] sm:$0xff] %v2351
    %2379 = vst [vmem:[#allocation2 + $0x40] sm:$0xff] %v2231
    %2380 = vst [vmem:[#allocation2 + $0x48] sm:$0xff] %v2272
    %2381 = vst [vmem:[#allocation2 + $0x50] sm:$0xff] %v2313
    %2382 = vst [vmem:[#allocation2 + $0x58] sm:$0xff] %v2354
    %2383 = vst [vmem:[#allocation2 + $0x60] sm:$0xff] %v2234
    %2384 = vst [vmem:[#allocation2 + $0x68] sm:$0xff] %v2275
    %2385 = vst [vmem:[#allocation2 + $0x70] sm:$0xff] %v2316
    %2386 = vst [vmem:[#allocation2 + $0x78] sm:$0xff] %v2357
    %2387 = vst [vmem:[#allocation2 + $0x80] sm:$0xff] %v2237
    %2388 = vst [vmem:[#allocation2 + $0x88] sm:$0xff] %v2278
    %2389 = vst [vmem:[#allocation2 + $0x90] sm:$0xff] %v2319
    %2390 = vst [vmem:[#allocation2 + $0x98] sm:$0xff] %v2360
    %2391 = vst [vmem:[#allocation2 + $0xa0] sm:$0xff] %v2240
    %2392 = vst [vmem:[#allocation2 + $0xa8] sm:$0xff] %v2281
    %2393 = vst [vmem:[#allocation2 + $0xb0] sm:$0xff] %v2322
    %2394 = vst [vmem:[#allocation2 + $0xb8] sm:$0xff] %v2363
    %2395 = vst [vmem:[#allocation2 + $0xc0] sm:$0xff] %v2243
    %2396 = vst [vmem:[#allocation2 + $0xc8] sm:$0xff] %v2284
    %2397 = vst [vmem:[#allocation2 + $0xd0] sm:$0xff] %v2325
    %2398 = vst [vmem:[#allocation2 + $0xd8] sm:$0xff] %v2366
    %2399 = vst [vmem:[#allocation2 + $0xe0] sm:$0xff] %v2246
    %2400 = vst [vmem:[#allocation2 + $0xe8] sm:$0xff] %v2287
    %2401 = vst [vmem:[#allocation2 + $0xf0] sm:$0xff] %v2328
    %2402 = vst [vmem:[#allocation2 + $0xf8] sm:$0xff] %v2369
    %v2403 = vld [vmem:[%s364] sm:$0xff]
    %v2404 = vld [vmem:[%s364 + $0x8] sm:$0xff]
    %v2405 = vld [vmem:[%s364 + $0x10] sm:$0xff]
    %v2406 = vld [vmem:[%s364 + $0x18] sm:$0xff]
    %s2407 = scalar_lea.vmem [#allocation9], 512
    %v2408 = vld [vmem:[%s2407] sm:$0xff]
    %v2409 = vld [vmem:[%s2407 + $0x8] sm:$0xff]
    %v2410 = vld [vmem:[%s2407 + $0x10] sm:$0xff]
    %v2411 = vld [vmem:[%s2407 + $0x18] sm:$0xff]
    %v2412 = vld [vmem:[%s2407 + $0x20] sm:$0xff]
    %v2413 = vld [vmem:[%s2407 + $0x28] sm:$0xff]
    %v2414 = vld [vmem:[%s2407 + $0x30] sm:$0xff]
    %v2415 = vld [vmem:[%s2407 + $0x38] sm:$0xff]
    %v2416 = vld [vmem:[%s2407 + $0x40] sm:$0xff]
    %v2417 = vld [vmem:[%s2407 + $0x48] sm:$0xff]
    %v2418 = vld [vmem:[%s2407 + $0x50] sm:$0xff]
    %v2419 = vld [vmem:[%s2407 + $0x58] sm:$0xff]
    %v2420 = vld [vmem:[%s2407 + $0x60] sm:$0xff]
    %v2421 = vld [vmem:[%s2407 + $0x68] sm:$0xff]
    %v2422 = vld [vmem:[%s2407 + $0x70] sm:$0xff]
    %v2423 = vld [vmem:[%s2407 + $0x78] sm:$0xff]
    %v2424 = vld [vmem:[%s2407 + $0x80] sm:$0xff]
    %v2425 = vld [vmem:[%s2407 + $0x88] sm:$0xff]
    %v2426 = vld [vmem:[%s2407 + $0x90] sm:$0xff]
    %v2427 = vld [vmem:[%s2407 + $0x98] sm:$0xff]
    %v2428 = vld [vmem:[%s2407 + $0xa0] sm:$0xff]
    %v2429 = vld [vmem:[%s2407 + $0xa8] sm:$0xff]
    %v2430 = vld [vmem:[%s2407 + $0xb0] sm:$0xff]
    %v2431 = vld [vmem:[%s2407 + $0xb8] sm:$0xff]
    %v2432 = vld [vmem:[%s2407 + $0xc0] sm:$0xff]
    %v2433 = vld [vmem:[%s2407 + $0xc8] sm:$0xff]
    %v2434 = vld [vmem:[%s2407 + $0xd0] sm:$0xff]
    %v2435 = vld [vmem:[%s2407 + $0xd8] sm:$0xff]
    %v2436 = vld [vmem:[%s2407 + $0xe0] sm:$0xff]
    %v2437 = vld [vmem:[%s2407 + $0xe8] sm:$0xff]
    %v2438 = vld [vmem:[%s2407 + $0xf0] sm:$0xff]
    %v2439 = vld [vmem:[%s2407 + $0xf8] sm:$0xff]
    %v2440 = vld [vmem:[%s2407 + $0x100] sm:$0xff]
    %v2441 = vld [vmem:[%s2407 + $0x108] sm:$0xff]
    %v2442 = vld [vmem:[%s2407 + $0x110] sm:$0xff]
    %v2443 = vld [vmem:[%s2407 + $0x118] sm:$0xff]
    %v2444 = vld [vmem:[%s2407 + $0x120] sm:$0xff]
    %v2445 = vld [vmem:[%s2407 + $0x128] sm:$0xff]
    %v2446 = vld [vmem:[%s2407 + $0x130] sm:$0xff]
    %v2447 = vld [vmem:[%s2407 + $0x138] sm:$0xff]
    %v2448 = vld [vmem:[%s2407 + $0x140] sm:$0xff]
    %v2449 = vld [vmem:[%s2407 + $0x148] sm:$0xff]
    %v2450 = vld [vmem:[%s2407 + $0x150] sm:$0xff]
    %v2451 = vld [vmem:[%s2407 + $0x158] sm:$0xff]
    %v2452 = vld [vmem:[%s2407 + $0x160] sm:$0xff]
    %v2453 = vld [vmem:[%s2407 + $0x168] sm:$0xff]
    %v2454 = vld [vmem:[%s2407 + $0x170] sm:$0xff]
    %v2455 = vld [vmem:[%s2407 + $0x178] sm:$0xff]
    %v2456 = vld [vmem:[%s2407 + $0x180] sm:$0xff]
    %v2457 = vld [vmem:[%s2407 + $0x188] sm:$0xff]
    %v2458 = vld [vmem:[%s2407 + $0x190] sm:$0xff]
    %v2459 = vld [vmem:[%s2407 + $0x198] sm:$0xff]
    %v2460 = vld [vmem:[%s2407 + $0x1a0] sm:$0xff]
    %v2461 = vld [vmem:[%s2407 + $0x1a8] sm:$0xff]
    %v2462 = vld [vmem:[%s2407 + $0x1b0] sm:$0xff]
    %v2463 = vld [vmem:[%s2407 + $0x1b8] sm:$0xff]
    %v2464 = vld [vmem:[%s2407 + $0x1c0] sm:$0xff]
    %v2465 = vld [vmem:[%s2407 + $0x1c8] sm:$0xff]
    %v2466 = vld [vmem:[%s2407 + $0x1d0] sm:$0xff]
    %v2467 = vld [vmem:[%s2407 + $0x1d8] sm:$0xff]
    %v2468 = vld [vmem:[%s2407 + $0x1e0] sm:$0xff]
    %v2469 = vld [vmem:[%s2407 + $0x1e8] sm:$0xff]
    %v2470 = vld [vmem:[%s2407 + $0x1f0] sm:$0xff]
    %v2471 = vld [vmem:[%s2407 + $0x1f8] sm:$0xff]
    %2472 = vmatpush.msra.mxu0 %v2468
    %2473 = vmatpush.msra.mxu0 %v2464
    %2474 = vmatpush.msra.mxu0 %v2460
    %2475 = vmatpush.msra.mxu0 %v2456
    %2476 = vmatpush.msra.mxu0 %v2452
    %2477 = vmatpush.msra.mxu0 %v2448
    %2478 = vmatpush.msra.mxu0 %v2444
    %2479 = vmatpush.msra.mxu0 %v2440
    %2480 = vmatpush.msra.mxu0 %v2436
    %2481 = vmatpush.msra.mxu0 %v2432
    %2482 = vmatpush.msra.mxu0 %v2428
    %2483 = vmatpush.msra.mxu0 %v2424
    %2484 = vmatpush.msra.mxu0 %v2420
    %2485 = vmatpush.msra.mxu0 %v2416
    %2486 = vmatpush.msra.mxu0 %v2412
    %2487 = vmatpush.msra.mxu0 %v2408
    %2488 = vmatmul.f32.gmra.mxu0 0.0
    %v2489 = vpop.f32.mrf.mxu0
    %v2490 = vadd.f32 0.0, %v2489
    %2491 = vdwg.mxu0
    %2492 = vmatpush.msra.mxu0 %v2469
    %2493 = vmatpush.msra.mxu0 %v2465
    %2494 = vmatpush.msra.mxu0 %v2461
    %2495 = vmatpush.msra.mxu0 %v2457
    %2496 = vmatpush.msra.mxu0 %v2453
    %2497 = vmatpush.msra.mxu0 %v2449
    %2498 = vmatpush.msra.mxu0 %v2445
    %2499 = vmatpush.msra.mxu0 %v2441
    %2500 = vmatpush.msra.mxu0 %v2437
    %2501 = vmatpush.msra.mxu0 %v2433
    %2502 = vmatpush.msra.mxu0 %v2429
    %2503 = vmatpush.msra.mxu0 %v2425
    %2504 = vmatpush.msra.mxu0 %v2421
    %2505 = vmatpush.msra.mxu0 %v2417
    %2506 = vmatpush.msra.mxu0 %v2413
    %2507 = vmatpush.msra.mxu0 %v2409
    %2508 = vmatmul.f32.gmra.mxu0 0.0
    %v2509 = vpop.f32.mrf.mxu0
    %v2510 = vadd.f32 0.0, %v2509
    %2511 = vdwg.mxu0
    %2512 = vmatpush.msra.mxu0 %v2470
    %2513 = vmatpush.msra.mxu0 %v2466
    %2514 = vmatpush.msra.mxu0 %v2462
    %2515 = vmatpush.msra.mxu0 %v2458
    %2516 = vmatpush.msra.mxu0 %v2454
    %2517 = vmatpush.msra.mxu0 %v2450
    %2518 = vmatpush.msra.mxu0 %v2446
    %2519 = vmatpush.msra.mxu0 %v2442
    %2520 = vmatpush.msra.mxu0 %v2438
    %2521 = vmatpush.msra.mxu0 %v2434
    %2522 = vmatpush.msra.mxu0 %v2430
    %2523 = vmatpush.msra.mxu0 %v2426
    %2524 = vmatpush.msra.mxu0 %v2422
    %2525 = vmatpush.msra.mxu0 %v2418
    %2526 = vmatpush.msra.mxu0 %v2414
    %2527 = vmatpush.msra.mxu0 %v2410
    %2528 = vmatmul.f32.gmra.mxu0 0.0
    %v2529 = vpop.f32.mrf.mxu0
    %v2530 = vadd.f32 0.0, %v2529
    %2531 = vdwg.mxu0
    %2532 = vmatpush.msra.mxu0 %v2471
    %2533 = vmatpush.msra.mxu0 %v2467
    %2534 = vmatpush.msra.mxu0 %v2463
    %2535 = vmatpush.msra.mxu0 %v2459
    %2536 = vmatpush.msra.mxu0 %v2455
    %2537 = vmatpush.msra.mxu0 %v2451
    %2538 = vmatpush.msra.mxu0 %v2447
    %2539 = vmatpush.msra.mxu0 %v2443
    %2540 = vmatpush.msra.mxu0 %v2439
    %2541 = vmatpush.msra.mxu0 %v2435
    %2542 = vmatpush.msra.mxu0 %v2431
    %2543 = vmatpush.msra.mxu0 %v2427
    %2544 = vmatpush.msra.mxu0 %v2423
    %2545 = vmatpush.msra.mxu0 %v2419
    %2546 = vmatpush.msra.mxu0 %v2415
    %2547 = vmatpush.msra.mxu0 %v2411
    %2548 = vmatmul.f32.gmra.mxu0 0.0
    %v2549 = vpop.f32.mrf.mxu0
    %v2550 = vadd.f32 0.0, %v2549
    %2551 = vdwg.mxu0
    %v2552 = vadd.f32 %v2403, %v2490
    %v2553 = vadd.f32 %v2404, %v2510
    %v2554 = vadd.f32 %v2405, %v2530
    %v2555 = vadd.f32 %v2406, %v2550
    %v2556 = vxor.u32 %v2552, 2147483648
    %v2557 = vmul.f32 %v2556, 1.442695
    %v2558 = vpow.pop %v2557
    %v2559 = vadd.f32 %v2558, 1.0
    %v2560 = vrcp.pop %v2559
    %v2561 = vmul.f32 %v2559, %v2560
    %v2562 = vsub.f32 1.0, %v2561
    %v2563 = vmul.f32 %v2560, %v2562
    %v2564 = vadd.f32 %v2560, %v2563
    %vm2565 = vweird.f32 %v2559
    %vm2566 = vweird.f32 %v2560
    %vm2567 = vmor %vm2565, %vm2566
    %v2568 = vsel %vm2567, %v2560, %v2564
    %v2569 = vand.u32 2147483647, %v2559
    %vm2570 = vcmp.eq.f32.partialorder %v2569, 8.507059e+37
    %v2571 = vand.u32 %v2559, 2147483648
    %v2572 = vor.u32 1.1754944e-38, %v2571
    %v2573 = vsel %vm2570, %v2572, %v2568
    %v2574 = vmul.f32 1.0, %v2573
    %v2575 = vxor.u32 %v2553, 2147483648
    %v2576 = vmul.f32 %v2575, 1.442695
    %v2577 = vpow.pop %v2576
    %v2578 = vadd.f32 %v2577, 1.0
    %v2579 = vrcp.pop %v2578
    %v2580 = vmul.f32 %v2578, %v2579
    %v2581 = vsub.f32 1.0, %v2580
    %v2582 = vmul.f32 %v2579, %v2581
    %v2583 = vadd.f32 %v2579, %v2582
    %vm2584 = vweird.f32 %v2578
    %vm2585 = vweird.f32 %v2579
    %vm2586 = vmor %vm2584, %vm2585
    %v2587 = vsel %vm2586, %v2579, %v2583
    %v2588 = vand.u32 2147483647, %v2578
    %vm2589 = vcmp.eq.f32.partialorder %v2588, 8.507059e+37
    %v2590 = vand.u32 %v2578, 2147483648
    %v2591 = vor.u32 1.1754944e-38, %v2590
    %v2592 = vsel %vm2589, %v2591, %v2587
    %v2593 = vmul.f32 1.0, %v2592
    %v2594 = vtanh.pop %v2554
    %v2595 = vxor.u32 %v2555, 2147483648
    %v2596 = vmul.f32 %v2595, 1.442695
    %v2597 = vpow.pop %v2596
    %v2598 = vadd.f32 %v2597, 1.0
    %v2599 = vrcp.pop %v2598
    %v2600 = vmul.f32 %v2598, %v2599
    %v2601 = vsub.f32 1.0, %v2600
    %v2602 = vmul.f32 %v2599, %v2601
    %v2603 = vadd.f32 %v2599, %v2602
    %vm2604 = vweird.f32 %v2598
    %vm2605 = vweird.f32 %v2599
    %vm2606 = vmor %vm2604, %vm2605
    %v2607 = vsel %vm2606, %v2599, %v2603
    %v2608 = vand.u32 2147483647, %v2598
    %vm2609 = vcmp.eq.f32.partialorder %v2608, 8.507059e+37
    %v2610 = vand.u32 %v2598, 2147483648
    %v2611 = vor.u32 1.1754944e-38, %v2610
    %v2612 = vsel %vm2609, %v2611, %v2607
    %v2613 = vmul.f32 1.0, %v2612
    %v2614 = vmul.f32 %v2593, 0.0
    %v2615 = vmul.f32 %v2574, %v2594
    %v2616 = vadd.f32 %v2614, %v2615
    %v2617 = vtanh.pop %v2616
    %v2618 = vmul.f32 %v2613, %v2617
    %v2619 = vld [vmem:[%s583] sm:$0xff]
    %v2620 = vld [vmem:[%s583 + $0x8] sm:$0xff]
    %v2621 = vld [vmem:[%s583 + $0x10] sm:$0xff]
    %v2622 = vld [vmem:[%s583 + $0x18] sm:$0xff]
    %2623 = vmatpush.msra.mxu0 %v2468
    %2624 = vmatpush.msra.mxu0 %v2464
    %2625 = vmatpush.msra.mxu0 %v2460
    %2626 = vmatpush.msra.mxu0 %v2456
    %2627 = vmatpush.msra.mxu0 %v2452
    %2628 = vmatpush.msra.mxu0 %v2448
    %2629 = vmatpush.msra.mxu0 %v2444
    %2630 = vmatpush.msra.mxu0 %v2440
    %2631 = vmatpush.msra.mxu0 %v2436
    %2632 = vmatpush.msra.mxu0 %v2432
    %2633 = vmatpush.msra.mxu0 %v2428
    %2634 = vmatpush.msra.mxu0 %v2424
    %2635 = vmatpush.msra.mxu0 %v2420
    %2636 = vmatpush.msra.mxu0 %v2416
    %2637 = vmatpush.msra.mxu0 %v2412
    %2638 = vmatpush.msra.mxu0 %v2408
    %2639 = vmatmul.f32.gmra.mxu0 %v2618
    %v2640 = vpop.f32.mrf.mxu0
    %v2641 = vadd.f32 0.0, %v2640
    %2642 = vdwg.mxu0
    %2643 = vmatpush.msra.mxu0 %v2469
    %2644 = vmatpush.msra.mxu0 %v2465
    %2645 = vmatpush.msra.mxu0 %v2461
    %2646 = vmatpush.msra.mxu0 %v2457
    %2647 = vmatpush.msra.mxu0 %v2453
    %2648 = vmatpush.msra.mxu0 %v2449
    %2649 = vmatpush.msra.mxu0 %v2445
    %2650 = vmatpush.msra.mxu0 %v2441
    %2651 = vmatpush.msra.mxu0 %v2437
    %2652 = vmatpush.msra.mxu0 %v2433
    %2653 = vmatpush.msra.mxu0 %v2429
    %2654 = vmatpush.msra.mxu0 %v2425
    %2655 = vmatpush.msra.mxu0 %v2421
    %2656 = vmatpush.msra.mxu0 %v2417
    %2657 = vmatpush.msra.mxu0 %v2413
    %2658 = vmatpush.msra.mxu0 %v2409
    %2659 = vmatmul.f32.gmra.mxu0 %v2618
    %v2660 = vpop.f32.mrf.mxu0
    %v2661 = vadd.f32 0.0, %v2660
    %2662 = vdwg.mxu0
    %2663 = vmatpush.msra.mxu0 %v2470
    %2664 = vmatpush.msra.mxu0 %v2466
    %2665 = vmatpush.msra.mxu0 %v2462
    %2666 = vmatpush.msra.mxu0 %v2458
    %2667 = vmatpush.msra.mxu0 %v2454
    %2668 = vmatpush.msra.mxu0 %v2450
    %2669 = vmatpush.msra.mxu0 %v2446
    %2670 = vmatpush.msra.mxu0 %v2442
    %2671 = vmatpush.msra.mxu0 %v2438
    %2672 = vmatpush.msra.mxu0 %v2434
    %2673 = vmatpush.msra.mxu0 %v2430
    %2674 = vmatpush.msra.mxu0 %v2426
    %2675 = vmatpush.msra.mxu0 %v2422
    %2676 = vmatpush.msra.mxu0 %v2418
    %2677 = vmatpush.msra.mxu0 %v2414
    %2678 = vmatpush.msra.mxu0 %v2410
    %2679 = vmatmul.f32.gmra.mxu0 %v2618
    %v2680 = vpop.f32.mrf.mxu0
    %v2681 = vadd.f32 0.0, %v2680
    %2682 = vdwg.mxu0
    %2683 = vmatpush.msra.mxu0 %v2471
    %2684 = vmatpush.msra.mxu0 %v2467
    %2685 = vmatpush.msra.mxu0 %v2463
    %2686 = vmatpush.msra.mxu0 %v2459
    %2687 = vmatpush.msra.mxu0 %v2455
    %2688 = vmatpush.msra.mxu0 %v2451
    %2689 = vmatpush.msra.mxu0 %v2447
    %2690 = vmatpush.msra.mxu0 %v2443
    %2691 = vmatpush.msra.mxu0 %v2439
    %2692 = vmatpush.msra.mxu0 %v2435
    %2693 = vmatpush.msra.mxu0 %v2431
    %2694 = vmatpush.msra.mxu0 %v2427
    %2695 = vmatpush.msra.mxu0 %v2423
    %2696 = vmatpush.msra.mxu0 %v2419
    %2697 = vmatpush.msra.mxu0 %v2415
    %2698 = vmatpush.msra.mxu0 %v2411
    %2699 = vmatmul.f32.gmra.mxu0 %v2618
    %v2700 = vpop.f32.mrf.mxu0
    %v2701 = vadd.f32 0.0, %v2700
    %2702 = vdwg.mxu0
    %v2703 = vadd.f32 %v2619, %v2641
    %v2704 = vadd.f32 %v2620, %v2661
    %v2705 = vadd.f32 %v2621, %v2681
    %v2706 = vadd.f32 %v2622, %v2701
    %v2707 = vxor.u32 %v2703, 2147483648
    %v2708 = vmul.f32 %v2707, 1.442695
    %v2709 = vpow.pop %v2708
    %v2710 = vadd.f32 %v2709, 1.0
    %v2711 = vrcp.pop %v2710
    %v2712 = vmul.f32 %v2710, %v2711
    %v2713 = vsub.f32 1.0, %v2712
    %v2714 = vmul.f32 %v2711, %v2713
    %v2715 = vadd.f32 %v2711, %v2714
    %vm2716 = vweird.f32 %v2710
    %vm2717 = vweird.f32 %v2711
    %vm2718 = vmor %vm2716, %vm2717
    %v2719 = vsel %vm2718, %v2711, %v2715
    %v2720 = vand.u32 2147483647, %v2710
    %vm2721 = vcmp.eq.f32.partialorder %v2720, 8.507059e+37
    %v2722 = vand.u32 %v2710, 2147483648
    %v2723 = vor.u32 1.1754944e-38, %v2722
    %v2724 = vsel %vm2721, %v2723, %v2719
    %v2725 = vmul.f32 1.0, %v2724
    %v2726 = vxor.u32 %v2704, 2147483648
    %v2727 = vmul.f32 %v2726, 1.442695
    %v2728 = vpow.pop %v2727
    %v2729 = vadd.f32 %v2728, 1.0
    %v2730 = vrcp.pop %v2729
    %v2731 = vmul.f32 %v2729, %v2730
    %v2732 = vsub.f32 1.0, %v2731
    %v2733 = vmul.f32 %v2730, %v2732
    %v2734 = vadd.f32 %v2730, %v2733
    %vm2735 = vweird.f32 %v2729
    %vm2736 = vweird.f32 %v2730
    %vm2737 = vmor %vm2735, %vm2736
    %v2738 = vsel %vm2737, %v2730, %v2734
    %v2739 = vand.u32 2147483647, %v2729
    %vm2740 = vcmp.eq.f32.partialorder %v2739, 8.507059e+37
    %v2741 = vand.u32 %v2729, 2147483648
    %v2742 = vor.u32 1.1754944e-38, %v2741
    %v2743 = vsel %vm2740, %v2742, %v2738
    %v2744 = vmul.f32 1.0, %v2743
    %v2745 = vtanh.pop %v2705
    %v2746 = vxor.u32 %v2706, 2147483648
    %v2747 = vmul.f32 %v2746, 1.442695
    %v2748 = vpow.pop %v2747
    %v2749 = vadd.f32 %v2748, 1.0
    %v2750 = vrcp.pop %v2749
    %v2751 = vmul.f32 %v2749, %v2750
    %v2752 = vsub.f32 1.0, %v2751
    %v2753 = vmul.f32 %v2750, %v2752
    %v2754 = vadd.f32 %v2750, %v2753
    %vm2755 = vweird.f32 %v2749
    %vm2756 = vweird.f32 %v2750
    %vm2757 = vmor %vm2755, %vm2756
    %v2758 = vsel %vm2757, %v2750, %v2754
    %v2759 = vand.u32 2147483647, %v2749
    %vm2760 = vcmp.eq.f32.partialorder %v2759, 8.507059e+37
    %v2761 = vand.u32 %v2749, 2147483648
    %v2762 = vor.u32 1.1754944e-38, %v2761
    %v2763 = vsel %vm2760, %v2762, %v2758
    %v2764 = vmul.f32 1.0, %v2763
    %v2765 = vmul.f32 %v2744, %v2616
    %v2766 = vmul.f32 %v2725, %v2745
    %v2767 = vadd.f32 %v2765, %v2766
    %v2768 = vtanh.pop %v2767
    %v2769 = vmul.f32 %v2764, %v2768
    %v2770 = vld [vmem:[%s803] sm:$0xff]
    %v2771 = vld [vmem:[%s803 + $0x8] sm:$0xff]
    %v2772 = vld [vmem:[%s803 + $0x10] sm:$0xff]
    %v2773 = vld [vmem:[%s803 + $0x18] sm:$0xff]
    %2774 = vmatpush.msra.mxu0 %v2468
    %2775 = vmatpush.msra.mxu0 %v2464
    %2776 = vmatpush.msra.mxu0 %v2460
    %2777 = vmatpush.msra.mxu0 %v2456
    %2778 = vmatpush.msra.mxu0 %v2452
    %2779 = vmatpush.msra.mxu0 %v2448
    %2780 = vmatpush.msra.mxu0 %v2444
    %2781 = vmatpush.msra.mxu0 %v2440
    %2782 = vmatpush.msra.mxu0 %v2436
    %2783 = vmatpush.msra.mxu0 %v2432
    %2784 = vmatpush.msra.mxu0 %v2428
    %2785 = vmatpush.msra.mxu0 %v2424
    %2786 = vmatpush.msra.mxu0 %v2420
    %2787 = vmatpush.msra.mxu0 %v2416
    %2788 = vmatpush.msra.mxu0 %v2412
    %2789 = vmatpush.msra.mxu0 %v2408
    %2790 = vmatmul.f32.gmra.mxu0 %v2769
    %v2791 = vpop.f32.mrf.mxu0
    %v2792 = vadd.f32 0.0, %v2791
    %2793 = vdwg.mxu0
    %2794 = vmatpush.msra.mxu0 %v2469
    %2795 = vmatpush.msra.mxu0 %v2465
    %2796 = vmatpush.msra.mxu0 %v2461
    %2797 = vmatpush.msra.mxu0 %v2457
    %2798 = vmatpush.msra.mxu0 %v2453
    %2799 = vmatpush.msra.mxu0 %v2449
    %2800 = vmatpush.msra.mxu0 %v2445
    %2801 = vmatpush.msra.mxu0 %v2441
    %2802 = vmatpush.msra.mxu0 %v2437
    %2803 = vmatpush.msra.mxu0 %v2433
    %2804 = vmatpush.msra.mxu0 %v2429
    %2805 = vmatpush.msra.mxu0 %v2425
    %2806 = vmatpush.msra.mxu0 %v2421
    %2807 = vmatpush.msra.mxu0 %v2417
    %2808 = vmatpush.msra.mxu0 %v2413
    %2809 = vmatpush.msra.mxu0 %v2409
    %2810 = vmatmul.f32.gmra.mxu0 %v2769
    %v2811 = vpop.f32.mrf.mxu0
    %v2812 = vadd.f32 0.0, %v2811
    %2813 = vdwg.mxu0
    %2814 = vmatpush.msra.mxu0 %v2470
    %2815 = vmatpush.msra.mxu0 %v2466
    %2816 = vmatpush.msra.mxu0 %v2462
    %2817 = vmatpush.msra.mxu0 %v2458
    %2818 = vmatpush.msra.mxu0 %v2454
    %2819 = vmatpush.msra.mxu0 %v2450
    %2820 = vmatpush.msra.mxu0 %v2446
    %2821 = vmatpush.msra.mxu0 %v2442
    %2822 = vmatpush.msra.mxu0 %v2438
    %2823 = vmatpush.msra.mxu0 %v2434
    %2824 = vmatpush.msra.mxu0 %v2430
    %2825 = vmatpush.msra.mxu0 %v2426
    %2826 = vmatpush.msra.mxu0 %v2422
    %2827 = vmatpush.msra.mxu0 %v2418
    %2828 = vmatpush.msra.mxu0 %v2414
    %2829 = vmatpush.msra.mxu0 %v2410
    %2830 = vmatmul.f32.gmra.mxu0 %v2769
    %v2831 = vpop.f32.mrf.mxu0
    %v2832 = vadd.f32 0.0, %v2831
    %2833 = vdwg.mxu0
    %2834 = vmatpush.msra.mxu0 %v2471
    %2835 = vmatpush.msra.mxu0 %v2467
    %2836 = vmatpush.msra.mxu0 %v2463
    %2837 = vmatpush.msra.mxu0 %v2459
    %2838 = vmatpush.msra.mxu0 %v2455
    %2839 = vmatpush.msra.mxu0 %v2451
    %2840 = vmatpush.msra.mxu0 %v2447
    %2841 = vmatpush.msra.mxu0 %v2443
    %2842 = vmatpush.msra.mxu0 %v2439
    %2843 = vmatpush.msra.mxu0 %v2435
    %2844 = vmatpush.msra.mxu0 %v2431
    %2845 = vmatpush.msra.mxu0 %v2427
    %2846 = vmatpush.msra.mxu0 %v2423
    %2847 = vmatpush.msra.mxu0 %v2419
    %2848 = vmatpush.msra.mxu0 %v2415
    %2849 = vmatpush.msra.mxu0 %v2411
    %2850 = vmatmul.f32.gmra.mxu0 %v2769
    %v2851 = vpop.f32.mrf.mxu0
    %v2852 = vadd.f32 0.0, %v2851
    %2853 = vdwg.mxu0
    %v2854 = vadd.f32 %v2770, %v2792
    %v2855 = vadd.f32 %v2771, %v2812
    %v2856 = vadd.f32 %v2772, %v2832
    %v2857 = vadd.f32 %v2773, %v2852
    %v2858 = vxor.u32 %v2854, 2147483648
    %v2859 = vmul.f32 %v2858, 1.442695
    %v2860 = vpow.pop %v2859
    %v2861 = vadd.f32 %v2860, 1.0
    %v2862 = vrcp.pop %v2861
    %v2863 = vmul.f32 %v2861, %v2862
    %v2864 = vsub.f32 1.0, %v2863
    %v2865 = vmul.f32 %v2862, %v2864
    %v2866 = vadd.f32 %v2862, %v2865
    %vm2867 = vweird.f32 %v2861
    %vm2868 = vweird.f32 %v2862
    %vm2869 = vmor %vm2867, %vm2868
    %v2870 = vsel %vm2869, %v2862, %v2866
    %v2871 = vand.u32 2147483647, %v2861
    %vm2872 = vcmp.eq.f32.partialorder %v2871, 8.507059e+37
    %v2873 = vand.u32 %v2861, 2147483648
    %v2874 = vor.u32 1.1754944e-38, %v2873
    %v2875 = vsel %vm2872, %v2874, %v2870
    %v2876 = vmul.f32 1.0, %v2875
    %v2877 = vxor.u32 %v2855, 2147483648
    %v2878 = vmul.f32 %v2877, 1.442695
    %v2879 = vpow.pop %v2878
    %v2880 = vadd.f32 %v2879, 1.0
    %v2881 = vrcp.pop %v2880
    %v2882 = vmul.f32 %v2880, %v2881
    %v2883 = vsub.f32 1.0, %v2882
    %v2884 = vmul.f32 %v2881, %v2883
    %v2885 = vadd.f32 %v2881, %v2884
    %vm2886 = vweird.f32 %v2880
    %vm2887 = vweird.f32 %v2881
    %vm2888 = vmor %vm2886, %vm2887
    %v2889 = vsel %vm2888, %v2881, %v2885
    %v2890 = vand.u32 2147483647, %v2880
    %vm2891 = vcmp.eq.f32.partialorder %v2890, 8.507059e+37
    %v2892 = vand.u32 %v2880, 2147483648
    %v2893 = vor.u32 1.1754944e-38, %v2892
    %v2894 = vsel %vm2891, %v2893, %v2889
    %v2895 = vmul.f32 1.0, %v2894
    %v2896 = vtanh.pop %v2856
    %v2897 = vxor.u32 %v2857, 2147483648
    %v2898 = vmul.f32 %v2897, 1.442695
    %v2899 = vpow.pop %v2898
    %v2900 = vadd.f32 %v2899, 1.0
    %v2901 = vrcp.pop %v2900
    %v2902 = vmul.f32 %v2900, %v2901
    %v2903 = vsub.f32 1.0, %v2902
    %v2904 = vmul.f32 %v2901, %v2903
    %v2905 = vadd.f32 %v2901, %v2904
    %vm2906 = vweird.f32 %v2900
    %vm2907 = vweird.f32 %v2901
    %vm2908 = vmor %vm2906, %vm2907
    %v2909 = vsel %vm2908, %v2901, %v2905
    %v2910 = vand.u32 2147483647, %v2900
    %vm2911 = vcmp.eq.f32.partialorder %v2910, 8.507059e+37
    %v2912 = vand.u32 %v2900, 2147483648
    %v2913 = vor.u32 1.1754944e-38, %v2912
    %v2914 = vsel %vm2911, %v2913, %v2909
    %v2915 = vmul.f32 1.0, %v2914
    %v2916 = vmul.f32 %v2895, %v2767
    %v2917 = vmul.f32 %v2876, %v2896
    %v2918 = vadd.f32 %v2916, %v2917
    %v2919 = vtanh.pop %v2918
    %v2920 = vmul.f32 %v2915, %v2919
    %v2921 = vld [vmem:[%s1023] sm:$0xff]
    %v2922 = vld [vmem:[%s1023 + $0x8] sm:$0xff]
    %v2923 = vld [vmem:[%s1023 + $0x10] sm:$0xff]
    %v2924 = vld [vmem:[%s1023 + $0x18] sm:$0xff]
    %2925 = vmatpush.msra.mxu0 %v2468
    %2926 = vmatpush.msra.mxu0 %v2464
    %2927 = vmatpush.msra.mxu0 %v2460
    %2928 = vmatpush.msra.mxu0 %v2456
    %2929 = vmatpush.msra.mxu0 %v2452
    %2930 = vmatpush.msra.mxu0 %v2448
    %2931 = vmatpush.msra.mxu0 %v2444
    %2932 = vmatpush.msra.mxu0 %v2440
    %2933 = vmatpush.msra.mxu0 %v2436
    %2934 = vmatpush.msra.mxu0 %v2432
    %2935 = vmatpush.msra.mxu0 %v2428
    %2936 = vmatpush.msra.mxu0 %v2424
    %2937 = vmatpush.msra.mxu0 %v2420
    %2938 = vmatpush.msra.mxu0 %v2416
    %2939 = vmatpush.msra.mxu0 %v2412
    %2940 = vmatpush.msra.mxu0 %v2408
    %2941 = vmatmul.f32.gmra.mxu0 %v2920
    %v2942 = vpop.f32.mrf.mxu0
    %v2943 = vadd.f32 0.0, %v2942
    %2944 = vdwg.mxu0
    %2945 = vmatpush.msra.mxu0 %v2469
    %2946 = vmatpush.msra.mxu0 %v2465
    %2947 = vmatpush.msra.mxu0 %v2461
    %2948 = vmatpush.msra.mxu0 %v2457
    %2949 = vmatpush.msra.mxu0 %v2453
    %2950 = vmatpush.msra.mxu0 %v2449
    %2951 = vmatpush.msra.mxu0 %v2445
    %2952 = vmatpush.msra.mxu0 %v2441
    %2953 = vmatpush.msra.mxu0 %v2437
    %2954 = vmatpush.msra.mxu0 %v2433
    %2955 = vmatpush.msra.mxu0 %v2429
    %2956 = vmatpush.msra.mxu0 %v2425
    %2957 = vmatpush.msra.mxu0 %v2421
    %2958 = vmatpush.msra.mxu0 %v2417
    %2959 = vmatpush.msra.mxu0 %v2413
    %2960 = vmatpush.msra.mxu0 %v2409
    %2961 = vmatmul.f32.gmra.mxu0 %v2920
    %v2962 = vpop.f32.mrf.mxu0
    %v2963 = vadd.f32 0.0, %v2962
    %2964 = vdwg.mxu0
    %2965 = vmatpush.msra.mxu0 %v2470
    %2966 = vmatpush.msra.mxu0 %v2466
    %2967 = vmatpush.msra.mxu0 %v2462
    %2968 = vmatpush.msra.mxu0 %v2458
    %2969 = vmatpush.msra.mxu0 %v2454
    %2970 = vmatpush.msra.mxu0 %v2450
    %2971 = vmatpush.msra.mxu0 %v2446
    %2972 = vmatpush.msra.mxu0 %v2442
    %2973 = vmatpush.msra.mxu0 %v2438
    %2974 = vmatpush.msra.mxu0 %v2434
    %2975 = vmatpush.msra.mxu0 %v2430
    %2976 = vmatpush.msra.mxu0 %v2426
    %2977 = vmatpush.msra.mxu0 %v2422
    %2978 = vmatpush.msra.mxu0 %v2418
    %2979 = vmatpush.msra.mxu0 %v2414
    %2980 = vmatpush.msra.mxu0 %v2410
    %2981 = vmatmul.f32.gmra.mxu0 %v2920
    %v2982 = vpop.f32.mrf.mxu0
    %v2983 = vadd.f32 0.0, %v2982
    %2984 = vdwg.mxu0
    %2985 = vmatpush.msra.mxu0 %v2471
    %2986 = vmatpush.msra.mxu0 %v2467
    %2987 = vmatpush.msra.mxu0 %v2463
    %2988 = vmatpush.msra.mxu0 %v2459
    %2989 = vmatpush.msra.mxu0 %v2455
    %2990 = vmatpush.msra.mxu0 %v2451
    %2991 = vmatpush.msra.mxu0 %v2447
    %2992 = vmatpush.msra.mxu0 %v2443
    %2993 = vmatpush.msra.mxu0 %v2439
    %2994 = vmatpush.msra.mxu0 %v2435
    %2995 = vmatpush.msra.mxu0 %v2431
    %2996 = vmatpush.msra.mxu0 %v2427
    %2997 = vmatpush.msra.mxu0 %v2423
    %2998 = vmatpush.msra.mxu0 %v2419
    %2999 = vmatpush.msra.mxu0 %v2415
    %3000 = vmatpush.msra.mxu0 %v2411
    %3001 = vmatmul.f32.gmra.mxu0 %v2920
    %v3002 = vpop.f32.mrf.mxu0
    %v3003 = vadd.f32 0.0, %v3002
    %3004 = vdwg.mxu0
    %v3005 = vadd.f32 %v2921, %v2943
    %v3006 = vadd.f32 %v2922, %v2963
    %v3007 = vadd.f32 %v2923, %v2983
    %v3008 = vadd.f32 %v2924, %v3003
    %v3009 = vxor.u32 %v3005, 2147483648
    %v3010 = vmul.f32 %v3009, 1.442695
    %v3011 = vpow.pop %v3010
    %v3012 = vadd.f32 %v3011, 1.0
    %v3013 = vrcp.pop %v3012
    %v3014 = vmul.f32 %v3012, %v3013
    %v3015 = vsub.f32 1.0, %v3014
    %v3016 = vmul.f32 %v3013, %v3015
    %v3017 = vadd.f32 %v3013, %v3016
    %vm3018 = vweird.f32 %v3012
    %vm3019 = vweird.f32 %v3013
    %vm3020 = vmor %vm3018, %vm3019
    %v3021 = vsel %vm3020, %v3013, %v3017
    %v3022 = vand.u32 2147483647, %v3012
    %vm3023 = vcmp.eq.f32.partialorder %v3022, 8.507059e+37
    %v3024 = vand.u32 %v3012, 2147483648
    %v3025 = vor.u32 1.1754944e-38, %v3024
    %v3026 = vsel %vm3023, %v3025, %v3021
    %v3027 = vmul.f32 1.0, %v3026
    %v3028 = vxor.u32 %v3006, 2147483648
    %v3029 = vmul.f32 %v3028, 1.442695
    %v3030 = vpow.pop %v3029
    %v3031 = vadd.f32 %v3030, 1.0
    %v3032 = vrcp.pop %v3031
    %v3033 = vmul.f32 %v3031, %v3032
    %v3034 = vsub.f32 1.0, %v3033
    %v3035 = vmul.f32 %v3032, %v3034
    %v3036 = vadd.f32 %v3032, %v3035
    %vm3037 = vweird.f32 %v3031
    %vm3038 = vweird.f32 %v3032
    %vm3039 = vmor %vm3037, %vm3038
    %v3040 = vsel %vm3039, %v3032, %v3036
    %v3041 = vand.u32 2147483647, %v3031
    %vm3042 = vcmp.eq.f32.partialorder %v3041, 8.507059e+37
    %v3043 = vand.u32 %v3031, 2147483648
    %v3044 = vor.u32 1.1754944e-38, %v3043
    %v3045 = vsel %vm3042, %v3044, %v3040
    %v3046 = vmul.f32 1.0, %v3045
    %v3047 = vtanh.pop %v3007
    %v3048 = vxor.u32 %v3008, 2147483648
    %v3049 = vmul.f32 %v3048, 1.442695
    %v3050 = vpow.pop %v3049
    %v3051 = vadd.f32 %v3050, 1.0
    %v3052 = vrcp.pop %v3051
    %v3053 = vmul.f32 %v3051, %v3052
    %v3054 = vsub.f32 1.0, %v3053
    %v3055 = vmul.f32 %v3052, %v3054
    %v3056 = vadd.f32 %v3052, %v3055
    %vm3057 = vweird.f32 %v3051
    %vm3058 = vweird.f32 %v3052
    %vm3059 = vmor %vm3057, %vm3058
    %v3060 = vsel %vm3059, %v3052, %v3056
    %v3061 = vand.u32 2147483647, %v3051
    %vm3062 = vcmp.eq.f32.partialorder %v3061, 8.507059e+37
    %v3063 = vand.u32 %v3051, 2147483648
    %v3064 = vor.u32 1.1754944e-38, %v3063
    %v3065 = vsel %vm3062, %v3064, %v3060
    %v3066 = vmul.f32 1.0, %v3065
    %v3067 = vmul.f32 %v3046, %v2918
    %v3068 = vmul.f32 %v3027, %v3047
    %v3069 = vadd.f32 %v3067, %v3068
    %v3070 = vtanh.pop %v3069
    %v3071 = vmul.f32 %v3066, %v3070
    %v3072 = vld [vmem:[%s1243] sm:$0xff]
    %v3073 = vld [vmem:[%s1243 + $0x8] sm:$0xff]
    %v3074 = vld [vmem:[%s1243 + $0x10] sm:$0xff]
    %v3075 = vld [vmem:[%s1243 + $0x18] sm:$0xff]
    %3076 = vmatpush.msra.mxu0 %v2468
    %3077 = vmatpush.msra.mxu0 %v2464
    %3078 = vmatpush.msra.mxu0 %v2460
    %3079 = vmatpush.msra.mxu0 %v2456
    %3080 = vmatpush.msra.mxu0 %v2452
    %3081 = vmatpush.msra.mxu0 %v2448
    %3082 = vmatpush.msra.mxu0 %v2444
    %3083 = vmatpush.msra.mxu0 %v2440
    %3084 = vmatpush.msra.mxu0 %v2436
    %3085 = vmatpush.msra.mxu0 %v2432
    %3086 = vmatpush.msra.mxu0 %v2428
    %3087 = vmatpush.msra.mxu0 %v2424
    %3088 = vmatpush.msra.mxu0 %v2420
    %3089 = vmatpush.msra.mxu0 %v2416
    %3090 = vmatpush.msra.mxu0 %v2412
    %3091 = vmatpush.msra.mxu0 %v2408
    %3092 = vmatmul.f32.gmra.mxu0 %v3071
    %v3093 = vpop.f32.mrf.mxu0
    %v3094 = vadd.f32 0.0, %v3093
    %3095 = vdwg.mxu0
    %3096 = vmatpush.msra.mxu0 %v2469
    %3097 = vmatpush.msra.mxu0 %v2465
    %3098 = vmatpush.msra.mxu0 %v2461
    %3099 = vmatpush.msra.mxu0 %v2457
    %3100 = vmatpush.msra.mxu0 %v2453
    %3101 = vmatpush.msra.mxu0 %v2449
    %3102 = vmatpush.msra.mxu0 %v2445
    %3103 = vmatpush.msra.mxu0 %v2441
    %3104 = vmatpush.msra.mxu0 %v2437
    %3105 = vmatpush.msra.mxu0 %v2433
    %3106 = vmatpush.msra.mxu0 %v2429
    %3107 = vmatpush.msra.mxu0 %v2425
    %3108 = vmatpush.msra.mxu0 %v2421
    %3109 = vmatpush.msra.mxu0 %v2417
    %3110 = vmatpush.msra.mxu0 %v2413
    %3111 = vmatpush.msra.mxu0 %v2409
    %3112 = vmatmul.f32.gmra.mxu0 %v3071
    %v3113 = vpop.f32.mrf.mxu0
    %v3114 = vadd.f32 0.0, %v3113
    %3115 = vdwg.mxu0
    %3116 = vmatpush.msra.mxu0 %v2470
    %3117 = vmatpush.msra.mxu0 %v2466
    %3118 = vmatpush.msra.mxu0 %v2462
    %3119 = vmatpush.msra.mxu0 %v2458
    %3120 = vmatpush.msra.mxu0 %v2454
    %3121 = vmatpush.msra.mxu0 %v2450
    %3122 = vmatpush.msra.mxu0 %v2446
    %3123 = vmatpush.msra.mxu0 %v2442
    %3124 = vmatpush.msra.mxu0 %v2438
    %3125 = vmatpush.msra.mxu0 %v2434
    %3126 = vmatpush.msra.mxu0 %v2430
    %3127 = vmatpush.msra.mxu0 %v2426
    %3128 = vmatpush.msra.mxu0 %v2422
    %3129 = vmatpush.msra.mxu0 %v2418
    %3130 = vmatpush.msra.mxu0 %v2414
    %3131 = vmatpush.msra.mxu0 %v2410
    %3132 = vmatmul.f32.gmra.mxu0 %v3071
    %v3133 = vpop.f32.mrf.mxu0
    %v3134 = vadd.f32 0.0, %v3133
    %3135 = vdwg.mxu0
    %3136 = vmatpush.msra.mxu0 %v2471
    %3137 = vmatpush.msra.mxu0 %v2467
    %3138 = vmatpush.msra.mxu0 %v2463
    %3139 = vmatpush.msra.mxu0 %v2459
    %3140 = vmatpush.msra.mxu0 %v2455
    %3141 = vmatpush.msra.mxu0 %v2451
    %3142 = vmatpush.msra.mxu0 %v2447
    %3143 = vmatpush.msra.mxu0 %v2443
    %3144 = vmatpush.msra.mxu0 %v2439
    %3145 = vmatpush.msra.mxu0 %v2435
    %3146 = vmatpush.msra.mxu0 %v2431
    %3147 = vmatpush.msra.mxu0 %v2427
    %3148 = vmatpush.msra.mxu0 %v2423
    %3149 = vmatpush.msra.mxu0 %v2419
    %3150 = vmatpush.msra.mxu0 %v2415
    %3151 = vmatpush.msra.mxu0 %v2411
    %3152 = vmatmul.f32.gmra.mxu0 %v3071
    %v3153 = vpop.f32.mrf.mxu0
    %v3154 = vadd.f32 0.0, %v3153
    %3155 = vdwg.mxu0
    %v3156 = vadd.f32 %v3072, %v3094
    %v3157 = vadd.f32 %v3073, %v3114
    %v3158 = vadd.f32 %v3074, %v3134
    %v3159 = vadd.f32 %v3075, %v3154
    %v3160 = vxor.u32 %v3156, 2147483648
    %v3161 = vmul.f32 %v3160, 1.442695
    %v3162 = vpow.pop %v3161
    %v3163 = vadd.f32 %v3162, 1.0
    %v3164 = vrcp.pop %v3163
    %v3165 = vmul.f32 %v3163, %v3164
    %v3166 = vsub.f32 1.0, %v3165
    %v3167 = vmul.f32 %v3164, %v3166
    %v3168 = vadd.f32 %v3164, %v3167
    %vm3169 = vweird.f32 %v3163
    %vm3170 = vweird.f32 %v3164
    %vm3171 = vmor %vm3169, %vm3170
    %v3172 = vsel %vm3171, %v3164, %v3168
    %v3173 = vand.u32 2147483647, %v3163
    %vm3174 = vcmp.eq.f32.partialorder %v3173, 8.507059e+37
    %v3175 = vand.u32 %v3163, 2147483648
    %v3176 = vor.u32 1.1754944e-38, %v3175
    %v3177 = vsel %vm3174, %v3176, %v3172
    %v3178 = vmul.f32 1.0, %v3177
    %v3179 = vxor.u32 %v3157, 2147483648
    %v3180 = vmul.f32 %v3179, 1.442695
    %v3181 = vpow.pop %v3180
    %v3182 = vadd.f32 %v3181, 1.0
    %v3183 = vrcp.pop %v3182
    %v3184 = vmul.f32 %v3182, %v3183
    %v3185 = vsub.f32 1.0, %v3184
    %v3186 = vmul.f32 %v3183, %v3185
    %v3187 = vadd.f32 %v3183, %v3186
    %vm3188 = vweird.f32 %v3182
    %vm3189 = vweird.f32 %v3183
    %vm3190 = vmor %vm3188, %vm3189
    %v3191 = vsel %vm3190, %v3183, %v3187
    %v3192 = vand.u32 2147483647, %v3182
    %vm3193 = vcmp.eq.f32.partialorder %v3192, 8.507059e+37
    %v3194 = vand.u32 %v3182, 2147483648
    %v3195 = vor.u32 1.1754944e-38, %v3194
    %v3196 = vsel %vm3193, %v3195, %v3191
    %v3197 = vmul.f32 1.0, %v3196
    %v3198 = vtanh.pop %v3158
    %v3199 = vxor.u32 %v3159, 2147483648
    %v3200 = vmul.f32 %v3199, 1.442695
    %v3201 = vpow.pop %v3200
    %v3202 = vadd.f32 %v3201, 1.0
    %v3203 = vrcp.pop %v3202
    %v3204 = vmul.f32 %v3202, %v3203
    %v3205 = vsub.f32 1.0, %v3204
    %v3206 = vmul.f32 %v3203, %v3205
    %v3207 = vadd.f32 %v3203, %v3206
    %vm3208 = vweird.f32 %v3202
    %vm3209 = vweird.f32 %v3203
    %vm3210 = vmor %vm3208, %vm3209
    %v3211 = vsel %vm3210, %v3203, %v3207
    %v3212 = vand.u32 2147483647, %v3202
    %vm3213 = vcmp.eq.f32.partialorder %v3212, 8.507059e+37
    %v3214 = vand.u32 %v3202, 2147483648
    %v3215 = vor.u32 1.1754944e-38, %v3214
    %v3216 = vsel %vm3213, %v3215, %v3211
    %v3217 = vmul.f32 1.0, %v3216
    %v3218 = vmul.f32 %v3197, %v3069
    %v3219 = vmul.f32 %v3178, %v3198
    %v3220 = vadd.f32 %v3218, %v3219
    %v3221 = vtanh.pop %v3220
    %v3222 = vmul.f32 %v3217, %v3221
    %v3223 = vld [vmem:[%s1463] sm:$0xff]
    %v3224 = vld [vmem:[%s1463 + $0x8] sm:$0xff]
    %v3225 = vld [vmem:[%s1463 + $0x10] sm:$0xff]
    %v3226 = vld [vmem:[%s1463 + $0x18] sm:$0xff]
    %3227 = vmatpush.msra.mxu0 %v2468
    %3228 = vmatpush.msra.mxu0 %v2464
    %3229 = vmatpush.msra.mxu0 %v2460
    %3230 = vmatpush.msra.mxu0 %v2456
    %3231 = vmatpush.msra.mxu0 %v2452
    %3232 = vmatpush.msra.mxu0 %v2448
    %3233 = vmatpush.msra.mxu0 %v2444
    %3234 = vmatpush.msra.mxu0 %v2440
    %3235 = vmatpush.msra.mxu0 %v2436
    %3236 = vmatpush.msra.mxu0 %v2432
    %3237 = vmatpush.msra.mxu0 %v2428
    %3238 = vmatpush.msra.mxu0 %v2424
    %3239 = vmatpush.msra.mxu0 %v2420
    %3240 = vmatpush.msra.mxu0 %v2416
    %3241 = vmatpush.msra.mxu0 %v2412
    %3242 = vmatpush.msra.mxu0 %v2408
    %3243 = vmatmul.f32.gmra.mxu0 %v3222
    %v3244 = vpop.f32.mrf.mxu0
    %v3245 = vadd.f32 0.0, %v3244
    %3246 = vdwg.mxu0
    %3247 = vmatpush.msra.mxu0 %v2469
    %3248 = vmatpush.msra.mxu0 %v2465
    %3249 = vmatpush.msra.mxu0 %v2461
    %3250 = vmatpush.msra.mxu0 %v2457
    %3251 = vmatpush.msra.mxu0 %v2453
    %3252 = vmatpush.msra.mxu0 %v2449
    %3253 = vmatpush.msra.mxu0 %v2445
    %3254 = vmatpush.msra.mxu0 %v2441
    %3255 = vmatpush.msra.mxu0 %v2437
    %3256 = vmatpush.msra.mxu0 %v2433
    %3257 = vmatpush.msra.mxu0 %v2429
    %3258 = vmatpush.msra.mxu0 %v2425
    %3259 = vmatpush.msra.mxu0 %v2421
    %3260 = vmatpush.msra.mxu0 %v2417
    %3261 = vmatpush.msra.mxu0 %v2413
    %3262 = vmatpush.msra.mxu0 %v2409
    %3263 = vmatmul.f32.gmra.mxu0 %v3222
    %v3264 = vpop.f32.mrf.mxu0
    %v3265 = vadd.f32 0.0, %v3264
    %3266 = vdwg.mxu0
    %3267 = vmatpush.msra.mxu0 %v2470
    %3268 = vmatpush.msra.mxu0 %v2466
    %3269 = vmatpush.msra.mxu0 %v2462
    %3270 = vmatpush.msra.mxu0 %v2458
    %3271 = vmatpush.msra.mxu0 %v2454
    %3272 = vmatpush.msra.mxu0 %v2450
    %3273 = vmatpush.msra.mxu0 %v2446
    %3274 = vmatpush.msra.mxu0 %v2442
    %3275 = vmatpush.msra.mxu0 %v2438
    %3276 = vmatpush.msra.mxu0 %v2434
    %3277 = vmatpush.msra.mxu0 %v2430
    %3278 = vmatpush.msra.mxu0 %v2426
    %3279 = vmatpush.msra.mxu0 %v2422
    %3280 = vmatpush.msra.mxu0 %v2418
    %3281 = vmatpush.msra.mxu0 %v2414
    %3282 = vmatpush.msra.mxu0 %v2410
    %3283 = vmatmul.f32.gmra.mxu0 %v3222
    %v3284 = vpop.f32.mrf.mxu0
    %v3285 = vadd.f32 0.0, %v3284
    %3286 = vdwg.mxu0
    %3287 = vmatpush.msra.mxu0 %v2471
    %3288 = vmatpush.msra.mxu0 %v2467
    %3289 = vmatpush.msra.mxu0 %v2463
    %3290 = vmatpush.msra.mxu0 %v2459
    %3291 = vmatpush.msra.mxu0 %v2455
    %3292 = vmatpush.msra.mxu0 %v2451
    %3293 = vmatpush.msra.mxu0 %v2447
    %3294 = vmatpush.msra.mxu0 %v2443
    %3295 = vmatpush.msra.mxu0 %v2439
    %3296 = vmatpush.msra.mxu0 %v2435
    %3297 = vmatpush.msra.mxu0 %v2431
    %3298 = vmatpush.msra.mxu0 %v2427
    %3299 = vmatpush.msra.mxu0 %v2423
    %3300 = vmatpush.msra.mxu0 %v2419
    %3301 = vmatpush.msra.mxu0 %v2415
    %3302 = vmatpush.msra.mxu0 %v2411
    %3303 = vmatmul.f32.gmra.mxu0 %v3222
    %v3304 = vpop.f32.mrf.mxu0
    %v3305 = vadd.f32 0.0, %v3304
    %3306 = vdwg.mxu0
    %v3307 = vadd.f32 %v3223, %v3245
    %v3308 = vadd.f32 %v3224, %v3265
    %v3309 = vadd.f32 %v3225, %v3285
    %v3310 = vadd.f32 %v3226, %v3305
    %v3311 = vxor.u32 %v3307, 2147483648
    %v3312 = vmul.f32 %v3311, 1.442695
    %v3313 = vpow.pop %v3312
    %v3314 = vadd.f32 %v3313, 1.0
    %v3315 = vrcp.pop %v3314
    %v3316 = vmul.f32 %v3314, %v3315
    %v3317 = vsub.f32 1.0, %v3316
    %v3318 = vmul.f32 %v3315, %v3317
    %v3319 = vadd.f32 %v3315, %v3318
    %vm3320 = vweird.f32 %v3314
    %vm3321 = vweird.f32 %v3315
    %vm3322 = vmor %vm3320, %vm3321
    %v3323 = vsel %vm3322, %v3315, %v3319
    %v3324 = vand.u32 2147483647, %v3314
    %vm3325 = vcmp.eq.f32.partialorder %v3324, 8.507059e+37
    %v3326 = vand.u32 %v3314, 2147483648
    %v3327 = vor.u32 1.1754944e-38, %v3326
    %v3328 = vsel %vm3325, %v3327, %v3323
    %v3329 = vmul.f32 1.0, %v3328
    %v3330 = vxor.u32 %v3308, 2147483648
    %v3331 = vmul.f32 %v3330, 1.442695
    %v3332 = vpow.pop %v3331
    %v3333 = vadd.f32 %v3332, 1.0
    %v3334 = vrcp.pop %v3333
    %v3335 = vmul.f32 %v3333, %v3334
    %v3336 = vsub.f32 1.0, %v3335
    %v3337 = vmul.f32 %v3334, %v3336
    %v3338 = vadd.f32 %v3334, %v3337
    %vm3339 = vweird.f32 %v3333
    %vm3340 = vweird.f32 %v3334
    %vm3341 = vmor %vm3339, %vm3340
    %v3342 = vsel %vm3341, %v3334, %v3338
    %v3343 = vand.u32 2147483647, %v3333
    %vm3344 = vcmp.eq.f32.partialorder %v3343, 8.507059e+37
    %v3345 = vand.u32 %v3333, 2147483648
    %v3346 = vor.u32 1.1754944e-38, %v3345
    %v3347 = vsel %vm3344, %v3346, %v3342
    %v3348 = vmul.f32 1.0, %v3347
    %v3349 = vtanh.pop %v3309
    %v3350 = vxor.u32 %v3310, 2147483648
    %v3351 = vmul.f32 %v3350, 1.442695
    %v3352 = vpow.pop %v3351
    %v3353 = vadd.f32 %v3352, 1.0
    %v3354 = vrcp.pop %v3353
    %v3355 = vmul.f32 %v3353, %v3354
    %v3356 = vsub.f32 1.0, %v3355
    %v3357 = vmul.f32 %v3354, %v3356
    %v3358 = vadd.f32 %v3354, %v3357
    %vm3359 = vweird.f32 %v3353
    %vm3360 = vweird.f32 %v3354
    %vm3361 = vmor %vm3359, %vm3360
    %v3362 = vsel %vm3361, %v3354, %v3358
    %v3363 = vand.u32 2147483647, %v3353
    %vm3364 = vcmp.eq.f32.partialorder %v3363, 8.507059e+37
    %v3365 = vand.u32 %v3353, 2147483648
    %v3366 = vor.u32 1.1754944e-38, %v3365
    %v3367 = vsel %vm3364, %v3366, %v3362
    %v3368 = vmul.f32 1.0, %v3367
    %v3369 = vmul.f32 %v3348, %v3220
    %v3370 = vmul.f32 %v3329, %v3349
    %v3371 = vadd.f32 %v3369, %v3370
    %v3372 = vtanh.pop %v3371
    %v3373 = vmul.f32 %v3368, %v3372
    %v3374 = vld [vmem:[%s1683] sm:$0xff]
    %v3375 = vld [vmem:[%s1683 + $0x8] sm:$0xff]
    %v3376 = vld [vmem:[%s1683 + $0x10] sm:$0xff]
    %v3377 = vld [vmem:[%s1683 + $0x18] sm:$0xff]
    %3378 = vmatpush.msra.mxu0 %v2468
    %3379 = vmatpush.msra.mxu0 %v2464
    %3380 = vmatpush.msra.mxu0 %v2460
    %3381 = vmatpush.msra.mxu0 %v2456
    %3382 = vmatpush.msra.mxu0 %v2452
    %3383 = vmatpush.msra.mxu0 %v2448
    %3384 = vmatpush.msra.mxu0 %v2444
    %3385 = vmatpush.msra.mxu0 %v2440
    %3386 = vmatpush.msra.mxu0 %v2436
    %3387 = vmatpush.msra.mxu0 %v2432
    %3388 = vmatpush.msra.mxu0 %v2428
    %3389 = vmatpush.msra.mxu0 %v2424
    %3390 = vmatpush.msra.mxu0 %v2420
    %3391 = vmatpush.msra.mxu0 %v2416
    %3392 = vmatpush.msra.mxu0 %v2412
    %3393 = vmatpush.msra.mxu0 %v2408
    %3394 = vmatmul.f32.gmra.mxu0 %v3373
    %v3395 = vpop.f32.mrf.mxu0
    %v3396 = vadd.f32 0.0, %v3395
    %3397 = vdwg.mxu0
    %3398 = vmatpush.msra.mxu0 %v2469
    %3399 = vmatpush.msra.mxu0 %v2465
    %3400 = vmatpush.msra.mxu0 %v2461
    %3401 = vmatpush.msra.mxu0 %v2457
    %3402 = vmatpush.msra.mxu0 %v2453
    %3403 = vmatpush.msra.mxu0 %v2449
    %3404 = vmatpush.msra.mxu0 %v2445
    %3405 = vmatpush.msra.mxu0 %v2441
    %3406 = vmatpush.msra.mxu0 %v2437
    %3407 = vmatpush.msra.mxu0 %v2433
    %3408 = vmatpush.msra.mxu0 %v2429
    %3409 = vmatpush.msra.mxu0 %v2425
    %3410 = vmatpush.msra.mxu0 %v2421
    %3411 = vmatpush.msra.mxu0 %v2417
    %3412 = vmatpush.msra.mxu0 %v2413
    %3413 = vmatpush.msra.mxu0 %v2409
    %3414 = vmatmul.f32.gmra.mxu0 %v3373
    %v3415 = vpop.f32.mrf.mxu0
    %v3416 = vadd.f32 0.0, %v3415
    %3417 = vdwg.mxu0
    %3418 = vmatpush.msra.mxu0 %v2470
    %3419 = vmatpush.msra.mxu0 %v2466
    %3420 = vmatpush.msra.mxu0 %v2462
    %3421 = vmatpush.msra.mxu0 %v2458
    %3422 = vmatpush.msra.mxu0 %v2454
    %3423 = vmatpush.msra.mxu0 %v2450
    %3424 = vmatpush.msra.mxu0 %v2446
    %3425 = vmatpush.msra.mxu0 %v2442
    %3426 = vmatpush.msra.mxu0 %v2438
    %3427 = vmatpush.msra.mxu0 %v2434
    %3428 = vmatpush.msra.mxu0 %v2430
    %3429 = vmatpush.msra.mxu0 %v2426
    %3430 = vmatpush.msra.mxu0 %v2422
    %3431 = vmatpush.msra.mxu0 %v2418
    %3432 = vmatpush.msra.mxu0 %v2414
    %3433 = vmatpush.msra.mxu0 %v2410
    %3434 = vmatmul.f32.gmra.mxu0 %v3373
    %v3435 = vpop.f32.mrf.mxu0
    %v3436 = vadd.f32 0.0, %v3435
    %3437 = vdwg.mxu0
    %3438 = vmatpush.msra.mxu0 %v2471
    %3439 = vmatpush.msra.mxu0 %v2467
    %3440 = vmatpush.msra.mxu0 %v2463
    %3441 = vmatpush.msra.mxu0 %v2459
    %3442 = vmatpush.msra.mxu0 %v2455
    %3443 = vmatpush.msra.mxu0 %v2451
    %3444 = vmatpush.msra.mxu0 %v2447
    %3445 = vmatpush.msra.mxu0 %v2443
    %3446 = vmatpush.msra.mxu0 %v2439
    %3447 = vmatpush.msra.mxu0 %v2435
    %3448 = vmatpush.msra.mxu0 %v2431
    %3449 = vmatpush.msra.mxu0 %v2427
    %3450 = vmatpush.msra.mxu0 %v2423
    %3451 = vmatpush.msra.mxu0 %v2419
    %3452 = vmatpush.msra.mxu0 %v2415
    %3453 = vmatpush.msra.mxu0 %v2411
    %3454 = vmatmul.f32.gmra.mxu0 %v3373
    %v3455 = vpop.f32.mrf.mxu0
    %v3456 = vadd.f32 0.0, %v3455
    %3457 = vdwg.mxu0
    %v3458 = vadd.f32 %v3374, %v3396
    %v3459 = vadd.f32 %v3375, %v3416
    %v3460 = vadd.f32 %v3376, %v3436
    %v3461 = vadd.f32 %v3377, %v3456
    %v3462 = vxor.u32 %v3458, 2147483648
    %v3463 = vmul.f32 %v3462, 1.442695
    %v3464 = vpow.pop %v3463
    %v3465 = vadd.f32 %v3464, 1.0
    %v3466 = vrcp.pop %v3465
    %v3467 = vmul.f32 %v3465, %v3466
    %v3468 = vsub.f32 1.0, %v3467
    %v3469 = vmul.f32 %v3466, %v3468
    %v3470 = vadd.f32 %v3466, %v3469
    %vm3471 = vweird.f32 %v3465
    %vm3472 = vweird.f32 %v3466
    %vm3473 = vmor %vm3471, %vm3472
    %v3474 = vsel %vm3473, %v3466, %v3470
    %v3475 = vand.u32 2147483647, %v3465
    %vm3476 = vcmp.eq.f32.partialorder %v3475, 8.507059e+37
    %v3477 = vand.u32 %v3465, 2147483648
    %v3478 = vor.u32 1.1754944e-38, %v3477
    %v3479 = vsel %vm3476, %v3478, %v3474
    %v3480 = vmul.f32 1.0, %v3479
    %v3481 = vxor.u32 %v3459, 2147483648
    %v3482 = vmul.f32 %v3481, 1.442695
    %v3483 = vpow.pop %v3482
    %v3484 = vadd.f32 %v3483, 1.0
    %v3485 = vrcp.pop %v3484
    %v3486 = vmul.f32 %v3484, %v3485
    %v3487 = vsub.f32 1.0, %v3486
    %v3488 = vmul.f32 %v3485, %v3487
    %v3489 = vadd.f32 %v3485, %v3488
    %vm3490 = vweird.f32 %v3484
    %vm3491 = vweird.f32 %v3485
    %vm3492 = vmor %vm3490, %vm3491
    %v3493 = vsel %vm3492, %v3485, %v3489
    %v3494 = vand.u32 2147483647, %v3484
    %vm3495 = vcmp.eq.f32.partialorder %v3494, 8.507059e+37
    %v3496 = vand.u32 %v3484, 2147483648
    %v3497 = vor.u32 1.1754944e-38, %v3496
    %v3498 = vsel %vm3495, %v3497, %v3493
    %v3499 = vmul.f32 1.0, %v3498
    %v3500 = vtanh.pop %v3460
    %v3501 = vxor.u32 %v3461, 2147483648
    %v3502 = vmul.f32 %v3501, 1.442695
    %v3503 = vpow.pop %v3502
    %v3504 = vadd.f32 %v3503, 1.0
    %v3505 = vrcp.pop %v3504
    %v3506 = vmul.f32 %v3504, %v3505
    %v3507 = vsub.f32 1.0, %v3506
    %v3508 = vmul.f32 %v3505, %v3507
    %v3509 = vadd.f32 %v3505, %v3508
    %vm3510 = vweird.f32 %v3504
    %vm3511 = vweird.f32 %v3505
    %vm3512 = vmor %vm3510, %vm3511
    %v3513 = vsel %vm3512, %v3505, %v3509
    %v3514 = vand.u32 2147483647, %v3504
    %vm3515 = vcmp.eq.f32.partialorder %v3514, 8.507059e+37
    %v3516 = vand.u32 %v3504, 2147483648
    %v3517 = vor.u32 1.1754944e-38, %v3516
    %v3518 = vsel %vm3515, %v3517, %v3513
    %v3519 = vmul.f32 1.0, %v3518
    %v3520 = vmul.f32 %v3499, %v3371
    %v3521 = vmul.f32 %v3480, %v3500
    %v3522 = vadd.f32 %v3520, %v3521
    %v3523 = vtanh.pop %v3522
    %v3524 = vmul.f32 %v3519, %v3523
    %v3525 = vld [vmem:[%s1903] sm:$0xff]
    %v3526 = vld [vmem:[%s1903 + $0x8] sm:$0xff]
    %v3527 = vld [vmem:[%s1903 + $0x10] sm:$0xff]
    %v3528 = vld [vmem:[%s1903 + $0x18] sm:$0xff]
    %3529 = vmatpush.msra.mxu0 %v2468
    %3530 = vmatpush.msra.mxu0 %v2464
    %3531 = vmatpush.msra.mxu0 %v2460
    %3532 = vmatpush.msra.mxu0 %v2456
    %3533 = vmatpush.msra.mxu0 %v2452
    %3534 = vmatpush.msra.mxu0 %v2448
    %3535 = vmatpush.msra.mxu0 %v2444
    %3536 = vmatpush.msra.mxu0 %v2440
    %3537 = vmatpush.msra.mxu0 %v2436
    %3538 = vmatpush.msra.mxu0 %v2432
    %3539 = vmatpush.msra.mxu0 %v2428
    %3540 = vmatpush.msra.mxu0 %v2424
    %3541 = vmatpush.msra.mxu0 %v2420
    %3542 = vmatpush.msra.mxu0 %v2416
    %3543 = vmatpush.msra.mxu0 %v2412
    %3544 = vmatpush.msra.mxu0 %v2408
    %3545 = vmatmul.f32.gmra.mxu0 %v3524
    %v3546 = vpop.f32.mrf.mxu0
    %v3547 = vadd.f32 0.0, %v3546
    %3548 = vdwg.mxu0
    %3549 = vmatpush.msra.mxu0 %v2469
    %3550 = vmatpush.msra.mxu0 %v2465
    %3551 = vmatpush.msra.mxu0 %v2461
    %3552 = vmatpush.msra.mxu0 %v2457
    %3553 = vmatpush.msra.mxu0 %v2453
    %3554 = vmatpush.msra.mxu0 %v2449
    %3555 = vmatpush.msra.mxu0 %v2445
    %3556 = vmatpush.msra.mxu0 %v2441
    %3557 = vmatpush.msra.mxu0 %v2437
    %3558 = vmatpush.msra.mxu0 %v2433
    %3559 = vmatpush.msra.mxu0 %v2429
    %3560 = vmatpush.msra.mxu0 %v2425
    %3561 = vmatpush.msra.mxu0 %v2421
    %3562 = vmatpush.msra.mxu0 %v2417
    %3563 = vmatpush.msra.mxu0 %v2413
    %3564 = vmatpush.msra.mxu0 %v2409
    %3565 = vmatmul.f32.gmra.mxu0 %v3524
    %v3566 = vpop.f32.mrf.mxu0
    %v3567 = vadd.f32 0.0, %v3566
    %3568 = vdwg.mxu0
    %3569 = vmatpush.msra.mxu0 %v2470
    %3570 = vmatpush.msra.mxu0 %v2466
    %3571 = vmatpush.msra.mxu0 %v2462
    %3572 = vmatpush.msra.mxu0 %v2458
    %3573 = vmatpush.msra.mxu0 %v2454
    %3574 = vmatpush.msra.mxu0 %v2450
    %3575 = vmatpush.msra.mxu0 %v2446
    %3576 = vmatpush.msra.mxu0 %v2442
    %3577 = vmatpush.msra.mxu0 %v2438
    %3578 = vmatpush.msra.mxu0 %v2434
    %3579 = vmatpush.msra.mxu0 %v2430
    %3580 = vmatpush.msra.mxu0 %v2426
    %3581 = vmatpush.msra.mxu0 %v2422
    %3582 = vmatpush.msra.mxu0 %v2418
    %3583 = vmatpush.msra.mxu0 %v2414
    %3584 = vmatpush.msra.mxu0 %v2410
    %3585 = vmatmul.f32.gmra.mxu0 %v3524
    %v3586 = vpop.f32.mrf.mxu0
    %v3587 = vadd.f32 0.0, %v3586
    %3588 = vdwg.mxu0
    %3589 = vmatpush.msra.mxu0 %v2471
    %3590 = vmatpush.msra.mxu0 %v2467
    %3591 = vmatpush.msra.mxu0 %v2463
    %3592 = vmatpush.msra.mxu0 %v2459
    %3593 = vmatpush.msra.mxu0 %v2455
    %3594 = vmatpush.msra.mxu0 %v2451
    %3595 = vmatpush.msra.mxu0 %v2447
    %3596 = vmatpush.msra.mxu0 %v2443
    %3597 = vmatpush.msra.mxu0 %v2439
    %3598 = vmatpush.msra.mxu0 %v2435
    %3599 = vmatpush.msra.mxu0 %v2431
    %3600 = vmatpush.msra.mxu0 %v2427
    %3601 = vmatpush.msra.mxu0 %v2423
    %3602 = vmatpush.msra.mxu0 %v2419
    %3603 = vmatpush.msra.mxu0 %v2415
    %3604 = vmatpush.msra.mxu0 %v2411
    %3605 = vmatmul.f32.gmra.mxu0 %v3524
    %v3606 = vpop.f32.mrf.mxu0
    %v3607 = vadd.f32 0.0, %v3606
    %3608 = vdwg.mxu0
    %v3609 = vadd.f32 %v3525, %v3547
    %v3610 = vadd.f32 %v3526, %v3567
    %v3611 = vadd.f32 %v3527, %v3587
    %v3612 = vadd.f32 %v3528, %v3607
    %v3613 = vxor.u32 %v3609, 2147483648
    %v3614 = vmul.f32 %v3613, 1.442695
    %v3615 = vpow.pop %v3614
    %v3616 = vadd.f32 %v3615, 1.0
    %v3617 = vrcp.pop %v3616
    %v3618 = vmul.f32 %v3616, %v3617
    %v3619 = vsub.f32 1.0, %v3618
    %v3620 = vmul.f32 %v3617, %v3619
    %v3621 = vadd.f32 %v3617, %v3620
    %vm3622 = vweird.f32 %v3616
    %vm3623 = vweird.f32 %v3617
    %vm3624 = vmor %vm3622, %vm3623
    %v3625 = vsel %vm3624, %v3617, %v3621
    %v3626 = vand.u32 2147483647, %v3616
    %vm3627 = vcmp.eq.f32.partialorder %v3626, 8.507059e+37
    %v3628 = vand.u32 %v3616, 2147483648
    %v3629 = vor.u32 1.1754944e-38, %v3628
    %v3630 = vsel %vm3627, %v3629, %v3625
    %v3631 = vmul.f32 1.0, %v3630
    %v3632 = vxor.u32 %v3610, 2147483648
    %v3633 = vmul.f32 %v3632, 1.442695
    %v3634 = vpow.pop %v3633
    %v3635 = vadd.f32 %v3634, 1.0
    %v3636 = vrcp.pop %v3635
    %v3637 = vmul.f32 %v3635, %v3636
    %v3638 = vsub.f32 1.0, %v3637
    %v3639 = vmul.f32 %v3636, %v3638
    %v3640 = vadd.f32 %v3636, %v3639
    %vm3641 = vweird.f32 %v3635
    %vm3642 = vweird.f32 %v3636
    %vm3643 = vmor %vm3641, %vm3642
    %v3644 = vsel %vm3643, %v3636, %v3640
    %v3645 = vand.u32 2147483647, %v3635
    %vm3646 = vcmp.eq.f32.partialorder %v3645, 8.507059e+37
    %v3647 = vand.u32 %v3635, 2147483648
    %v3648 = vor.u32 1.1754944e-38, %v3647
    %v3649 = vsel %vm3646, %v3648, %v3644
    %v3650 = vmul.f32 1.0, %v3649
    %v3651 = vtanh.pop %v3611
    %v3652 = vxor.u32 %v3612, 2147483648
    %v3653 = vmul.f32 %v3652, 1.442695
    %v3654 = vpow.pop %v3653
    %v3655 = vadd.f32 %v3654, 1.0
    %v3656 = vrcp.pop %v3655
    %v3657 = vmul.f32 %v3655, %v3656
    %v3658 = vsub.f32 1.0, %v3657
    %v3659 = vmul.f32 %v3656, %v3658
    %v3660 = vadd.f32 %v3656, %v3659
    %vm3661 = vweird.f32 %v3655
    %vm3662 = vweird.f32 %v3656
    %vm3663 = vmor %vm3661, %vm3662
    %v3664 = vsel %vm3663, %v3656, %v3660
    %v3665 = vand.u32 2147483647, %v3655
    %vm3666 = vcmp.eq.f32.partialorder %v3665, 8.507059e+37
    %v3667 = vand.u32 %v3655, 2147483648
    %v3668 = vor.u32 1.1754944e-38, %v3667
    %v3669 = vsel %vm3666, %v3668, %v3664
    %v3670 = vmul.f32 1.0, %v3669
    %v3671 = vmul.f32 %v3650, %v3522
    %v3672 = vmul.f32 %v3631, %v3651
    %v3673 = vadd.f32 %v3671, %v3672
    %v3674 = vtanh.pop %v3673
    %v3675 = vmul.f32 %v3670, %v3674
    %s3676 = scalar_lea.vmem [#allocation12], 8
    %3677 = vst [vmem:[%s3676] sm:$0xff] %v3675
    %s3678 = scalar_lea.vmem [#allocation13], 8
    %3679 = vst [vmem:[%s3678] sm:$0xff] %v3673
    // Predicated region
    $region34: #{tpu_custom_call.1} parent=1 // pred_check
      _
    $region35: #{tpu_custom_call.1} parent=1 // pred_check_branch
      %3681 = sbr.rel (0) target = $region37
    $region36: #{tpu_custom_call.1} parent=1 // pred_region
      %3683 = vsyncadd [#allocation6], 0
      %s3684 = sshll.u32 [#allocation12], 4
      %s3685 = int_to_ptr.vmem [resolvable:$true] %s3684
      %s3686 = sshll.u32 %s4, 4
      %s3687 = int_to_ptr.hbm [resolvable:$true] %s3686
      %3692 = dma.vmem_to_hbm [thread:$0]  %s3685, 256, %s3687, [#allocation6], 128, 128, 8
    $region37: #{tpu_custom_call.1} parent=1 // pred_fallthru
      _
    // Predicated region
    $region38: #{tpu_custom_call.1} parent=1 // pred_check
      _
    $region39: #{tpu_custom_call.1} parent=1 // pred_check_branch
      %3694 = sbr.rel (0) target = $region41
    $region40: #{tpu_custom_call.1} parent=1 // pred_region
      %3696 = vsyncadd [#allocation14], 0
      %s3697 = sshll.u32 [#allocation13], 4
      %s3698 = int_to_ptr.vmem [resolvable:$true] %s3697
      %s3699 = sshll.u32 %s5, 4
      %s3700 = int_to_ptr.hbm [resolvable:$true] %s3699
      %3705 = dma.vmem_to_hbm [thread:$0]  %s3698, 256, %s3700, [#allocation14], 128, 128, 8
    $region41: #{tpu_custom_call.1} parent=1 // pred_fallthru
      _
    // Predicated region
    $region42: #{tpu_custom_call.1} parent=1 // pred_check
      _
    $region43: #{tpu_custom_call.1} parent=1 // pred_check_branch
      %3707 = sbr.rel (0) target = $region45
    $region44: #{tpu_custom_call.1} parent=1 // pred_region
      %3709 = dma.done [#allocation6], 256
    $region45: #{tpu_custom_call.1} parent=1 // pred_fallthru
      _
    // Predicated region
    $region46: #{tpu_custom_call.1} parent=1 // pred_check
      _
    $region47: #{tpu_custom_call.1} parent=1 // pred_check_branch
      %3711 = sbr.rel (0) target = $region49
    $region48: #{tpu_custom_call.1} parent=1 // pred_region
      %3713 = dma.done [#allocation14], 256
    $region49: #{tpu_custom_call.1} parent=1 // pred_fallthru
      _
    %3714 = vsyncpa [#allocation5], 1
    %3715 = vsyncpa [#allocation8], 1
    %3716 = vsyncpa [#allocation11], 1
    %3717 = vsyncpa [#allocation6], 1
    %3718 = vsyncpa [#allocation14], 1

</llo_original>
